<compile_context>
chip_gen: v6e
topology: v6e:2x2x1
jax: 0.10.0
libtpu: 0.0.40
codegen_flags: <defaults>
</compile_context>

<pallas_src>
import jax
import jax.numpy as jnp
from jax import lax
from jax.experimental import pallas as pl
from jax.experimental.pallas import tpu as pltpu


def _round_up(n: int, m: int) -> int:
    return ((n + m - 1) // m) * m


# ----------------------- fused LSTM-stack + folded-head kernel -----------------------
def _make_fused_kernel(num_layers: int, seq_len: int, batch_pad: int,
                       hidden: int, hp: int):
    """batch_pad: batch rows padded to a full sublane tile (8).
    hp: per-gate lane-padded width (multiple of 128); packed gate dim = 4*hp.
    Gate packing order is (i, f, o, g): one contiguous sigmoid slab + one tanh gate."""

    def kernel(*refs):
        x_ref = refs[0]                                  # (T*Bp, F0) bf16, time-major
        lstm_refs = refs[1:1 + 3 * num_layers]           # (w_ih, w_hh, bias) per layer
        wh_ref = refs[1 + 3 * num_layers]                # (H, 128) folded fc.fc2.fc3
        bh_ref = refs[2 + 3 * num_layers]                # (1, 128)
        out_ref = refs[3 + 3 * num_layers]               # (Bp, 128)
        proj_bufs = [refs[-2], refs[-1]]                 # (T*Bp, 4*hp) f32, ping-pong

        # Layer-0 input projection: ONE batched MXU dot for all timesteps
        # (hoisted off the serial recurrence path).
        proj_bufs[0][...] = (
            jnp.dot(x_ref[...], lstm_refs[0][...],
                    preferred_element_type=jnp.float32)
            + lstm_refs[2][...])

        h = None
        for layer in range(num_layers):
            whh_ref = lstm_refs[3 * layer + 1]           # (H, 4*hp) bf16
            proj_cur = proj_bufs[layer % 2]
            proj_nxt = proj_bufs[(layer + 1) % 2]
            last_layer = (layer + 1 == num_layers)
            if not last_layer:
                wih_nxt_ref = lstm_refs[3 * (layer + 1) + 0]
                b_nxt_ref = lstm_refs[3 * (layer + 1) + 2]

            # h/c live in vregs as loop carries of a fully unrolled time loop:
            # only the h@W_hh dot + gate math sits on the serial dependency chain.
            h = jnp.zeros((batch_pad, hidden), jnp.float32)
            c = jnp.zeros((batch_pad, hidden), jnp.float32)
            for t in range(seq_len):
                rows = pl.ds(t * batch_pad, batch_pad)   # static, sublane-aligned
                gates = proj_cur[rows, :] + jnp.dot(
                    h.astype(jnp.bfloat16), whh_ref[...],
                    preferred_element_type=jnp.float32)
                # gate order (i, f, o, g): one sigmoid over contiguous lanes, one tanh
                sig = jax.nn.sigmoid(gates[:, :3 * hp])
                i_g = sig[:, 0 * hp:0 * hp + hidden]
                f_g = sig[:, 1 * hp:1 * hp + hidden]
                o_g = sig[:, 2 * hp:2 * hp + hidden]
                g_g = jnp.tanh(gates[:, 3 * hp:3 * hp + hidden])
                c = f_g * c + i_g * g_g
                h = o_g * jnp.tanh(c)
                if not last_layer:
                    # Next layer's (time-independent) input projection, hidden under
                    # this layer's recurrence; off the serial chain.
                    proj_nxt[rows, :] = (
                        jnp.dot(h.astype(jnp.bfloat16), wih_nxt_ref[...],
                                preferred_element_type=jnp.float32)
                        + b_nxt_ref[...])

        # Folded MLP head: relu(h_last @ (W1.T W2.T W3.T) + b_comb), lane-padded to 128.
        out_ref[...] = jnp.maximum(
            jnp.dot(h, wh_ref[...], preferred_element_type=jnp.float32)
            + bh_ref[...],
            0.0)

    return kernel


def _lstm_network_forward(x, lstm_params, head_params):
    """x: (B, T, input_size), batch_first like the PyTorch module."""
    B, T, F0 = x.shape
    num_layers = len(lstm_params)
    hidden = lstm_params[0][1].shape[0]          # w_hh: (H, 4*hp)
    hp = lstm_params[0][1].shape[1] // 4
    Bp = 8                                       # batch padded to one sublane tile

    # Time-major 2-D slab (T*Bp, F0): rows t*Bp..t*Bp+B-1 hold x[:, t, :], rest zero.
    x_tm = jnp.transpose(x, (1, 0, 2))
    x_pad = jnp.zeros((T, Bp, F0), jnp.float32).at[:, :B, :].set(x_tm)
    x2d = x_pad.reshape(T * Bp, F0).astype(jnp.bfloat16)

    inputs = [x2d]
    for layer_params in lstm_params:
        inputs.extend(layer_params)
    inputs.extend(head_params)                   # (w_head_pad, b_head_pad)

    vmem = pltpu.MemorySpace.VMEM
    out_pad = pl.pallas_call(
        _make_fused_kernel(num_layers, T, Bp, hidden, hp),
        out_shape=jax.ShapeDtypeStruct((Bp, 128), jnp.float32),
        in_specs=[pl.BlockSpec(memory_space=vmem) for _ in inputs],
        out_specs=pl.BlockSpec(memory_space=vmem),
        scratch_shapes=[
            pltpu.VMEM((T * Bp, 4 * hp), jnp.float32),   # current layer's projections
            pltpu.VMEM((T * Bp, 4 * hp), jnp.float32),   # next layer's projections
        ],
    )(*inputs)
    return out_pad[:B, :2]


lstm_network_forward = jax.jit(_lstm_network_forward)


# ------------------------------ parameter handling --------------------------------
def init_params_pt(key, input_size, hidden_size, num_layers, output_size):
    """Random parameters in PyTorch layout (nn.LSTM / nn.Linear conventions)."""
    keys = jax.random.split(key, 4 * num_layers + 6)
    k = iter(keys)
    bound = 1.0 / (hidden_size ** 0.5)

    lstm = []
    for layer in range(num_layers):
        in_sz = input_size if layer == 0 else hidden_size
        w_ih = jax.random.uniform(next(k), (4 * hidden_size, in_sz), jnp.float32, -bound, bound)
        w_hh = jax.random.uniform(next(k), (4 * hidden_size, hidden_size), jnp.float32, -bound, bound)
        b_ih = jax.random.uniform(next(k), (4 * hidden_size,), jnp.float32, -bound, bound)
        b_hh = jax.random.uniform(next(k), (4 * hidden_size,), jnp.float32, -bound, bound)
        lstm.append((w_ih, w_hh, b_ih, b_hh))

    def linear(kw, kb, fan_out, fan_in):
        b = 1.0 / (fan_in ** 0.5)
        w = jax.random.uniform(kw, (fan_out, fan_in), jnp.float32, -b, b)   # (out, in)
        bias = jax.random.uniform(kb, (fan_out,), jnp.float32, -b, b)
        return w, bias

    fc = linear(next(k), next(k), output_size, hidden_size)
    fc2 = linear(next(k), next(k), 1024, output_size)
    fc3 = linear(next(k), next(k), 2, 1024)
    return lstm, (fc, fc2, fc3)


def prepare_params(lstm_pt, mlp_pt, hidden_size):
    """Kernel layout (done once, outside the jitted forward):
    - LSTM weights pre-transposed, each gate block padded to a 128-lane boundary,
      repacked in (i, f, o, g) order, biases pre-summed, weights cast to bf16.
    - fc -> fc2 -> fc3 folded into a single (H, 2) affine map, lane-padded to 128."""
    hp = _round_up(hidden_size, 128)
    gate_order = (0, 1, 3, 2)                    # PyTorch (i, f, g, o) -> kernel (i, f, o, g)

    lstm_prepared = []
    for (w_ih, w_hh, b_ih, b_hh) in lstm_pt:
        f_in = w_ih.shape[1]
        b_sum = b_ih + b_hh
        wih_p = jnp.zeros((f_in, 4 * hp), jnp.float32)
        whh_p = jnp.zeros((hidden_size, 4 * hp), jnp.float32)
        b_p = jnp.zeros((1, 4 * hp), jnp.float32)
        for dst_slot, src_g in enumerate(gate_order):
            src = slice(src_g * hidden_size, (src_g + 1) * hidden_size)
            dst = slice(dst_slot * hp, dst_slot * hp + hidden_size)
            wih_p = wih_p.at[:, dst].set(w_ih[src, :].T)
            whh_p = whh_p.at[:, dst].set(w_hh[src, :].T)
            b_p = b_p.at[0, dst].set(b_sum[src])
        lstm_prepared.append((wih_p.astype(jnp.bfloat16),
                              whh_p.astype(jnp.bfloat16),
                              b_p))

    (w1, b1), (w2, b2), (w3, b3) = mlp_pt
    w_comb = w1.T @ w2.T @ w3.T                              # (hidden, 2)
    b_comb = b1 @ w2.T @ w3.T + b2 @ w3.T + b3               # (2,)
    out_dim = w_comb.shape[1]
    w_pad = jnp.zeros((hidden_size, 128), jnp.float32).at[:, :out_dim].set(w_comb)
    b_pad = jnp.zeros((1, 128), jnp.float32).at[0, :out_dim].set(b_comb)
    return lstm_prepared, (w_pad, b_pad)


# ------------------------------ pure-JAX reference --------------------------------
def reference_forward(x, lstm_pt, mlp_pt):
    B, T, _ = x.shape
    seq = x
    for (w_ih, w_hh, b_ih, b_hh) in lstm_pt:
        H = w_hh.shape[1]
        h = jnp.zeros((B, H), jnp.float32)
        c = jnp.zeros((B, H), jnp.float32)
        outs = []
        for t in range(T):
            gates = seq[:, t, :] @ w_ih.T + h @ w_hh.T + b_ih + b_hh
            i = jax.nn.sigmoid(gates[:, 0 * H:1 * H])
            f = jax.nn.sigmoid(gates[:, 1 * H:2 * H])
            g = jnp.tanh(gates[:, 2 * H:3 * H])
            o = jax.nn.sigmoid(gates[:, 3 * H:4 * H])
            c = f * c + i * g
            h = o * jnp.tanh(c)
            outs.append(h)
        seq = jnp.stack(outs, axis=1)
    (w1, b1), (w2, b2), (w3, b3) = mlp_pt
    out = seq[:, -1, :] @ w1.T + b1
    out = out @ w2.T + b2
    out = out @ w3.T + b3
    return jnp.maximum(out, 0.0)


if __name__ == "__main__":
    B, T = 2, 8
    input_size, hidden_size, num_layers, output_size = 16, 32, 2, 64

    key = jax.random.PRNGKey(0)
    k_params, k_x = jax.random.split(key)
    lstm_pt, mlp_pt = init_params_pt(k_params, input_size, hidden_size, num_layers, output_size)
    lstm_params, head_params = prepare_params(lstm_pt, mlp_pt, hidden_size)

    x = jax.random.normal(k_x, (B, T, input_size), jnp.float32)

    out = lstm_network_forward(x, lstm_params, head_params)
    out = jax.block_until_ready(out)
    assert out.shape == (B, 2), out.shape

    ref = reference_forward(x, lstm_pt, mlp_pt)
    # bf16 matmul inputs (f32 accumulation) + algebraic head fold => tiny numeric delta.
    if not bool(jnp.allclose(out, ref, rtol=5e-2, atol=2e-2)):
        max_err = float(jnp.max(jnp.abs(out - ref)))
        raise AssertionError(f"kernel/reference mismatch: max abs err {max_err:.3e}")

    print("KERNEL_OK")
</pallas_src>

<mosaic_0001>
module attributes {stable_mosaic.version = 11 : i64} {
  func.func @kernel(%arg0: memref<64x16xbf16, #tpu.memory_space<vmem>>, %arg1: memref<16x512xbf16, #tpu.memory_space<vmem>>, %arg2: memref<32x512xbf16, #tpu.memory_space<vmem>>, %arg3: memref<1x512xf32, #tpu.memory_space<vmem>>, %arg4: memref<32x512xbf16, #tpu.memory_space<vmem>>, %arg5: memref<32x512xbf16, #tpu.memory_space<vmem>>, %arg6: memref<1x512xf32, #tpu.memory_space<vmem>>, %arg7: memref<32x128xf32, #tpu.memory_space<vmem>>, %arg8: memref<1x128xf32, #tpu.memory_space<vmem>>, %arg9: memref<8x128xf32, #tpu.memory_space<vmem>>, %arg10: memref<64x512xf32, #tpu.memory_space<vmem>>, %arg11: memref<64x512xf32, #tpu.memory_space<vmem>>) attributes {dimension_semantics = [], scalar_prefetch = 0 : i64, scratch_operands = 2 : i64, tpu.core_type = #tpu.core_type<tc>} {
    %c0 = arith.constant 0 : index
    %c0_0 = arith.constant 0 : index
    %0 = vector.load %arg0[%c0, %c0_0] : memref<64x16xbf16, #tpu.memory_space<vmem>>, vector<64x16xbf16>
    %c0_1 = arith.constant 0 : index
    %c0_2 = arith.constant 0 : index
    %1 = vector.load %arg1[%c0_1, %c0_2] : memref<16x512xbf16, #tpu.memory_space<vmem>>, vector<16x512xbf16>
    %cst = arith.constant dense<0.000000e+00> : vector<64x512xf32>
    %2 = tpu.matmul %0, %1, %cst {dimension_numbers = #tpu.dot_dimension_numbers<[1], [0], [0], [1], [0, 0, 1, 1], [], []>} : vector<64x16xbf16>, vector<16x512xbf16>, vector<64x512xf32> -> vector<64x512xf32>
    %c0_3 = arith.constant 0 : index
    %c0_4 = arith.constant 0 : index
    %3 = vector.load %arg3[%c0_3, %c0_4] : memref<1x512xf32, #tpu.memory_space<vmem>>, vector<1x512xf32>
    %4 = vector.broadcast %3 : vector<1x512xf32> to vector<64x512xf32>
    %5 = arith.addf %2, %4 : vector<64x512xf32>
    %c0_5 = arith.constant 0 : index
    %c0_6 = arith.constant 0 : index
    %6 = vector.load %arg10[%c0_5, %c0_6] : memref<64x512xf32, #tpu.memory_space<vmem>>, vector<64x512xf32>
    tpu.vector_store %arg10[%c0_5, %c0_6], %5 {strides = array<i32>} : memref<64x512xf32, #tpu.memory_space<vmem>>, vector<64x512xf32>,
    %cst_7 = arith.constant 0.000000e+00 : f32
    %7 = vector.broadcast %cst_7 : f32 to vector<8x32xf32>
    %cst_8 = arith.constant 0.000000e+00 : f32
    %8 = vector.broadcast %cst_8 : f32 to vector<8x32xf32>
    %c0_9 = arith.constant 0 : index
    %c0_10 = arith.constant 0 : index
    %9 = vector.load %arg10[%c0_9, %c0_10] : memref<64x512xf32, #tpu.memory_space<vmem>>, vector<8x512xf32>
    %10 = arith.truncf %7 : vector<8x32xf32> to vector<8x32xbf16>
    %c0_11 = arith.constant 0 : index
    %c0_12 = arith.constant 0 : index
    %11 = vector.load %arg2[%c0_11, %c0_12] : memref<32x512xbf16, #tpu.memory_space<vmem>>, vector<32x512xbf16>
    %cst_13 = arith.constant dense<0.000000e+00> : vector<8x512xf32>
    %12 = tpu.matmul %10, %11, %cst_13 {dimension_numbers = #tpu.dot_dimension_numbers<[1], [0], [0], [1], [0, 0, 1, 1], [], []>} : vector<8x32xbf16>, vector<32x512xbf16>, vector<8x512xf32> -> vector<8x512xf32>
    %13 = arith.addf %9, %12 : vector<8x512xf32>
    %14 = vector.extract_strided_slice %13 {offsets = [0, 0], sizes = [8, 384], strides = [1, 1]} : vector<8x512xf32> to vector<8x384xf32>
    %15 = arith.negf %14 : vector<8x384xf32>
    %16 = math.exp %15 : vector<8x384xf32>
    %cst_14 = arith.constant 1.000000e+00 : f32
    %17 = vector.broadcast %cst_14 : f32 to vector<8x384xf32>
    %18 = arith.addf %17, %16 : vector<8x384xf32>
    %19 = arith.divf %17, %18 : vector<8x384xf32>
    %20 = vector.extract_strided_slice %19 {offsets = [0, 0], sizes = [8, 32], strides = [1, 1]} : vector<8x384xf32> to vector<8x32xf32>
    %21 = vector.extract_strided_slice %19 {offsets = [0, 128], sizes = [8, 32], strides = [1, 1]} : vector<8x384xf32> to vector<8x32xf32>
    %22 = vector.extract_strided_slice %19 {offsets = [0, 256], sizes = [8, 32], strides = [1, 1]} : vector<8x384xf32> to vector<8x32xf32>
    %23 = vector.extract_strided_slice %13 {offsets = [0, 384], sizes = [8, 32], strides = [1, 1]} : vector<8x512xf32> to vector<8x32xf32>
    %24 = math.tanh %23 : vector<8x32xf32>
    %25 = arith.mulf %21, %8 : vector<8x32xf32>
    %26 = arith.mulf %20, %24 : vector<8x32xf32>
    %27 = arith.addf %25, %26 : vector<8x32xf32>
    %28 = math.tanh %27 : vector<8x32xf32>
    %29 = arith.mulf %22, %28 : vector<8x32xf32>
    %30 = arith.truncf %29 : vector<8x32xf32> to vector<8x32xbf16>
    %c0_15 = arith.constant 0 : index
    %c0_16 = arith.constant 0 : index
    %31 = vector.load %arg4[%c0_15, %c0_16] : memref<32x512xbf16, #tpu.memory_space<vmem>>, vector<32x512xbf16>
    %cst_17 = arith.constant dense<0.000000e+00> : vector<8x512xf32>
    %32 = tpu.matmul %30, %31, %cst_17 {dimension_numbers = #tpu.dot_dimension_numbers<[1], [0], [0], [1], [0, 0, 1, 1], [], []>} : vector<8x32xbf16>, vector<32x512xbf16>, vector<8x512xf32> -> vector<8x512xf32>
    %c0_18 = arith.constant 0 : index
    %c0_19 = arith.constant 0 : index
    %33 = vector.load %arg6[%c0_18, %c0_19] : memref<1x512xf32, #tpu.memory_space<vmem>>, vector<1x512xf32>
    %34 = vector.broadcast %33 : vector<1x512xf32> to vector<8x512xf32>
    %35 = arith.addf %32, %34 : vector<8x512xf32>
    %c0_20 = arith.constant 0 : index
    %c0_21 = arith.constant 0 : index
    %36 = vector.load %arg11[%c0_20, %c0_21] : memref<64x512xf32, #tpu.memory_space<vmem>>, vector<8x512xf32>
    tpu.vector_store %arg11[%c0_20, %c0_21], %35 {strides = array<i32>} : memref<64x512xf32, #tpu.memory_space<vmem>>, vector<8x512xf32>,
    %c8 = arith.constant 8 : index
    %c0_22 = arith.constant 0 : index
    %37 = vector.load %arg10[%c8, %c0_22] : memref<64x512xf32, #tpu.memory_space<vmem>>, vector<8x512xf32>
    %38 = arith.truncf %29 : vector<8x32xf32> to vector<8x32xbf16>
    %c0_23 = arith.constant 0 : index
    %c0_24 = arith.constant 0 : index
    %39 = vector.load %arg2[%c0_23, %c0_24] : memref<32x512xbf16, #tpu.memory_space<vmem>>, vector<32x512xbf16>
    %cst_25 = arith.constant dense<0.000000e+00> : vector<8x512xf32>
    %40 = tpu.matmul %38, %39, %cst_25 {dimension_numbers = #tpu.dot_dimension_numbers<[1], [0], [0], [1], [0, 0, 1, 1], [], []>} : vector<8x32xbf16>, vector<32x512xbf16>, vector<8x512xf32> -> vector<8x512xf32>
    %41 = arith.addf %37, %40 : vector<8x512xf32>
    %42 = vector.extract_strided_slice %41 {offsets = [0, 0], sizes = [8, 384], strides = [1, 1]} : vector<8x512xf32> to vector<8x384xf32>
    %43 = arith.negf %42 : vector<8x384xf32>
    %44 = math.exp %43 : vector<8x384xf32>
    %cst_26 = arith.constant 1.000000e+00 : f32
    %45 = vector.broadcast %cst_26 : f32 to vector<8x384xf32>
    %46 = arith.addf %45, %44 : vector<8x384xf32>
    %47 = arith.divf %45, %46 : vector<8x384xf32>
    %48 = vector.extract_strided_slice %47 {offsets = [0, 0], sizes = [8, 32], strides = [1, 1]} : vector<8x384xf32> to vector<8x32xf32>
    %49 = vector.extract_strided_slice %47 {offsets = [0, 128], sizes = [8, 32], strides = [1, 1]} : vector<8x384xf32> to vector<8x32xf32>
    %50 = vector.extract_strided_slice %47 {offsets = [0, 256], sizes = [8, 32], strides = [1, 1]} : vector<8x384xf32> to vector<8x32xf32>
    %51 = vector.extract_strided_slice %41 {offsets = [0, 384], sizes = [8, 32], strides = [1, 1]} : vector<8x512xf32> to vector<8x32xf32>
    %52 = math.tanh %51 : vector<8x32xf32>
    %53 = arith.mulf %49, %27 : vector<8x32xf32>
    %54 = arith.mulf %48, %52 : vector<8x32xf32>
    %55 = arith.addf %53, %54 : vector<8x32xf32>
    %56 = math.tanh %55 : vector<8x32xf32>
    %57 = arith.mulf %50, %56 : vector<8x32xf32>
    %58 = arith.truncf %57 : vector<8x32xf32> to vector<8x32xbf16>
    %c0_27 = arith.constant 0 : index
    %c0_28 = arith.constant 0 : index
    %59 = vector.load %arg4[%c0_27, %c0_28] : memref<32x512xbf16, #tpu.memory_space<vmem>>, vector<32x512xbf16>
    %cst_29 = arith.constant dense<0.000000e+00> : vector<8x512xf32>
    %60 = tpu.matmul %58, %59, %cst_29 {dimension_numbers = #tpu.dot_dimension_numbers<[1], [0], [0], [1], [0, 0, 1, 1], [], []>} : vector<8x32xbf16>, vector<32x512xbf16>, vector<8x512xf32> -> vector<8x512xf32>
    %c0_30 = arith.constant 0 : index
    %c0_31 = arith.constant 0 : index
    %61 = vector.load %arg6[%c0_30, %c0_31] : memref<1x512xf32, #tpu.memory_space<vmem>>, vector<1x512xf32>
    %62 = vector.broadcast %61 : vector<1x512xf32> to vector<8x512xf32>
    %63 = arith.addf %60, %62 : vector<8x512xf32>
    %c8_32 = arith.constant 8 : index
    %c0_33 = arith.constant 0 : index
    %64 = vector.load %arg11[%c8_32, %c0_33] : memref<64x512xf32, #tpu.memory_space<vmem>>, vector<8x512xf32>
    tpu.vector_store %arg11[%c8_32, %c0_33], %63 {strides = array<i32>} : memref<64x512xf32, #tpu.memory_space<vmem>>, vector<8x512xf32>,
    %c16 = arith.constant 16 : index
    %c0_34 = arith.constant 0 : index
    %65 = vector.load %arg10[%c16, %c0_34] : memref<64x512xf32, #tpu.memory_space<vmem>>, vector<8x512xf32>
    %66 = arith.truncf %57 : vector<8x32xf32> to vector<8x32xbf16>
    %c0_35 = arith.constant 0 : index
    %c0_36 = arith.constant 0 : index
    %67 = vector.load %arg2[%c0_35, %c0_36] : memref<32x512xbf16, #tpu.memory_space<vmem>>, vector<32x512xbf16>
    %cst_37 = arith.constant dense<0.000000e+00> : vector<8x512xf32>
    %68 = tpu.matmul %66, %67, %cst_37 {dimension_numbers = #tpu.dot_dimension_numbers<[1], [0], [0], [1], [0, 0, 1, 1], [], []>} : vector<8x32xbf16>, vector<32x512xbf16>, vector<8x512xf32> -> vector<8x512xf32>
    %69 = arith.addf %65, %68 : vector<8x512xf32>
    %70 = vector.extract_strided_slice %69 {offsets = [0, 0], sizes = [8, 384], strides = [1, 1]} : vector<8x512xf32> to vector<8x384xf32>
    %71 = arith.negf %70 : vector<8x384xf32>
    %72 = math.exp %71 : vector<8x384xf32>
    %cst_38 = arith.constant 1.000000e+00 : f32
    %73 = vector.broadcast %cst_38 : f32 to vector<8x384xf32>
    %74 = arith.addf %73, %72 : vector<8x384xf32>
    %75 = arith.divf %73, %74 : vector<8x384xf32>
    %76 = vector.extract_strided_slice %75 {offsets = [0, 0], sizes = [8, 32], strides = [1, 1]} : vector<8x384xf32> to vector<8x32xf32>
    %77 = vector.extract_strided_slice %75 {offsets = [0, 128], sizes = [8, 32], strides = [1, 1]} : vector<8x384xf32> to vector<8x32xf32>
    %78 = vector.extract_strided_slice %75 {offsets = [0, 256], sizes = [8, 32], strides = [1, 1]} : vector<8x384xf32> to vector<8x32xf32>
    %79 = vector.extract_strided_slice %69 {offsets = [0, 384], sizes = [8, 32], strides = [1, 1]} : vector<8x512xf32> to vector<8x32xf32>
    %80 = math.tanh %79 : vector<8x32xf32>
    %81 = arith.mulf %77, %55 : vector<8x32xf32>
    %82 = arith.mulf %76, %80 : vector<8x32xf32>
    %83 = arith.addf %81, %82 : vector<8x32xf32>
    %84 = math.tanh %83 : vector<8x32xf32>
    %85 = arith.mulf %78, %84 : vector<8x32xf32>
    %86 = arith.truncf %85 : vector<8x32xf32> to vector<8x32xbf16>
    %c0_39 = arith.constant 0 : index
    %c0_40 = arith.constant 0 : index
    %87 = vector.load %arg4[%c0_39, %c0_40] : memref<32x512xbf16, #tpu.memory_space<vmem>>, vector<32x512xbf16>
    %cst_41 = arith.constant dense<0.000000e+00> : vector<8x512xf32>
    %88 = tpu.matmul %86, %87, %cst_41 {dimension_numbers = #tpu.dot_dimension_numbers<[1], [0], [0], [1], [0, 0, 1, 1], [], []>} : vector<8x32xbf16>, vector<32x512xbf16>, vector<8x512xf32> -> vector<8x512xf32>
    %c0_42 = arith.constant 0 : index
    %c0_43 = arith.constant 0 : index
    %89 = vector.load %arg6[%c0_42, %c0_43] : memref<1x512xf32, #tpu.memory_space<vmem>>, vector<1x512xf32>
    %90 = vector.broadcast %89 : vector<1x512xf32> to vector<8x512xf32>
    %91 = arith.addf %88, %90 : vector<8x512xf32>
    %c16_44 = arith.constant 16 : index
    %c0_45 = arith.constant 0 : index
    %92 = vector.load %arg11[%c16_44, %c0_45] : memref<64x512xf32, #tpu.memory_space<vmem>>, vector<8x512xf32>
    tpu.vector_store %arg11[%c16_44, %c0_45], %91 {strides = array<i32>} : memref<64x512xf32, #tpu.memory_space<vmem>>, vector<8x512xf32>,
    %c24 = arith.constant 24 : index
    %c0_46 = arith.constant 0 : index
    %93 = vector.load %arg10[%c24, %c0_46] : memref<64x512xf32, #tpu.memory_space<vmem>>, vector<8x512xf32>
    %94 = arith.truncf %85 : vector<8x32xf32> to vector<8x32xbf16>
    %c0_47 = arith.constant 0 : index
    %c0_48 = arith.constant 0 : index
    %95 = vector.load %arg2[%c0_47, %c0_48] : memref<32x512xbf16, #tpu.memory_space<vmem>>, vector<32x512xbf16>
    %cst_49 = arith.constant dense<0.000000e+00> : vector<8x512xf32>
    %96 = tpu.matmul %94, %95, %cst_49 {dimension_numbers = #tpu.dot_dimension_numbers<[1], [0], [0], [1], [0, 0, 1, 1], [], []>} : vector<8x32xbf16>, vector<32x512xbf16>, vector<8x512xf32> -> vector<8x512xf32>
    %97 = arith.addf %93, %96 : vector<8x512xf32>
    %98 = vector.extract_strided_slice %97 {offsets = [0, 0], sizes = [8, 384], strides = [1, 1]} : vector<8x512xf32> to vector<8x384xf32>
    %99 = arith.negf %98 : vector<8x384xf32>
    %100 = math.exp %99 : vector<8x384xf32>
    %cst_50 = arith.constant 1.000000e+00 : f32
    %101 = vector.broadcast %cst_50 : f32 to vector<8x384xf32>
    %102 = arith.addf %101, %100 : vector<8x384xf32>
    %103 = arith.divf %101, %102 : vector<8x384xf32>
    %104 = vector.extract_strided_slice %103 {offsets = [0, 0], sizes = [8, 32], strides = [1, 1]} : vector<8x384xf32> to vector<8x32xf32>
    %105 = vector.extract_strided_slice %103 {offsets = [0, 128], sizes = [8, 32], strides = [1, 1]} : vector<8x384xf32> to vector<8x32xf32>
    %106 = vector.extract_strided_slice %103 {offsets = [0, 256], sizes = [8, 32], strides = [1, 1]} : vector<8x384xf32> to vector<8x32xf32>
    %107 = vector.extract_strided_slice %97 {offsets = [0, 384], sizes = [8, 32], strides = [1, 1]} : vector<8x512xf32> to vector<8x32xf32>
    %108 = math.tanh %107 : vector<8x32xf32>
    %109 = arith.mulf %105, %83 : vector<8x32xf32>
    %110 = arith.mulf %104, %108 : vector<8x32xf32>
    %111 = arith.addf %109, %110 : vector<8x32xf32>
    %112 = math.tanh %111 : vector<8x32xf32>
    %113 = arith.mulf %106, %112 : vector<8x32xf32>
    %114 = arith.truncf %113 : vector<8x32xf32> to vector<8x32xbf16>
    %c0_51 = arith.constant 0 : index
    %c0_52 = arith.constant 0 : index
    %115 = vector.load %arg4[%c0_51, %c0_52] : memref<32x512xbf16, #tpu.memory_space<vmem>>, vector<32x512xbf16>
    %cst_53 = arith.constant dense<0.000000e+00> : vector<8x512xf32>
    %116 = tpu.matmul %114, %115, %cst_53 {dimension_numbers = #tpu.dot_dimension_numbers<[1], [0], [0], [1], [0, 0, 1, 1], [], []>} : vector<8x32xbf16>, vector<32x512xbf16>, vector<8x512xf32> -> vector<8x512xf32>
    %c0_54 = arith.constant 0 : index
    %c0_55 = arith.constant 0 : index
    %117 = vector.load %arg6[%c0_54, %c0_55] : memref<1x512xf32, #tpu.memory_space<vmem>>, vector<1x512xf32>
    %118 = vector.broadcast %117 : vector<1x512xf32> to vector<8x512xf32>
    %119 = arith.addf %116, %118 : vector<8x512xf32>
    %c24_56 = arith.constant 24 : index
    %c0_57 = arith.constant 0 : index
    %120 = vector.load %arg11[%c24_56, %c0_57] : memref<64x512xf32, #tpu.memory_space<vmem>>, vector<8x512xf32>
    tpu.vector_store %arg11[%c24_56, %c0_57], %119 {strides = array<i32>} : memref<64x512xf32, #tpu.memory_space<vmem>>, vector<8x512xf32>,
    %c32 = arith.constant 32 : index
    %c0_58 = arith.constant 0 : index
    %121 = vector.load %arg10[%c32, %c0_58] : memref<64x512xf32, #tpu.memory_space<vmem>>, vector<8x512xf32>
    %122 = arith.truncf %113 : vector<8x32xf32> to vector<8x32xbf16>
    %c0_59 = arith.constant 0 : index
    %c0_60 = arith.constant 0 : index
    %123 = vector.load %arg2[%c0_59, %c0_60] : memref<32x512xbf16, #tpu.memory_space<vmem>>, vector<32x512xbf16>
    %cst_61 = arith.constant dense<0.000000e+00> : vector<8x512xf32>
    %124 = tpu.matmul %122, %123, %cst_61 {dimension_numbers = #tpu.dot_dimension_numbers<[1], [0], [0], [1], [0, 0, 1, 1], [], []>} : vector<8x32xbf16>, vector<32x512xbf16>, vector<8x512xf32> -> vector<8x512xf32>
    %125 = arith.addf %121, %124 : vector<8x512xf32>
    %126 = vector.extract_strided_slice %125 {offsets = [0, 0], sizes = [8, 384], strides = [1, 1]} : vector<8x512xf32> to vector<8x384xf32>
    %127 = arith.negf %126 : vector<8x384xf32>
    %128 = math.exp %127 : vector<8x384xf32>
    %cst_62 = arith.constant 1.000000e+00 : f32
    %129 = vector.broadcast %cst_62 : f32 to vector<8x384xf32>
    %130 = arith.addf %129, %128 : vector<8x384xf32>
    %131 = arith.divf %129, %130 : vector<8x384xf32>
    %132 = vector.extract_strided_slice %131 {offsets = [0, 0], sizes = [8, 32], strides = [1, 1]} : vector<8x384xf32> to vector<8x32xf32>
    %133 = vector.extract_strided_slice %131 {offsets = [0, 128], sizes = [8, 32], strides = [1, 1]} : vector<8x384xf32> to vector<8x32xf32>
    %134 = vector.extract_strided_slice %131 {offsets = [0, 256], sizes = [8, 32], strides = [1, 1]} : vector<8x384xf32> to vector<8x32xf32>
    %135 = vector.extract_strided_slice %125 {offsets = [0, 384], sizes = [8, 32], strides = [1, 1]} : vector<8x512xf32> to vector<8x32xf32>
    %136 = math.tanh %135 : vector<8x32xf32>
    %137 = arith.mulf %133, %111 : vector<8x32xf32>
    %138 = arith.mulf %132, %136 : vector<8x32xf32>
    %139 = arith.addf %137, %138 : vector<8x32xf32>
    %140 = math.tanh %139 : vector<8x32xf32>
    %141 = arith.mulf %134, %140 : vector<8x32xf32>
    %142 = arith.truncf %141 : vector<8x32xf32> to vector<8x32xbf16>
    %c0_63 = arith.constant 0 : index
    %c0_64 = arith.constant 0 : index
    %143 = vector.load %arg4[%c0_63, %c0_64] : memref<32x512xbf16, #tpu.memory_space<vmem>>, vector<32x512xbf16>
    %cst_65 = arith.constant dense<0.000000e+00> : vector<8x512xf32>
    %144 = tpu.matmul %142, %143, %cst_65 {dimension_numbers = #tpu.dot_dimension_numbers<[1], [0], [0], [1], [0, 0, 1, 1], [], []>} : vector<8x32xbf16>, vector<32x512xbf16>, vector<8x512xf32> -> vector<8x512xf32>
    %c0_66 = arith.constant 0 : index
    %c0_67 = arith.constant 0 : index
    %145 = vector.load %arg6[%c0_66, %c0_67] : memref<1x512xf32, #tpu.memory_space<vmem>>, vector<1x512xf32>
    %146 = vector.broadcast %145 : vector<1x512xf32> to vector<8x512xf32>
    %147 = arith.addf %144, %146 : vector<8x512xf32>
    %c32_68 = arith.constant 32 : index
    %c0_69 = arith.constant 0 : index
    %148 = vector.load %arg11[%c32_68, %c0_69] : memref<64x512xf32, #tpu.memory_space<vmem>>, vector<8x512xf32>
    tpu.vector_store %arg11[%c32_68, %c0_69], %147 {strides = array<i32>} : memref<64x512xf32, #tpu.memory_space<vmem>>, vector<8x512xf32>,
    %c40 = arith.constant 40 : index
    %c0_70 = arith.constant 0 : index
    %149 = vector.load %arg10[%c40, %c0_70] : memref<64x512xf32, #tpu.memory_space<vmem>>, vector<8x512xf32>
    %150 = arith.truncf %141 : vector<8x32xf32> to vector<8x32xbf16>
    %c0_71 = arith.constant 0 : index
    %c0_72 = arith.constant 0 : index
    %151 = vector.load %arg2[%c0_71, %c0_72] : memref<32x512xbf16, #tpu.memory_space<vmem>>, vector<32x512xbf16>
    %cst_73 = arith.constant dense<0.000000e+00> : vector<8x512xf32>
    %152 = tpu.matmul %150, %151, %cst_73 {dimension_numbers = #tpu.dot_dimension_numbers<[1], [0], [0], [1], [0, 0, 1, 1], [], []>} : vector<8x32xbf16>, vector<32x512xbf16>, vector<8x512xf32> -> vector<8x512xf32>
    %153 = arith.addf %149, %152 : vector<8x512xf32>
    %154 = vector.extract_strided_slice %153 {offsets = [0, 0], sizes = [8, 384], strides = [1, 1]} : vector<8x512xf32> to vector<8x384xf32>
    %155 = arith.negf %154 : vector<8x384xf32>
    %156 = math.exp %155 : vector<8x384xf32>
    %cst_74 = arith.constant 1.000000e+00 : f32
    %157 = vector.broadcast %cst_74 : f32 to vector<8x384xf32>
    %158 = arith.addf %157, %156 : vector<8x384xf32>
    %159 = arith.divf %157, %158 : vector<8x384xf32>
    %160 = vector.extract_strided_slice %159 {offsets = [0, 0], sizes = [8, 32], strides = [1, 1]} : vector<8x384xf32> to vector<8x32xf32>
    %161 = vector.extract_strided_slice %159 {offsets = [0, 128], sizes = [8, 32], strides = [1, 1]} : vector<8x384xf32> to vector<8x32xf32>
    %162 = vector.extract_strided_slice %159 {offsets = [0, 256], sizes = [8, 32], strides = [1, 1]} : vector<8x384xf32> to vector<8x32xf32>
    %163 = vector.extract_strided_slice %153 {offsets = [0, 384], sizes = [8, 32], strides = [1, 1]} : vector<8x512xf32> to vector<8x32xf32>
    %164 = math.tanh %163 : vector<8x32xf32>
    %165 = arith.mulf %161, %139 : vector<8x32xf32>
    %166 = arith.mulf %160, %164 : vector<8x32xf32>
    %167 = arith.addf %165, %166 : vector<8x32xf32>
    %168 = math.tanh %167 : vector<8x32xf32>
    %169 = arith.mulf %162, %168 : vector<8x32xf32>
    %170 = arith.truncf %169 : vector<8x32xf32> to vector<8x32xbf16>
    %c0_75 = arith.constant 0 : index
    %c0_76 = arith.constant 0 : index
    %171 = vector.load %arg4[%c0_75, %c0_76] : memref<32x512xbf16, #tpu.memory_space<vmem>>, vector<32x512xbf16>
    %cst_77 = arith.constant dense<0.000000e+00> : vector<8x512xf32>
    %172 = tpu.matmul %170, %171, %cst_77 {dimension_numbers = #tpu.dot_dimension_numbers<[1], [0], [0], [1], [0, 0, 1, 1], [], []>} : vector<8x32xbf16>, vector<32x512xbf16>, vector<8x512xf32> -> vector<8x512xf32>
    %c0_78 = arith.constant 0 : index
    %c0_79 = arith.constant 0 : index
    %173 = vector.load %arg6[%c0_78, %c0_79] : memref<1x512xf32, #tpu.memory_space<vmem>>, vector<1x512xf32>
    %174 = vector.broadcast %173 : vector<1x512xf32> to vector<8x512xf32>
    %175 = arith.addf %172, %174 : vector<8x512xf32>
    %c40_80 = arith.constant 40 : index
    %c0_81 = arith.constant 0 : index
    %176 = vector.load %arg11[%c40_80, %c0_81] : memref<64x512xf32, #tpu.memory_space<vmem>>, vector<8x512xf32>
    tpu.vector_store %arg11[%c40_80, %c0_81], %175 {strides = array<i32>} : memref<64x512xf32, #tpu.memory_space<vmem>>, vector<8x512xf32>,
    %c48 = arith.constant 48 : index
    %c0_82 = arith.constant 0 : index
    %177 = vector.load %arg10[%c48, %c0_82] : memref<64x512xf32, #tpu.memory_space<vmem>>, vector<8x512xf32>
    %178 = arith.truncf %169 : vector<8x32xf32> to vector<8x32xbf16>
    %c0_83 = arith.constant 0 : index
    %c0_84 = arith.constant 0 : index
    %179 = vector.load %arg2[%c0_83, %c0_84] : memref<32x512xbf16, #tpu.memory_space<vmem>>, vector<32x512xbf16>
    %cst_85 = arith.constant dense<0.000000e+00> : vector<8x512xf32>
    %180 = tpu.matmul %178, %179, %cst_85 {dimension_numbers = #tpu.dot_dimension_numbers<[1], [0], [0], [1], [0, 0, 1, 1], [], []>} : vector<8x32xbf16>, vector<32x512xbf16>, vector<8x512xf32> -> vector<8x512xf32>
    %181 = arith.addf %177, %180 : vector<8x512xf32>
    %182 = vector.extract_strided_slice %181 {offsets = [0, 0], sizes = [8, 384], strides = [1, 1]} : vector<8x512xf32> to vector<8x384xf32>
    %183 = arith.negf %182 : vector<8x384xf32>
    %184 = math.exp %183 : vector<8x384xf32>
    %cst_86 = arith.constant 1.000000e+00 : f32
    %185 = vector.broadcast %cst_86 : f32 to vector<8x384xf32>
    %186 = arith.addf %185, %184 : vector<8x384xf32>
    %187 = arith.divf %185, %186 : vector<8x384xf32>
    %188 = vector.extract_strided_slice %187 {offsets = [0, 0], sizes = [8, 32], strides = [1, 1]} : vector<8x384xf32> to vector<8x32xf32>
    %189 = vector.extract_strided_slice %187 {offsets = [0, 128], sizes = [8, 32], strides = [1, 1]} : vector<8x384xf32> to vector<8x32xf32>
    %190 = vector.extract_strided_slice %187 {offsets = [0, 256], sizes = [8, 32], strides = [1, 1]} : vector<8x384xf32> to vector<8x32xf32>
    %191 = vector.extract_strided_slice %181 {offsets = [0, 384], sizes = [8, 32], strides = [1, 1]} : vector<8x512xf32> to vector<8x32xf32>
    %192 = math.tanh %191 : vector<8x32xf32>
    %193 = arith.mulf %189, %167 : vector<8x32xf32>
    %194 = arith.mulf %188, %192 : vector<8x32xf32>
    %195 = arith.addf %193, %194 : vector<8x32xf32>
    %196 = math.tanh %195 : vector<8x32xf32>
    %197 = arith.mulf %190, %196 : vector<8x32xf32>
    %198 = arith.truncf %197 : vector<8x32xf32> to vector<8x32xbf16>
    %c0_87 = arith.constant 0 : index
    %c0_88 = arith.constant 0 : index
    %199 = vector.load %arg4[%c0_87, %c0_88] : memref<32x512xbf16, #tpu.memory_space<vmem>>, vector<32x512xbf16>
    %cst_89 = arith.constant dense<0.000000e+00> : vector<8x512xf32>
    %200 = tpu.matmul %198, %199, %cst_89 {dimension_numbers = #tpu.dot_dimension_numbers<[1], [0], [0], [1], [0, 0, 1, 1], [], []>} : vector<8x32xbf16>, vector<32x512xbf16>, vector<8x512xf32> -> vector<8x512xf32>
    %c0_90 = arith.constant 0 : index
    %c0_91 = arith.constant 0 : index
    %201 = vector.load %arg6[%c0_90, %c0_91] : memref<1x512xf32, #tpu.memory_space<vmem>>, vector<1x512xf32>
    %202 = vector.broadcast %201 : vector<1x512xf32> to vector<8x512xf32>
    %203 = arith.addf %200, %202 : vector<8x512xf32>
    %c48_92 = arith.constant 48 : index
    %c0_93 = arith.constant 0 : index
    %204 = vector.load %arg11[%c48_92, %c0_93] : memref<64x512xf32, #tpu.memory_space<vmem>>, vector<8x512xf32>
    tpu.vector_store %arg11[%c48_92, %c0_93], %203 {strides = array<i32>} : memref<64x512xf32, #tpu.memory_space<vmem>>, vector<8x512xf32>,
    %c56 = arith.constant 56 : index
    %c0_94 = arith.constant 0 : index
    %205 = vector.load %arg10[%c56, %c0_94] : memref<64x512xf32, #tpu.memory_space<vmem>>, vector<8x512xf32>
    %206 = arith.truncf %197 : vector<8x32xf32> to vector<8x32xbf16>
    %c0_95 = arith.constant 0 : index
    %c0_96 = arith.constant 0 : index
    %207 = vector.load %arg2[%c0_95, %c0_96] : memref<32x512xbf16, #tpu.memory_space<vmem>>, vector<32x512xbf16>
    %cst_97 = arith.constant dense<0.000000e+00> : vector<8x512xf32>
    %208 = tpu.matmul %206, %207, %cst_97 {dimension_numbers = #tpu.dot_dimension_numbers<[1], [0], [0], [1], [0, 0, 1, 1], [], []>} : vector<8x32xbf16>, vector<32x512xbf16>, vector<8x512xf32> -> vector<8x512xf32>
    %209 = arith.addf %205, %208 : vector<8x512xf32>
    %210 = vector.extract_strided_slice %209 {offsets = [0, 0], sizes = [8, 384], strides = [1, 1]} : vector<8x512xf32> to vector<8x384xf32>
    %211 = arith.negf %210 : vector<8x384xf32>
    %212 = math.exp %211 : vector<8x384xf32>
    %cst_98 = arith.constant 1.000000e+00 : f32
    %213 = vector.broadcast %cst_98 : f32 to vector<8x384xf32>
    %214 = arith.addf %213, %212 : vector<8x384xf32>
    %215 = arith.divf %213, %214 : vector<8x384xf32>
    %216 = vector.extract_strided_slice %215 {offsets = [0, 0], sizes = [8, 32], strides = [1, 1]} : vector<8x384xf32> to vector<8x32xf32>
    %217 = vector.extract_strided_slice %215 {offsets = [0, 128], sizes = [8, 32], strides = [1, 1]} : vector<8x384xf32> to vector<8x32xf32>
    %218 = vector.extract_strided_slice %215 {offsets = [0, 256], sizes = [8, 32], strides = [1, 1]} : vector<8x384xf32> to vector<8x32xf32>
    %219 = vector.extract_strided_slice %209 {offsets = [0, 384], sizes = [8, 32], strides = [1, 1]} : vector<8x512xf32> to vector<8x32xf32>
    %220 = math.tanh %219 : vector<8x32xf32>
    %221 = arith.mulf %217, %195 : vector<8x32xf32>
    %222 = arith.mulf %216, %220 : vector<8x32xf32>
    %223 = arith.addf %221, %222 : vector<8x32xf32>
    %224 = math.tanh %223 : vector<8x32xf32>
    %225 = arith.mulf %218, %224 : vector<8x32xf32>
    %226 = arith.truncf %225 : vector<8x32xf32> to vector<8x32xbf16>
    %c0_99 = arith.constant 0 : index
    %c0_100 = arith.constant 0 : index
    %227 = vector.load %arg4[%c0_99, %c0_100] : memref<32x512xbf16, #tpu.memory_space<vmem>>, vector<32x512xbf16>
    %cst_101 = arith.constant dense<0.000000e+00> : vector<8x512xf32>
    %228 = tpu.matmul %226, %227, %cst_101 {dimension_numbers = #tpu.dot_dimension_numbers<[1], [0], [0], [1], [0, 0, 1, 1], [], []>} : vector<8x32xbf16>, vector<32x512xbf16>, vector<8x512xf32> -> vector<8x512xf32>
    %c0_102 = arith.constant 0 : index
    %c0_103 = arith.constant 0 : index
    %229 = vector.load %arg6[%c0_102, %c0_103] : memref<1x512xf32, #tpu.memory_space<vmem>>, vector<1x512xf32>
    %230 = vector.broadcast %229 : vector<1x512xf32> to vector<8x512xf32>
    %231 = arith.addf %228, %230 : vector<8x512xf32>
    %c56_104 = arith.constant 56 : index
    %c0_105 = arith.constant 0 : index
    %232 = vector.load %arg11[%c56_104, %c0_105] : memref<64x512xf32, #tpu.memory_space<vmem>>, vector<8x512xf32>
    tpu.vector_store %arg11[%c56_104, %c0_105], %231 {strides = array<i32>} : memref<64x512xf32, #tpu.memory_space<vmem>>, vector<8x512xf32>,
    %cst_106 = arith.constant 0.000000e+00 : f32
    %233 = vector.broadcast %cst_106 : f32 to vector<8x32xf32>
    %cst_107 = arith.constant 0.000000e+00 : f32
    %234 = vector.broadcast %cst_107 : f32 to vector<8x32xf32>
    %c0_108 = arith.constant 0 : index
    %c0_109 = arith.constant 0 : index
    %235 = vector.load %arg11[%c0_108, %c0_109] : memref<64x512xf32, #tpu.memory_space<vmem>>, vector<8x512xf32>
    %236 = arith.truncf %233 : vector<8x32xf32> to vector<8x32xbf16>
    %c0_110 = arith.constant 0 : index
    %c0_111 = arith.constant 0 : index
    %237 = vector.load %arg5[%c0_110, %c0_111] : memref<32x512xbf16, #tpu.memory_space<vmem>>, vector<32x512xbf16>
    %cst_112 = arith.constant dense<0.000000e+00> : vector<8x512xf32>
    %238 = tpu.matmul %236, %237, %cst_112 {dimension_numbers = #tpu.dot_dimension_numbers<[1], [0], [0], [1], [0, 0, 1, 1], [], []>} : vector<8x32xbf16>, vector<32x512xbf16>, vector<8x512xf32> -> vector<8x512xf32>
    %239 = arith.addf %235, %238 : vector<8x512xf32>
    %240 = vector.extract_strided_slice %239 {offsets = [0, 0], sizes = [8, 384], strides = [1, 1]} : vector<8x512xf32> to vector<8x384xf32>
    %241 = arith.negf %240 : vector<8x384xf32>
    %242 = math.exp %241 : vector<8x384xf32>
    %cst_113 = arith.constant 1.000000e+00 : f32
    %243 = vector.broadcast %cst_113 : f32 to vector<8x384xf32>
    %244 = arith.addf %243, %242 : vector<8x384xf32>
    %245 = arith.divf %243, %244 : vector<8x384xf32>
    %246 = vector.extract_strided_slice %245 {offsets = [0, 0], sizes = [8, 32], strides = [1, 1]} : vector<8x384xf32> to vector<8x32xf32>
    %247 = vector.extract_strided_slice %245 {offsets = [0, 128], sizes = [8, 32], strides = [1, 1]} : vector<8x384xf32> to vector<8x32xf32>
    %248 = vector.extract_strided_slice %245 {offsets = [0, 256], sizes = [8, 32], strides = [1, 1]} : vector<8x384xf32> to vector<8x32xf32>
    %249 = vector.extract_strided_slice %239 {offsets = [0, 384], sizes = [8, 32], strides = [1, 1]} : vector<8x512xf32> to vector<8x32xf32>
    %250 = math.tanh %249 : vector<8x32xf32>
    %251 = arith.mulf %247, %234 : vector<8x32xf32>
    %252 = arith.mulf %246, %250 : vector<8x32xf32>
    %253 = arith.addf %251, %252 : vector<8x32xf32>
    %254 = math.tanh %253 : vector<8x32xf32>
    %255 = arith.mulf %248, %254 : vector<8x32xf32>
    %c8_114 = arith.constant 8 : index
    %c0_115 = arith.constant 0 : index
    %256 = vector.load %arg11[%c8_114, %c0_115] : memref<64x512xf32, #tpu.memory_space<vmem>>, vector<8x512xf32>
    %257 = arith.truncf %255 : vector<8x32xf32> to vector<8x32xbf16>
    %c0_116 = arith.constant 0 : index
    %c0_117 = arith.constant 0 : index
    %258 = vector.load %arg5[%c0_116, %c0_117] : memref<32x512xbf16, #tpu.memory_space<vmem>>, vector<32x512xbf16>
    %cst_118 = arith.constant dense<0.000000e+00> : vector<8x512xf32>
    %259 = tpu.matmul %257, %258, %cst_118 {dimension_numbers = #tpu.dot_dimension_numbers<[1], [0], [0], [1], [0, 0, 1, 1], [], []>} : vector<8x32xbf16>, vector<32x512xbf16>, vector<8x512xf32> -> vector<8x512xf32>
    %260 = arith.addf %256, %259 : vector<8x512xf32>
    %261 = vector.extract_strided_slice %260 {offsets = [0, 0], sizes = [8, 384], strides = [1, 1]} : vector<8x512xf32> to vector<8x384xf32>
    %262 = arith.negf %261 : vector<8x384xf32>
    %263 = math.exp %262 : vector<8x384xf32>
    %cst_119 = arith.constant 1.000000e+00 : f32
    %264 = vector.broadcast %cst_119 : f32 to vector<8x384xf32>
    %265 = arith.addf %264, %263 : vector<8x384xf32>
    %266 = arith.divf %264, %265 : vector<8x384xf32>
    %267 = vector.extract_strided_slice %266 {offsets = [0, 0], sizes = [8, 32], strides = [1, 1]} : vector<8x384xf32> to vector<8x32xf32>
    %268 = vector.extract_strided_slice %266 {offsets = [0, 128], sizes = [8, 32], strides = [1, 1]} : vector<8x384xf32> to vector<8x32xf32>
    %269 = vector.extract_strided_slice %266 {offsets = [0, 256], sizes = [8, 32], strides = [1, 1]} : vector<8x384xf32> to vector<8x32xf32>
    %270 = vector.extract_strided_slice %260 {offsets = [0, 384], sizes = [8, 32], strides = [1, 1]} : vector<8x512xf32> to vector<8x32xf32>
    %271 = math.tanh %270 : vector<8x32xf32>
    %272 = arith.mulf %268, %253 : vector<8x32xf32>
    %273 = arith.mulf %267, %271 : vector<8x32xf32>
    %274 = arith.addf %272, %273 : vector<8x32xf32>
    %275 = math.tanh %274 : vector<8x32xf32>
    %276 = arith.mulf %269, %275 : vector<8x32xf32>
    %c16_120 = arith.constant 16 : index
    %c0_121 = arith.constant 0 : index
    %277 = vector.load %arg11[%c16_120, %c0_121] : memref<64x512xf32, #tpu.memory_space<vmem>>, vector<8x512xf32>
    %278 = arith.truncf %276 : vector<8x32xf32> to vector<8x32xbf16>
    %c0_122 = arith.constant 0 : index
    %c0_123 = arith.constant 0 : index
    %279 = vector.load %arg5[%c0_122, %c0_123] : memref<32x512xbf16, #tpu.memory_space<vmem>>, vector<32x512xbf16>
    %cst_124 = arith.constant dense<0.000000e+00> : vector<8x512xf32>
    %280 = tpu.matmul %278, %279, %cst_124 {dimension_numbers = #tpu.dot_dimension_numbers<[1], [0], [0], [1], [0, 0, 1, 1], [], []>} : vector<8x32xbf16>, vector<32x512xbf16>, vector<8x512xf32> -> vector<8x512xf32>
    %281 = arith.addf %277, %280 : vector<8x512xf32>
    %282 = vector.extract_strided_slice %281 {offsets = [0, 0], sizes = [8, 384], strides = [1, 1]} : vector<8x512xf32> to vector<8x384xf32>
    %283 = arith.negf %282 : vector<8x384xf32>
    %284 = math.exp %283 : vector<8x384xf32>
    %cst_125 = arith.constant 1.000000e+00 : f32
    %285 = vector.broadcast %cst_125 : f32 to vector<8x384xf32>
    %286 = arith.addf %285, %284 : vector<8x384xf32>
    %287 = arith.divf %285, %286 : vector<8x384xf32>
    %288 = vector.extract_strided_slice %287 {offsets = [0, 0], sizes = [8, 32], strides = [1, 1]} : vector<8x384xf32> to vector<8x32xf32>
    %289 = vector.extract_strided_slice %287 {offsets = [0, 128], sizes = [8, 32], strides = [1, 1]} : vector<8x384xf32> to vector<8x32xf32>
    %290 = vector.extract_strided_slice %287 {offsets = [0, 256], sizes = [8, 32], strides = [1, 1]} : vector<8x384xf32> to vector<8x32xf32>
    %291 = vector.extract_strided_slice %281 {offsets = [0, 384], sizes = [8, 32], strides = [1, 1]} : vector<8x512xf32> to vector<8x32xf32>
    %292 = math.tanh %291 : vector<8x32xf32>
    %293 = arith.mulf %289, %274 : vector<8x32xf32>
    %294 = arith.mulf %288, %292 : vector<8x32xf32>
    %295 = arith.addf %293, %294 : vector<8x32xf32>
    %296 = math.tanh %295 : vector<8x32xf32>
    %297 = arith.mulf %290, %296 : vector<8x32xf32>
    %c24_126 = arith.constant 24 : index
    %c0_127 = arith.constant 0 : index
    %298 = vector.load %arg11[%c24_126, %c0_127] : memref<64x512xf32, #tpu.memory_space<vmem>>, vector<8x512xf32>
    %299 = arith.truncf %297 : vector<8x32xf32> to vector<8x32xbf16>
    %c0_128 = arith.constant 0 : index
    %c0_129 = arith.constant 0 : index
    %300 = vector.load %arg5[%c0_128, %c0_129] : memref<32x512xbf16, #tpu.memory_space<vmem>>, vector<32x512xbf16>
    %cst_130 = arith.constant dense<0.000000e+00> : vector<8x512xf32>
    %301 = tpu.matmul %299, %300, %cst_130 {dimension_numbers = #tpu.dot_dimension_numbers<[1], [0], [0], [1], [0, 0, 1, 1], [], []>} : vector<8x32xbf16>, vector<32x512xbf16>, vector<8x512xf32> -> vector<8x512xf32>
    %302 = arith.addf %298, %301 : vector<8x512xf32>
    %303 = vector.extract_strided_slice %302 {offsets = [0, 0], sizes = [8, 384], strides = [1, 1]} : vector<8x512xf32> to vector<8x384xf32>
    %304 = arith.negf %303 : vector<8x384xf32>
    %305 = math.exp %304 : vector<8x384xf32>
    %cst_131 = arith.constant 1.000000e+00 : f32
    %306 = vector.broadcast %cst_131 : f32 to vector<8x384xf32>
    %307 = arith.addf %306, %305 : vector<8x384xf32>
    %308 = arith.divf %306, %307 : vector<8x384xf32>
    %309 = vector.extract_strided_slice %308 {offsets = [0, 0], sizes = [8, 32], strides = [1, 1]} : vector<8x384xf32> to vector<8x32xf32>
    %310 = vector.extract_strided_slice %308 {offsets = [0, 128], sizes = [8, 32], strides = [1, 1]} : vector<8x384xf32> to vector<8x32xf32>
    %311 = vector.extract_strided_slice %308 {offsets = [0, 256], sizes = [8, 32], strides = [1, 1]} : vector<8x384xf32> to vector<8x32xf32>
    %312 = vector.extract_strided_slice %302 {offsets = [0, 384], sizes = [8, 32], strides = [1, 1]} : vector<8x512xf32> to vector<8x32xf32>
    %313 = math.tanh %312 : vector<8x32xf32>
    %314 = arith.mulf %310, %295 : vector<8x32xf32>
    %315 = arith.mulf %309, %313 : vector<8x32xf32>
    %316 = arith.addf %314, %315 : vector<8x32xf32>
    %317 = math.tanh %316 : vector<8x32xf32>
    %318 = arith.mulf %311, %317 : vector<8x32xf32>
    %c32_132 = arith.constant 32 : index
    %c0_133 = arith.constant 0 : index
    %319 = vector.load %arg11[%c32_132, %c0_133] : memref<64x512xf32, #tpu.memory_space<vmem>>, vector<8x512xf32>
    %320 = arith.truncf %318 : vector<8x32xf32> to vector<8x32xbf16>
    %c0_134 = arith.constant 0 : index
    %c0_135 = arith.constant 0 : index
    %321 = vector.load %arg5[%c0_134, %c0_135] : memref<32x512xbf16, #tpu.memory_space<vmem>>, vector<32x512xbf16>
    %cst_136 = arith.constant dense<0.000000e+00> : vector<8x512xf32>
    %322 = tpu.matmul %320, %321, %cst_136 {dimension_numbers = #tpu.dot_dimension_numbers<[1], [0], [0], [1], [0, 0, 1, 1], [], []>} : vector<8x32xbf16>, vector<32x512xbf16>, vector<8x512xf32> -> vector<8x512xf32>
    %323 = arith.addf %319, %322 : vector<8x512xf32>
    %324 = vector.extract_strided_slice %323 {offsets = [0, 0], sizes = [8, 384], strides = [1, 1]} : vector<8x512xf32> to vector<8x384xf32>
    %325 = arith.negf %324 : vector<8x384xf32>
    %326 = math.exp %325 : vector<8x384xf32>
    %cst_137 = arith.constant 1.000000e+00 : f32
    %327 = vector.broadcast %cst_137 : f32 to vector<8x384xf32>
    %328 = arith.addf %327, %326 : vector<8x384xf32>
    %329 = arith.divf %327, %328 : vector<8x384xf32>
    %330 = vector.extract_strided_slice %329 {offsets = [0, 0], sizes = [8, 32], strides = [1, 1]} : vector<8x384xf32> to vector<8x32xf32>
    %331 = vector.extract_strided_slice %329 {offsets = [0, 128], sizes = [8, 32], strides = [1, 1]} : vector<8x384xf32> to vector<8x32xf32>
    %332 = vector.extract_strided_slice %329 {offsets = [0, 256], sizes = [8, 32], strides = [1, 1]} : vector<8x384xf32> to vector<8x32xf32>
    %333 = vector.extract_strided_slice %323 {offsets = [0, 384], sizes = [8, 32], strides = [1, 1]} : vector<8x512xf32> to vector<8x32xf32>
    %334 = math.tanh %333 : vector<8x32xf32>
    %335 = arith.mulf %331, %316 : vector<8x32xf32>
    %336 = arith.mulf %330, %334 : vector<8x32xf32>
    %337 = arith.addf %335, %336 : vector<8x32xf32>
    %338 = math.tanh %337 : vector<8x32xf32>
    %339 = arith.mulf %332, %338 : vector<8x32xf32>
    %c40_138 = arith.constant 40 : index
    %c0_139 = arith.constant 0 : index
    %340 = vector.load %arg11[%c40_138, %c0_139] : memref<64x512xf32, #tpu.memory_space<vmem>>, vector<8x512xf32>
    %341 = arith.truncf %339 : vector<8x32xf32> to vector<8x32xbf16>
    %c0_140 = arith.constant 0 : index
    %c0_141 = arith.constant 0 : index
    %342 = vector.load %arg5[%c0_140, %c0_141] : memref<32x512xbf16, #tpu.memory_space<vmem>>, vector<32x512xbf16>
    %cst_142 = arith.constant dense<0.000000e+00> : vector<8x512xf32>
    %343 = tpu.matmul %341, %342, %cst_142 {dimension_numbers = #tpu.dot_dimension_numbers<[1], [0], [0], [1], [0, 0, 1, 1], [], []>} : vector<8x32xbf16>, vector<32x512xbf16>, vector<8x512xf32> -> vector<8x512xf32>
    %344 = arith.addf %340, %343 : vector<8x512xf32>
    %345 = vector.extract_strided_slice %344 {offsets = [0, 0], sizes = [8, 384], strides = [1, 1]} : vector<8x512xf32> to vector<8x384xf32>
    %346 = arith.negf %345 : vector<8x384xf32>
    %347 = math.exp %346 : vector<8x384xf32>
    %cst_143 = arith.constant 1.000000e+00 : f32
    %348 = vector.broadcast %cst_143 : f32 to vector<8x384xf32>
    %349 = arith.addf %348, %347 : vector<8x384xf32>
    %350 = arith.divf %348, %349 : vector<8x384xf32>
    %351 = vector.extract_strided_slice %350 {offsets = [0, 0], sizes = [8, 32], strides = [1, 1]} : vector<8x384xf32> to vector<8x32xf32>
    %352 = vector.extract_strided_slice %350 {offsets = [0, 128], sizes = [8, 32], strides = [1, 1]} : vector<8x384xf32> to vector<8x32xf32>
    %353 = vector.extract_strided_slice %350 {offsets = [0, 256], sizes = [8, 32], strides = [1, 1]} : vector<8x384xf32> to vector<8x32xf32>
    %354 = vector.extract_strided_slice %344 {offsets = [0, 384], sizes = [8, 32], strides = [1, 1]} : vector<8x512xf32> to vector<8x32xf32>
    %355 = math.tanh %354 : vector<8x32xf32>
    %356 = arith.mulf %352, %337 : vector<8x32xf32>
    %357 = arith.mulf %351, %355 : vector<8x32xf32>
    %358 = arith.addf %356, %357 : vector<8x32xf32>
    %359 = math.tanh %358 : vector<8x32xf32>
    %360 = arith.mulf %353, %359 : vector<8x32xf32>
    %c48_144 = arith.constant 48 : index
    %c0_145 = arith.constant 0 : index
    %361 = vector.load %arg11[%c48_144, %c0_145] : memref<64x512xf32, #tpu.memory_space<vmem>>, vector<8x512xf32>
    %362 = arith.truncf %360 : vector<8x32xf32> to vector<8x32xbf16>
    %c0_146 = arith.constant 0 : index
    %c0_147 = arith.constant 0 : index
    %363 = vector.load %arg5[%c0_146, %c0_147] : memref<32x512xbf16, #tpu.memory_space<vmem>>, vector<32x512xbf16>
    %cst_148 = arith.constant dense<0.000000e+00> : vector<8x512xf32>
    %364 = tpu.matmul %362, %363, %cst_148 {dimension_numbers = #tpu.dot_dimension_numbers<[1], [0], [0], [1], [0, 0, 1, 1], [], []>} : vector<8x32xbf16>, vector<32x512xbf16>, vector<8x512xf32> -> vector<8x512xf32>
    %365 = arith.addf %361, %364 : vector<8x512xf32>
    %366 = vector.extract_strided_slice %365 {offsets = [0, 0], sizes = [8, 384], strides = [1, 1]} : vector<8x512xf32> to vector<8x384xf32>
    %367 = arith.negf %366 : vector<8x384xf32>
    %368 = math.exp %367 : vector<8x384xf32>
    %cst_149 = arith.constant 1.000000e+00 : f32
    %369 = vector.broadcast %cst_149 : f32 to vector<8x384xf32>
    %370 = arith.addf %369, %368 : vector<8x384xf32>
    %371 = arith.divf %369, %370 : vector<8x384xf32>
    %372 = vector.extract_strided_slice %371 {offsets = [0, 0], sizes = [8, 32], strides = [1, 1]} : vector<8x384xf32> to vector<8x32xf32>
    %373 = vector.extract_strided_slice %371 {offsets = [0, 128], sizes = [8, 32], strides = [1, 1]} : vector<8x384xf32> to vector<8x32xf32>
    %374 = vector.extract_strided_slice %371 {offsets = [0, 256], sizes = [8, 32], strides = [1, 1]} : vector<8x384xf32> to vector<8x32xf32>
    %375 = vector.extract_strided_slice %365 {offsets = [0, 384], sizes = [8, 32], strides = [1, 1]} : vector<8x512xf32> to vector<8x32xf32>
    %376 = math.tanh %375 : vector<8x32xf32>
    %377 = arith.mulf %373, %358 : vector<8x32xf32>
    %378 = arith.mulf %372, %376 : vector<8x32xf32>
    %379 = arith.addf %377, %378 : vector<8x32xf32>
    %380 = math.tanh %379 : vector<8x32xf32>
    %381 = arith.mulf %374, %380 : vector<8x32xf32>
    %c56_150 = arith.constant 56 : index
    %c0_151 = arith.constant 0 : index
    %382 = vector.load %arg11[%c56_150, %c0_151] : memref<64x512xf32, #tpu.memory_space<vmem>>, vector<8x512xf32>
    %383 = arith.truncf %381 : vector<8x32xf32> to vector<8x32xbf16>
    %c0_152 = arith.constant 0 : index
    %c0_153 = arith.constant 0 : index
    %384 = vector.load %arg5[%c0_152, %c0_153] : memref<32x512xbf16, #tpu.memory_space<vmem>>, vector<32x512xbf16>
    %cst_154 = arith.constant dense<0.000000e+00> : vector<8x512xf32>
    %385 = tpu.matmul %383, %384, %cst_154 {dimension_numbers = #tpu.dot_dimension_numbers<[1], [0], [0], [1], [0, 0, 1, 1], [], []>} : vector<8x32xbf16>, vector<32x512xbf16>, vector<8x512xf32> -> vector<8x512xf32>
    %386 = arith.addf %382, %385 : vector<8x512xf32>
    %387 = vector.extract_strided_slice %386 {offsets = [0, 0], sizes = [8, 384], strides = [1, 1]} : vector<8x512xf32> to vector<8x384xf32>
    %388 = arith.negf %387 : vector<8x384xf32>
    %389 = math.exp %388 : vector<8x384xf32>
    %cst_155 = arith.constant 1.000000e+00 : f32
    %390 = vector.broadcast %cst_155 : f32 to vector<8x384xf32>
    %391 = arith.addf %390, %389 : vector<8x384xf32>
    %392 = arith.divf %390, %391 : vector<8x384xf32>
    %393 = vector.extract_strided_slice %392 {offsets = [0, 0], sizes = [8, 32], strides = [1, 1]} : vector<8x384xf32> to vector<8x32xf32>
    %394 = vector.extract_strided_slice %392 {offsets = [0, 128], sizes = [8, 32], strides = [1, 1]} : vector<8x384xf32> to vector<8x32xf32>
    %395 = vector.extract_strided_slice %392 {offsets = [0, 256], sizes = [8, 32], strides = [1, 1]} : vector<8x384xf32> to vector<8x32xf32>
    %396 = vector.extract_strided_slice %386 {offsets = [0, 384], sizes = [8, 32], strides = [1, 1]} : vector<8x512xf32> to vector<8x32xf32>
    %397 = math.tanh %396 : vector<8x32xf32>
    %398 = arith.mulf %394, %379 : vector<8x32xf32>
    %399 = arith.mulf %393, %397 : vector<8x32xf32>
    %400 = arith.addf %398, %399 : vector<8x32xf32>
    %401 = math.tanh %400 : vector<8x32xf32>
    %402 = arith.mulf %395, %401 : vector<8x32xf32>
    %c0_156 = arith.constant 0 : index
    %c0_157 = arith.constant 0 : index
    %403 = vector.load %arg7[%c0_156, %c0_157] : memref<32x128xf32, #tpu.memory_space<vmem>>, vector<32x128xf32>
    %cst_158 = arith.constant dense<0.000000e+00> : vector<8x128xf32>
    %404 = tpu.matmul %402, %403, %cst_158 {dimension_numbers = #tpu.dot_dimension_numbers<[1], [0], [0], [1], [0, 0, 1, 1], [], []>} : vector<8x32xf32>, vector<32x128xf32>, vector<8x128xf32> -> vector<8x128xf32>
    %c0_159 = arith.constant 0 : index
    %c0_160 = arith.constant 0 : index
    %405 = vector.load %arg8[%c0_159, %c0_160] : memref<1x128xf32, #tpu.memory_space<vmem>>, vector<1x128xf32>
    %406 = vector.broadcast %405 : vector<1x128xf32> to vector<8x128xf32>
    %407 = arith.addf %404, %406 : vector<8x128xf32>
    %cst_161 = arith.constant 0.000000e+00 : f32
    %408 = vector.broadcast %cst_161 : f32 to vector<8x128xf32>
    %409 = arith.maximumf %407, %408 : vector<8x128xf32>
    %c0_162 = arith.constant 0 : index
    %c0_163 = arith.constant 0 : index
    %410 = vector.load %arg9[%c0_162, %c0_163] : memref<8x128xf32, #tpu.memory_space<vmem>>, vector<8x128xf32>
    tpu.vector_store %arg9[%c0_162, %c0_163], %409 {strides = array<i32>} : memref<8x128xf32, #tpu.memory_space<vmem>>, vector<8x128xf32>,
    return
  }
}

</mosaic_0001>

<llo_original>
// kernel: _lstm_network_forward.1
$region0: #{_lstm_network_forward.1}
  #allocation0 [shape = 'u32[]', space=smem, size = 0x4, offset = 0x4, fixed_abs, tag = 'smem constant byte address 0x4 - core index']
  #allocation1 [shape = 'u32[144,128]{1,0:T(1,128)}', space=vmem, size = 0x12000, scoped, tag = 'internal scratch']
  #allocation2 [shape = 'f32[64,512]{1,0:T(8,128)}', space=vmem, size = 0x20000, scoped, tag = 'scratch operand']
  #allocation3 [shape = 'f32[64,512]{1,0:T(8,128)}', space=vmem, size = 0x20000, scoped, tag = 'scratch operand']
  %s0 = inlined_call_operand.vmem [shape: bf16[64,16], index: 0, kind: input, shape index: {}]
  %s1 = inlined_call_operand.hbm [shape: bf16[16,512], index: 1, kind: input, shape index: {}]
  %s2 = inlined_call_operand.vmem [shape: bf16[32,512], index: 2, kind: input, shape index: {}]
  %s3 = inlined_call_operand.vmem [shape: f32[1,512], index: 3, kind: input, shape index: {}]
  %s4 = inlined_call_operand.hbm [shape: bf16[32,512], index: 4, kind: input, shape index: {}]
  %s5 = inlined_call_operand.hbm [shape: bf16[32,512], index: 5, kind: input, shape index: {}]
  %s6 = inlined_call_operand.vmem [shape: f32[1,512], index: 6, kind: input, shape index: {}]
  %s7 = inlined_call_operand.hbm [shape: f32[32,128], index: 7, kind: input, shape index: {}]
  %s8 = inlined_call_operand.vmem [shape: f32[1,128], index: 8, kind: input, shape index: {}]
  %s9 = inlined_call_operand.vmem [shape: f32[8,128], index: 9, kind: output, shape index: {}]
  %s10 = sld [smem:[#allocation0]]
  $region62: #{_lstm_network_forward.1} parent=0
    _
  %s12 = ssub.s32 1, %s10
  %s13 = scalar_select 0, %s12, %s10
  $region1: #{_lstm_network_forward.1} parent=0
    #allocation4 [shape = 'u8[16384]{0}', space=vmem, size = 0x4000, scoped, tag = 'input window, operand 1, single buffered']
    #allocation5 [shape = 's32[1]{0}', space=sflag, size = 0x4, scoped, tag = 'scoped memory for _lstm_network_forward.1']
    #allocation6 [shape = 'u8[32768]{0}', space=vmem, size = 0x8000, scoped, tag = 'input window, operand 4, single buffered']
    #allocation7 [shape = 's32[1]{0}', space=sflag, size = 0x4, scoped, tag = 'scoped memory for _lstm_network_forward.1']
    #allocation8 [shape = 'u8[32768]{0}', space=vmem, size = 0x8000, scoped, tag = 'input window, operand 5, single buffered']
    #allocation9 [shape = 'u8[16384]{0}', space=vmem, size = 0x4000, scoped, tag = 'input window, operand 7, single buffered']
    #allocation10 [shape = 's32[1]{0}', space=sflag, size = 0x4, scoped, tag = 'scoped memory for _lstm_network_forward.1']
    %14 = vsyncpa [#allocation5], 0
    %15 = vsyncpa [#allocation7], 0
    %16 = vsyncpa [#allocation10], 0
    // Predicated region
    $region2: #{_lstm_network_forward.1} parent=1 // pred_check
      _
    $region3: #{_lstm_network_forward.1} parent=1 // pred_check_branch
      %18 = sbr.rel (0) target = $region5
    $region4: #{_lstm_network_forward.1} parent=1 // pred_region
      _
    $region5: #{_lstm_network_forward.1} parent=1 // pred_fallthru
      _
    // Predicated region
    $region6: #{_lstm_network_forward.1} parent=1 // pred_check
      _
    $region7: #{_lstm_network_forward.1} parent=1 // pred_check_branch
      %20 = sbr.rel (0) target = $region9
    $region8: #{_lstm_network_forward.1} parent=1 // pred_region
      %s22 = ssub.s32 512, 512
      %23 = vsyncadd [#allocation5], %s22
      %s24 = sshll.u32 [#allocation4], 4
      %s25 = int_to_ptr.vmem [resolvable:$true] %s24
      %30 = dma.hbm_to_vmem [thread:$0]  %s1, 512, %s25, [#allocation5], 256, 256, 16
    $region9: #{_lstm_network_forward.1} parent=1 // pred_fallthru
      _
    // Predicated region
    $region10: #{_lstm_network_forward.1} parent=1 // pred_check
      _
    $region11: #{_lstm_network_forward.1} parent=1 // pred_check_branch
      %32 = sbr.rel (0) target = $region13
    $region12: #{_lstm_network_forward.1} parent=1 // pred_region
      _
    $region13: #{_lstm_network_forward.1} parent=1 // pred_fallthru
      _
    // Predicated region
    $region14: #{_lstm_network_forward.1} parent=1 // pred_check
      _
    $region15: #{_lstm_network_forward.1} parent=1 // pred_check_branch
      %34 = sbr.rel (0) target = $region17
    $region16: #{_lstm_network_forward.1} parent=1 // pred_region
      _
    $region17: #{_lstm_network_forward.1} parent=1 // pred_fallthru
      _
    // Predicated region
    $region18: #{_lstm_network_forward.1} parent=1 // pred_check
      _
    $region19: #{_lstm_network_forward.1} parent=1 // pred_check_branch
      %36 = sbr.rel (0) target = $region21
    $region20: #{_lstm_network_forward.1} parent=1 // pred_region
      %s38 = ssub.s32 1024, 1024
      %39 = vsyncadd [#allocation7], %s38
      %s40 = sshll.u32 [#allocation6], 4
      %s41 = int_to_ptr.vmem [resolvable:$true] %s40
      %46 = dma.hbm_to_vmem [thread:$0]  %s4, 1024, %s41, [#allocation7], 256, 256, 16
    $region21: #{_lstm_network_forward.1} parent=1 // pred_fallthru
      _
    // Predicated region
    $region22: #{_lstm_network_forward.1} parent=1 // pred_check
      _
    $region23: #{_lstm_network_forward.1} parent=1 // pred_check_branch
      %48 = sbr.rel (0) target = $region25
    $region24: #{_lstm_network_forward.1} parent=1 // pred_region
      %s50 = ssub.s32 1024, 1024
      %51 = vsyncadd [#allocation7], %s50
      %s52 = sshll.u32 [#allocation8], 4
      %s53 = int_to_ptr.vmem [resolvable:$true] %s52
      %58 = dma.hbm_to_vmem [thread:$0]  %s5, 1024, %s53, [#allocation7], 256, 256, 16
    $region25: #{_lstm_network_forward.1} parent=1 // pred_fallthru
      _
    // Predicated region
    $region26: #{_lstm_network_forward.1} parent=1 // pred_check
      _
    $region27: #{_lstm_network_forward.1} parent=1 // pred_check_branch
      %60 = sbr.rel (0) target = $region29
    $region28: #{_lstm_network_forward.1} parent=1 // pred_region
      _
    $region29: #{_lstm_network_forward.1} parent=1 // pred_fallthru
      _
    // Predicated region
    $region30: #{_lstm_network_forward.1} parent=1 // pred_check
      _
    $region31: #{_lstm_network_forward.1} parent=1 // pred_check_branch
      %62 = sbr.rel (0) target = $region33
    $region32: #{_lstm_network_forward.1} parent=1 // pred_region
      %s64 = ssub.s32 512, 512
      %65 = vsyncadd [#allocation10], %s64
      %s66 = sshll.u32 [#allocation9], 4
      %s67 = int_to_ptr.vmem [resolvable:$true] %s66
      %72 = dma.hbm_to_vmem [thread:$0]  %s7, 512, %s67, [#allocation10], 128, 128, 8
    $region33: #{_lstm_network_forward.1} parent=1 // pred_fallthru
      _
    // Predicated region
    $region34: #{_lstm_network_forward.1} parent=1 // pred_check
      _
    $region35: #{_lstm_network_forward.1} parent=1 // pred_check_branch
      %74 = sbr.rel (0) target = $region37
    $region36: #{_lstm_network_forward.1} parent=1 // pred_region
      _
    $region37: #{_lstm_network_forward.1} parent=1 // pred_fallthru
      _
    // Predicated region
    $region38: #{_lstm_network_forward.1} parent=1 // pred_check
      _
    $region39: #{_lstm_network_forward.1} parent=1 // pred_check_branch
      %76 = sbr.rel (0) target = $region41
    $region40: #{_lstm_network_forward.1} parent=1 // pred_region
      %77 = dma.done [#allocation5], 512
    $region41: #{_lstm_network_forward.1} parent=1 // pred_fallthru
      _
    // Predicated region
    $region42: #{_lstm_network_forward.1} parent=1 // pred_check
      _
    $region43: #{_lstm_network_forward.1} parent=1 // pred_check_branch
      %79 = sbr.rel (0) target = $region45
    $region44: #{_lstm_network_forward.1} parent=1 // pred_region
      %80 = dma.done [#allocation7], 1024
    $region45: #{_lstm_network_forward.1} parent=1 // pred_fallthru
      _
    // Predicated region
    $region46: #{_lstm_network_forward.1} parent=1 // pred_check
      _
    $region47: #{_lstm_network_forward.1} parent=1 // pred_check_branch
      %82 = sbr.rel (0) target = $region49
    $region48: #{_lstm_network_forward.1} parent=1 // pred_region
      %83 = dma.done [#allocation7], 1024
    $region49: #{_lstm_network_forward.1} parent=1 // pred_fallthru
      _
    // Predicated region
    $region50: #{_lstm_network_forward.1} parent=1 // pred_check
      _
    $region51: #{_lstm_network_forward.1} parent=1 // pred_check_branch
      %85 = sbr.rel (0) target = $region53
    $region52: #{_lstm_network_forward.1} parent=1 // pred_region
      %86 = dma.done [#allocation10], 512
    $region53: #{_lstm_network_forward.1} parent=1 // pred_fallthru
      _
    %v88 = vld [vmem:[%s0] sm:$0xf]
    %v89 = vld [vmem:[%s0 + $0x4] sm:$0xf]
    %v90 = vld [vmem:[%s0 + $0x8] sm:$0xf]
    %v91 = vld [vmem:[%s0 + $0xc] sm:$0xf]
    %v92 = vld [vmem:[%s0 + $0x10] sm:$0xf]
    %v93 = vld [vmem:[%s0 + $0x14] sm:$0xf]
    %v94 = vld [vmem:[%s0 + $0x18] sm:$0xf]
    %v95 = vld [vmem:[%s0 + $0x1c] sm:$0xf]
    %v96 = vld [vmem:[#allocation4] sm:$0xff]
    %v97 = vld [vmem:[#allocation4 + $0x8] sm:$0xff]
    %v98 = vld [vmem:[#allocation4 + $0x10] sm:$0xff]
    %v99 = vld [vmem:[#allocation4 + $0x18] sm:$0xff]
    %v100 = vld [vmem:[%s3] sm:$0xf]
    %v102 = vlaneseq
    %v103 = vshrl.u32 %v102, 7
    %v104 = vsub.s32 0, %v103
    %v105 = vrot.slane %v100, %v104
    %v106 = vlaneseq
    %v107 = vshrl.u32 %v106, 7
    %v108 = vsub.s32 1, %v107
    %v109 = vrot.slane %v100, %v108
    %v110 = vlaneseq
    %v111 = vshrl.u32 %v110, 7
    %v112 = vsub.s32 2, %v111
    %v113 = vrot.slane %v100, %v112
    %v114 = vlaneseq
    %v115 = vshrl.u32 %v114, 7
    %v116 = vsub.s32 3, %v115
    %v117 = vrot.slane %v100, %v116
    %v130 = vunpack.c.l.b16 %v88
    %v131 = vunpack.c.l.b16 %v89
    %v132 = vunpack.c.l.b16 %v90
    %v133 = vunpack.c.l.b16 %v91
    %v134 = vunpack.c.l.b16 %v92
    %v135 = vunpack.c.l.b16 %v93
    %v136 = vunpack.c.l.b16 %v94
    %v137 = vunpack.c.l.b16 %v95
    %v138 = vpack.c.b16 %v131, %v130
    %v139 = vpack.c.b16 %v133, %v132
    %v140 = vpack.c.b16 %v135, %v134
    %v141 = vpack.c.b16 %v137, %v136
    %v146 = vunpack.c.l.b16 %v96
    %v147 = vunpack.c.h.b16 %v96
    %v148 = vunpack.c.l.b16 %v97
    %v149 = vunpack.c.h.b16 %v97
    %v150 = vunpack.c.l.b16 %v98
    %v151 = vunpack.c.h.b16 %v98
    %v152 = vunpack.c.l.b16 %v99
    %v153 = vunpack.c.h.b16 %v99
    %v154 = vpack.c.b16 %v150, %v146
    %v155 = vpack.c.b16 %v151, %v147
    %v156 = vpack.c.b16 %v152, %v148
    %v157 = vpack.c.b16 %v153, %v149
    %vm162 = vcmask 130048
    %v164 = vsel %vm162, %v138, 0
    %v167 = vsel %vm162, %v139, 0
    %v170 = vsel %vm162, %v140, 0
    %v173 = vsel %vm162, %v141, 0
    %175 = vmatprep.subr.bf16.mxu0 0
    %176 = vmatpush1.bf16.msra.mxu0 0
    %177 = vmatprep.subr.bf16.mxu0 0
    %178 = vmatpush1.bf16.msra.mxu0 0
    %179 = vmatprep.subr.bf16.mxu0 0
    %180 = vmatpush1.bf16.msra.mxu0 0
    %181 = vmatprep.subr.bf16.mxu0 0
    %182 = vmatpush1.bf16.msra.mxu0 0
    %183 = vmatprep.subr.bf16.mxu0 0
    %184 = vmatpush1.bf16.msra.mxu0 0
    %185 = vmatprep.subr.bf16.mxu0 0
    %186 = vmatpush1.bf16.msra.mxu0 0
    %187 = vmatprep.subr.bf16.mxu0 0
    %188 = vmatpush1.bf16.msra.mxu0 0
    %189 = vmatprep.subr.bf16.mxu0 %v155
    %190 = vmatpush1.bf16.msra.mxu0 %v154
    %191 = vmatprep.subr.bf16.mxu0 0
    %192 = vmatpush2.bf16.msra.mxu0 0
    %193 = vmatprep.subr.bf16.mxu0 0
    %194 = vmatpush2.bf16.msra.mxu0 0
    %195 = vmatprep.subr.bf16.mxu0 0
    %196 = vmatpush2.bf16.msra.mxu0 0
    %197 = vmatprep.subr.bf16.mxu0 0
    %198 = vmatpush2.bf16.msra.mxu0 0
    %199 = vmatprep.subr.bf16.mxu0 0
    %200 = vmatpush2.bf16.msra.mxu0 0
    %201 = vmatprep.subr.bf16.mxu0 0
    %202 = vmatpush2.bf16.msra.mxu0 0
    %203 = vmatprep.subr.bf16.mxu0 0
    %204 = vmatpush2.bf16.msra.mxu0 0
    %205 = vmatprep.subr.bf16.mxu0 0
    %206 = vmatpush2.bf16.msra.mxu0 0
    %207 = vmatprep.mubr.bf16.mxu0 0
    %208 = vmatmul.mubr.bf16.gmra.mxu0 %v164
    %v209 = vpop.f32.mrf.mxu0
    %v210 = vadd.f32 %v105, %v209
    %v211 = vpop.f32.mrf.mxu0
    %v212 = vadd.f32 %v109, %v211
    %v213 = vpop.f32.mrf.mxu0
    %v214 = vadd.f32 %v105, %v213
    %v215 = vpop.f32.mrf.mxu0
    %v216 = vadd.f32 %v109, %v215
    %217 = vmatprep.mubr.bf16.mxu0 0
    %218 = vmatmul.mubr.bf16.gmra.mxu0 %v167
    %v219 = vpop.f32.mrf.mxu0
    %v220 = vadd.f32 %v105, %v219
    %v221 = vpop.f32.mrf.mxu0
    %v222 = vadd.f32 %v109, %v221
    %v223 = vpop.f32.mrf.mxu0
    %v224 = vadd.f32 %v105, %v223
    %v225 = vpop.f32.mrf.mxu0
    %v226 = vadd.f32 %v109, %v225
    %227 = vmatprep.mubr.bf16.mxu0 0
    %228 = vmatmul.mubr.bf16.gmra.mxu0 %v170
    %v229 = vpop.f32.mrf.mxu0
    %v230 = vadd.f32 %v105, %v229
    %v231 = vpop.f32.mrf.mxu0
    %v232 = vadd.f32 %v109, %v231
    %v233 = vpop.f32.mrf.mxu0
    %v234 = vadd.f32 %v105, %v233
    %v235 = vpop.f32.mrf.mxu0
    %v236 = vadd.f32 %v109, %v235
    %237 = vmatprep.mubr.bf16.mxu0 0
    %238 = vmatmul.mubr.bf16.gmra.mxu0 %v173
    %v239 = vpop.f32.mrf.mxu0
    %v240 = vadd.f32 %v105, %v239
    %v241 = vpop.f32.mrf.mxu0
    %v242 = vadd.f32 %v109, %v241
    %v243 = vpop.f32.mrf.mxu0
    %v244 = vadd.f32 %v105, %v243
    %v245 = vpop.f32.mrf.mxu0
    %v246 = vadd.f32 %v109, %v245
    %247 = vdwg.mxu0
    %248 = vmatprep.subr.bf16.mxu0 0
    %249 = vmatpush1.bf16.msra.mxu0 0
    %250 = vmatprep.subr.bf16.mxu0 0
    %251 = vmatpush1.bf16.msra.mxu0 0
    %252 = vmatprep.subr.bf16.mxu0 0
    %253 = vmatpush1.bf16.msra.mxu0 0
    %254 = vmatprep.subr.bf16.mxu0 0
    %255 = vmatpush1.bf16.msra.mxu0 0
    %256 = vmatprep.subr.bf16.mxu0 0
    %257 = vmatpush1.bf16.msra.mxu0 0
    %258 = vmatprep.subr.bf16.mxu0 0
    %259 = vmatpush1.bf16.msra.mxu0 0
    %260 = vmatprep.subr.bf16.mxu0 0
    %261 = vmatpush1.bf16.msra.mxu0 0
    %262 = vmatprep.subr.bf16.mxu0 %v157
    %263 = vmatpush1.bf16.msra.mxu0 %v156
    %264 = vmatprep.subr.bf16.mxu0 0
    %265 = vmatpush2.bf16.msra.mxu0 0
    %266 = vmatprep.subr.bf16.mxu0 0
    %267 = vmatpush2.bf16.msra.mxu0 0
    %268 = vmatprep.subr.bf16.mxu0 0
    %269 = vmatpush2.bf16.msra.mxu0 0
    %270 = vmatprep.subr.bf16.mxu0 0
    %271 = vmatpush2.bf16.msra.mxu0 0
    %272 = vmatprep.subr.bf16.mxu0 0
    %273 = vmatpush2.bf16.msra.mxu0 0
    %274 = vmatprep.subr.bf16.mxu0 0
    %275 = vmatpush2.bf16.msra.mxu0 0
    %276 = vmatprep.subr.bf16.mxu0 0
    %277 = vmatpush2.bf16.msra.mxu0 0
    %278 = vmatprep.subr.bf16.mxu0 0
    %279 = vmatpush2.bf16.msra.mxu0 0
    %280 = vmatprep.mubr.bf16.mxu0 0
    %281 = vmatmul.mubr.bf16.gmra.mxu0 %v164
    %v282 = vpop.f32.mrf.mxu0
    %v283 = vadd.f32 %v113, %v282
    %v284 = vpop.f32.mrf.mxu0
    %v285 = vadd.f32 %v117, %v284
    %v286 = vpop.f32.mrf.mxu0
    %v287 = vadd.f32 %v113, %v286
    %v288 = vpop.f32.mrf.mxu0
    %v289 = vadd.f32 %v117, %v288
    %290 = vmatprep.mubr.bf16.mxu0 0
    %291 = vmatmul.mubr.bf16.gmra.mxu0 %v167
    %v292 = vpop.f32.mrf.mxu0
    %v293 = vadd.f32 %v113, %v292
    %v294 = vpop.f32.mrf.mxu0
    %v295 = vadd.f32 %v117, %v294
    %v296 = vpop.f32.mrf.mxu0
    %v297 = vadd.f32 %v113, %v296
    %v298 = vpop.f32.mrf.mxu0
    %v299 = vadd.f32 %v117, %v298
    %300 = vmatprep.mubr.bf16.mxu0 0
    %301 = vmatmul.mubr.bf16.gmra.mxu0 %v170
    %v302 = vpop.f32.mrf.mxu0
    %v303 = vadd.f32 %v113, %v302
    %v304 = vpop.f32.mrf.mxu0
    %v305 = vadd.f32 %v117, %v304
    %v306 = vpop.f32.mrf.mxu0
    %v307 = vadd.f32 %v113, %v306
    %v308 = vpop.f32.mrf.mxu0
    %v309 = vadd.f32 %v117, %v308
    %310 = vmatprep.mubr.bf16.mxu0 0
    %311 = vmatmul.mubr.bf16.gmra.mxu0 %v173
    %v312 = vpop.f32.mrf.mxu0
    %v313 = vadd.f32 %v113, %v312
    %v314 = vpop.f32.mrf.mxu0
    %v315 = vadd.f32 %v117, %v314
    %v316 = vpop.f32.mrf.mxu0
    %v317 = vadd.f32 %v113, %v316
    %v318 = vpop.f32.mrf.mxu0
    %v319 = vadd.f32 %v117, %v318
    %320 = vdwg.mxu0
    %321 = vst [vmem:[#allocation2] sm:$0xff] %v210
    %322 = vst [vmem:[#allocation2 + $0x8] sm:$0xff] %v212
    %323 = vst [vmem:[#allocation2 + $0x10] sm:$0xff] %v283
    %324 = vst [vmem:[#allocation2 + $0x18] sm:$0xff] %v285
    %325 = vst [vmem:[#allocation2 + $0x20] sm:$0xff] %v214
    %326 = vst [vmem:[#allocation2 + $0x28] sm:$0xff] %v216
    %327 = vst [vmem:[#allocation2 + $0x30] sm:$0xff] %v287
    %328 = vst [vmem:[#allocation2 + $0x38] sm:$0xff] %v289
    %329 = vst [vmem:[#allocation2 + $0x40] sm:$0xff] %v220
    %330 = vst [vmem:[#allocation2 + $0x48] sm:$0xff] %v222
    %331 = vst [vmem:[#allocation2 + $0x50] sm:$0xff] %v293
    %332 = vst [vmem:[#allocation2 + $0x58] sm:$0xff] %v295
    %333 = vst [vmem:[#allocation2 + $0x60] sm:$0xff] %v224
    %334 = vst [vmem:[#allocation2 + $0x68] sm:$0xff] %v226
    %335 = vst [vmem:[#allocation2 + $0x70] sm:$0xff] %v297
    %336 = vst [vmem:[#allocation2 + $0x78] sm:$0xff] %v299
    %337 = vst [vmem:[#allocation2 + $0x80] sm:$0xff] %v230
    %338 = vst [vmem:[#allocation2 + $0x88] sm:$0xff] %v232
    %339 = vst [vmem:[#allocation2 + $0x90] sm:$0xff] %v303
    %340 = vst [vmem:[#allocation2 + $0x98] sm:$0xff] %v305
    %341 = vst [vmem:[#allocation2 + $0xa0] sm:$0xff] %v234
    %342 = vst [vmem:[#allocation2 + $0xa8] sm:$0xff] %v236
    %343 = vst [vmem:[#allocation2 + $0xb0] sm:$0xff] %v307
    %344 = vst [vmem:[#allocation2 + $0xb8] sm:$0xff] %v309
    %345 = vst [vmem:[#allocation2 + $0xc0] sm:$0xff] %v240
    %346 = vst [vmem:[#allocation2 + $0xc8] sm:$0xff] %v242
    %347 = vst [vmem:[#allocation2 + $0xd0] sm:$0xff] %v313
    %348 = vst [vmem:[#allocation2 + $0xd8] sm:$0xff] %v315
    %349 = vst [vmem:[#allocation2 + $0xe0] sm:$0xff] %v244
    %350 = vst [vmem:[#allocation2 + $0xe8] sm:$0xff] %v246
    %351 = vst [vmem:[#allocation2 + $0xf0] sm:$0xff] %v317
    %352 = vst [vmem:[#allocation2 + $0xf8] sm:$0xff] %v319
    %v353 = vld [vmem:[#allocation2] sm:$0xff]
    %v354 = vld [vmem:[#allocation2 + $0x8] sm:$0xff]
    %v355 = vld [vmem:[#allocation2 + $0x10] sm:$0xff]
    %v356 = vld [vmem:[#allocation2 + $0x18] sm:$0xff]
    %v357 = vld [vmem:[%s2] sm:$0xff]
    %v358 = vld [vmem:[%s2 + $0x8] sm:$0xff]
    %v359 = vld [vmem:[%s2 + $0x10] sm:$0xff]
    %v360 = vld [vmem:[%s2 + $0x18] sm:$0xff]
    %v361 = vld [vmem:[%s2 + $0x20] sm:$0xff]
    %v362 = vld [vmem:[%s2 + $0x28] sm:$0xff]
    %v363 = vld [vmem:[%s2 + $0x30] sm:$0xff]
    %v364 = vld [vmem:[%s2 + $0x38] sm:$0xff]
    %v373 = vunpack.c.l.b16 %v357
    %v374 = vunpack.c.h.b16 %v357
    %v375 = vunpack.c.l.b16 %v358
    %v376 = vunpack.c.h.b16 %v358
    %v377 = vunpack.c.l.b16 %v359
    %v378 = vunpack.c.h.b16 %v359
    %v379 = vunpack.c.l.b16 %v360
    %v380 = vunpack.c.h.b16 %v360
    %v381 = vunpack.c.l.b16 %v361
    %v382 = vunpack.c.h.b16 %v361
    %v383 = vunpack.c.l.b16 %v362
    %v384 = vunpack.c.h.b16 %v362
    %v385 = vunpack.c.l.b16 %v363
    %v386 = vunpack.c.h.b16 %v363
    %v387 = vunpack.c.l.b16 %v364
    %v388 = vunpack.c.h.b16 %v364
    %v389 = vpack.c.b16 %v377, %v373
    %v390 = vpack.c.b16 %v378, %v374
    %v391 = vpack.c.b16 %v379, %v375
    %v392 = vpack.c.b16 %v380, %v376
    %v393 = vpack.c.b16 %v385, %v381
    %v394 = vpack.c.b16 %v386, %v382
    %v395 = vpack.c.b16 %v387, %v383
    %v396 = vpack.c.b16 %v388, %v384
    %vm405 = vcmask 261120
    %v407 = vsel %vm405, 0, 0
    %409 = vmatprep.subr.bf16.mxu0 0
    %410 = vmatpush1.bf16.msra.mxu0 0
    %411 = vmatprep.subr.bf16.mxu0 0
    %412 = vmatpush1.bf16.msra.mxu0 0
    %413 = vmatprep.subr.bf16.mxu0 0
    %414 = vmatpush1.bf16.msra.mxu0 0
    %415 = vmatprep.subr.bf16.mxu0 0
    %416 = vmatpush1.bf16.msra.mxu0 0
    %417 = vmatprep.subr.bf16.mxu0 0
    %418 = vmatpush1.bf16.msra.mxu0 0
    %419 = vmatprep.subr.bf16.mxu0 0
    %420 = vmatpush1.bf16.msra.mxu0 0
    %421 = vmatprep.subr.bf16.mxu0 %v394
    %422 = vmatpush1.bf16.msra.mxu0 %v393
    %423 = vmatprep.subr.bf16.mxu0 %v390
    %424 = vmatpush1.bf16.msra.mxu0 %v389
    %425 = vmatprep.subr.bf16.mxu0 0
    %426 = vmatpush2.bf16.msra.mxu0 0
    %427 = vmatprep.subr.bf16.mxu0 0
    %428 = vmatpush2.bf16.msra.mxu0 0
    %429 = vmatprep.subr.bf16.mxu0 0
    %430 = vmatpush2.bf16.msra.mxu0 0
    %431 = vmatprep.subr.bf16.mxu0 0
    %432 = vmatpush2.bf16.msra.mxu0 0
    %433 = vmatprep.subr.bf16.mxu0 0
    %434 = vmatpush2.bf16.msra.mxu0 0
    %435 = vmatprep.subr.bf16.mxu0 0
    %436 = vmatpush2.bf16.msra.mxu0 0
    %437 = vmatprep.subr.bf16.mxu0 0
    %438 = vmatpush2.bf16.msra.mxu0 0
    %439 = vmatprep.subr.bf16.mxu0 0
    %440 = vmatpush2.bf16.msra.mxu0 0
    %441 = vmatprep.mubr.bf16.mxu0 0
    %442 = vmatmul.mubr.bf16.gmra.mxu0 %v407
    %v443 = vpop.f32.mrf.mxu0
    %v444 = vadd.f32 0.0, %v443
    %v445 = vpop.f32.mrf.mxu0
    %v446 = vadd.f32 0.0, %v445
    %v447 = vpop.f32.mrf.mxu0
    %v448 = vpop.f32.mrf.mxu0
    %449 = vdwg.mxu0
    %450 = vmatprep.subr.bf16.mxu0 0
    %451 = vmatpush1.bf16.msra.mxu0 0
    %452 = vmatprep.subr.bf16.mxu0 0
    %453 = vmatpush1.bf16.msra.mxu0 0
    %454 = vmatprep.subr.bf16.mxu0 0
    %455 = vmatpush1.bf16.msra.mxu0 0
    %456 = vmatprep.subr.bf16.mxu0 0
    %457 = vmatpush1.bf16.msra.mxu0 0
    %458 = vmatprep.subr.bf16.mxu0 0
    %459 = vmatpush1.bf16.msra.mxu0 0
    %460 = vmatprep.subr.bf16.mxu0 0
    %461 = vmatpush1.bf16.msra.mxu0 0
    %462 = vmatprep.subr.bf16.mxu0 %v396
    %463 = vmatpush1.bf16.msra.mxu0 %v395
    %464 = vmatprep.subr.bf16.mxu0 %v392
    %465 = vmatpush1.bf16.msra.mxu0 %v391
    %466 = vmatprep.subr.bf16.mxu0 0
    %467 = vmatpush2.bf16.msra.mxu0 0
    %468 = vmatprep.subr.bf16.mxu0 0
    %469 = vmatpush2.bf16.msra.mxu0 0
    %470 = vmatprep.subr.bf16.mxu0 0
    %471 = vmatpush2.bf16.msra.mxu0 0
    %472 = vmatprep.subr.bf16.mxu0 0
    %473 = vmatpush2.bf16.msra.mxu0 0
    %474 = vmatprep.subr.bf16.mxu0 0
    %475 = vmatpush2.bf16.msra.mxu0 0
    %476 = vmatprep.subr.bf16.mxu0 0
    %477 = vmatpush2.bf16.msra.mxu0 0
    %478 = vmatprep.subr.bf16.mxu0 0
    %479 = vmatpush2.bf16.msra.mxu0 0
    %480 = vmatprep.subr.bf16.mxu0 0
    %481 = vmatpush2.bf16.msra.mxu0 0
    %482 = vmatprep.mubr.bf16.mxu0 0
    %483 = vmatmul.mubr.bf16.gmra.mxu0 %v407
    %v484 = vpop.f32.mrf.mxu0
    %v485 = vadd.f32 0.0, %v484
    %v486 = vpop.f32.mrf.mxu0
    %v487 = vadd.f32 0.0, %v486
    %v488 = vpop.f32.mrf.mxu0
    %v489 = vpop.f32.mrf.mxu0
    %490 = vdwg.mxu0
    %v491 = vadd.f32 %v353, %v444
    %v492 = vadd.f32 %v354, %v446
    %v493 = vadd.f32 %v355, %v485
    %v494 = vadd.f32 %v356, %v487
    %v495 = vxor.u32 %v491, 2147483648
    %v496 = vxor.u32 %v492, 2147483648
    %v497 = vxor.u32 %v493, 2147483648
    %v498 = vmul.f32 %v495, 1.442695
    %v499 = vpow.pop %v498
    %v500 = vmul.f32 %v496, 1.442695
    %v501 = vpow.pop %v500
    %v502 = vmul.f32 %v497, 1.442695
    %v503 = vpow.pop %v502
    %v504 = vadd.f32 %v499, 1.0
    %v505 = vadd.f32 %v501, 1.0
    %v506 = vadd.f32 %v503, 1.0
    %v507 = vrcp.pop %v504
    %v508 = vmul.f32 1.0, %v507
    %v509 = vrcp.pop %v505
    %v510 = vmul.f32 1.0, %v509
    %v511 = vrcp.pop %v506
    %v512 = vmul.f32 1.0, %v511
    %v513 = vtanh.pop %v494
    %v514 = vmul.f32 %v510, 0.0
    %v515 = vmul.f32 %v508, %v513
    %v516 = vadd.f32 %v514, %v515
    %v517 = vtanh.pop %v516
    %v518 = vmul.f32 %v512, %v517
    %v519 = vpack.c.bf16 %v518, %v518
    %v520 = vld [vmem:[#allocation6] sm:$0xff]
    %v521 = vld [vmem:[#allocation6 + $0x8] sm:$0xff]
    %v522 = vld [vmem:[#allocation6 + $0x10] sm:$0xff]
    %v523 = vld [vmem:[#allocation6 + $0x18] sm:$0xff]
    %v524 = vld [vmem:[#allocation6 + $0x20] sm:$0xff]
    %v525 = vld [vmem:[#allocation6 + $0x28] sm:$0xff]
    %v526 = vld [vmem:[#allocation6 + $0x30] sm:$0xff]
    %v527 = vld [vmem:[#allocation6 + $0x38] sm:$0xff]
    %v528 = vld [vmem:[%s6] sm:$0xf]
    %v530 = vlaneseq
    %v531 = vshrl.u32 %v530, 7
    %v532 = vsub.s32 0, %v531
    %v533 = vrot.slane %v528, %v532
    %v534 = vlaneseq
    %v535 = vshrl.u32 %v534, 7
    %v536 = vsub.s32 1, %v535
    %v537 = vrot.slane %v528, %v536
    %v538 = vlaneseq
    %v539 = vshrl.u32 %v538, 7
    %v540 = vsub.s32 2, %v539
    %v541 = vrot.slane %v528, %v540
    %v542 = vlaneseq
    %v543 = vshrl.u32 %v542, 7
    %v544 = vsub.s32 3, %v543
    %v545 = vrot.slane %v528, %v544
    %v558 = vunpack.c.l.b16 %v520
    %v559 = vunpack.c.h.b16 %v520
    %v560 = vunpack.c.l.b16 %v521
    %v561 = vunpack.c.h.b16 %v521
    %v562 = vunpack.c.l.b16 %v522
    %v563 = vunpack.c.h.b16 %v522
    %v564 = vunpack.c.l.b16 %v523
    %v565 = vunpack.c.h.b16 %v523
    %v566 = vunpack.c.l.b16 %v524
    %v567 = vunpack.c.h.b16 %v524
    %v568 = vunpack.c.l.b16 %v525
    %v569 = vunpack.c.h.b16 %v525
    %v570 = vunpack.c.l.b16 %v526
    %v571 = vunpack.c.h.b16 %v526
    %v572 = vunpack.c.l.b16 %v527
    %v573 = vunpack.c.h.b16 %v527
    %v574 = vpack.c.b16 %v562, %v558
    %v575 = vpack.c.b16 %v563, %v559
    %v576 = vpack.c.b16 %v564, %v560
    %v577 = vpack.c.b16 %v565, %v561
    %v578 = vpack.c.b16 %v570, %v566
    %v579 = vpack.c.b16 %v571, %v567
    %v580 = vpack.c.b16 %v572, %v568
    %v581 = vpack.c.b16 %v573, %v569
    %v591 = vsel %vm405, %v519, 0
    %593 = vmatprep.subr.bf16.mxu0 0
    %594 = vmatpush1.bf16.msra.mxu0 0
    %595 = vmatprep.subr.bf16.mxu0 0
    %596 = vmatpush1.bf16.msra.mxu0 0
    %597 = vmatprep.subr.bf16.mxu0 0
    %598 = vmatpush1.bf16.msra.mxu0 0
    %599 = vmatprep.subr.bf16.mxu0 0
    %600 = vmatpush1.bf16.msra.mxu0 0
    %601 = vmatprep.subr.bf16.mxu0 0
    %602 = vmatpush1.bf16.msra.mxu0 0
    %603 = vmatprep.subr.bf16.mxu0 0
    %604 = vmatpush1.bf16.msra.mxu0 0
    %605 = vmatprep.subr.bf16.mxu0 %v579
    %606 = vmatpush1.bf16.msra.mxu0 %v578
    %607 = vmatprep.subr.bf16.mxu0 %v575
    %608 = vmatpush1.bf16.msra.mxu0 %v574
    %609 = vmatprep.subr.bf16.mxu0 0
    %610 = vmatpush2.bf16.msra.mxu0 0
    %611 = vmatprep.subr.bf16.mxu0 0
    %612 = vmatpush2.bf16.msra.mxu0 0
    %613 = vmatprep.subr.bf16.mxu0 0
    %614 = vmatpush2.bf16.msra.mxu0 0
    %615 = vmatprep.subr.bf16.mxu0 0
    %616 = vmatpush2.bf16.msra.mxu0 0
    %617 = vmatprep.subr.bf16.mxu0 0
    %618 = vmatpush2.bf16.msra.mxu0 0
    %619 = vmatprep.subr.bf16.mxu0 0
    %620 = vmatpush2.bf16.msra.mxu0 0
    %621 = vmatprep.subr.bf16.mxu0 0
    %622 = vmatpush2.bf16.msra.mxu0 0
    %623 = vmatprep.subr.bf16.mxu0 0
    %624 = vmatpush2.bf16.msra.mxu0 0
    %625 = vmatprep.mubr.bf16.mxu0 0
    %626 = vmatmul.mubr.bf16.gmra.mxu0 %v591
    %v627 = vpop.f32.mrf.mxu0
    %v628 = vadd.f32 %v533, %v627
    %v629 = vpop.f32.mrf.mxu0
    %v630 = vadd.f32 %v537, %v629
    %v631 = vpop.f32.mrf.mxu0
    %v632 = vpop.f32.mrf.mxu0
    %633 = vdwg.mxu0
    %634 = vmatprep.subr.bf16.mxu0 0
    %635 = vmatpush1.bf16.msra.mxu0 0
    %636 = vmatprep.subr.bf16.mxu0 0
    %637 = vmatpush1.bf16.msra.mxu0 0
    %638 = vmatprep.subr.bf16.mxu0 0
    %639 = vmatpush1.bf16.msra.mxu0 0
    %640 = vmatprep.subr.bf16.mxu0 0
    %641 = vmatpush1.bf16.msra.mxu0 0
    %642 = vmatprep.subr.bf16.mxu0 0
    %643 = vmatpush1.bf16.msra.mxu0 0
    %644 = vmatprep.subr.bf16.mxu0 0
    %645 = vmatpush1.bf16.msra.mxu0 0
    %646 = vmatprep.subr.bf16.mxu0 %v581
    %647 = vmatpush1.bf16.msra.mxu0 %v580
    %648 = vmatprep.subr.bf16.mxu0 %v577
    %649 = vmatpush1.bf16.msra.mxu0 %v576
    %650 = vmatprep.subr.bf16.mxu0 0
    %651 = vmatpush2.bf16.msra.mxu0 0
    %652 = vmatprep.subr.bf16.mxu0 0
    %653 = vmatpush2.bf16.msra.mxu0 0
    %654 = vmatprep.subr.bf16.mxu0 0
    %655 = vmatpush2.bf16.msra.mxu0 0
    %656 = vmatprep.subr.bf16.mxu0 0
    %657 = vmatpush2.bf16.msra.mxu0 0
    %658 = vmatprep.subr.bf16.mxu0 0
    %659 = vmatpush2.bf16.msra.mxu0 0
    %660 = vmatprep.subr.bf16.mxu0 0
    %661 = vmatpush2.bf16.msra.mxu0 0
    %662 = vmatprep.subr.bf16.mxu0 0
    %663 = vmatpush2.bf16.msra.mxu0 0
    %664 = vmatprep.subr.bf16.mxu0 0
    %665 = vmatpush2.bf16.msra.mxu0 0
    %666 = vmatprep.mubr.bf16.mxu0 0
    %667 = vmatmul.mubr.bf16.gmra.mxu0 %v591
    %v668 = vpop.f32.mrf.mxu0
    %v669 = vadd.f32 %v541, %v668
    %v670 = vpop.f32.mrf.mxu0
    %v671 = vadd.f32 %v545, %v670
    %v672 = vpop.f32.mrf.mxu0
    %v673 = vpop.f32.mrf.mxu0
    %674 = vdwg.mxu0
    %675 = vst [vmem:[#allocation3] sm:$0xff] %v628
    %676 = vst [vmem:[#allocation3 + $0x8] sm:$0xff] %v630
    %677 = vst [vmem:[#allocation3 + $0x10] sm:$0xff] %v669
    %678 = vst [vmem:[#allocation3 + $0x18] sm:$0xff] %v671
    %v679 = vld [vmem:[#allocation2 + $0x20] sm:$0xff]
    %v680 = vld [vmem:[#allocation2 + $0x28] sm:$0xff]
    %v681 = vld [vmem:[#allocation2 + $0x30] sm:$0xff]
    %v682 = vld [vmem:[#allocation2 + $0x38] sm:$0xff]
    %v683 = vld [vmem:[%s2] sm:$0xff]
    %v684 = vld [vmem:[%s2 + $0x8] sm:$0xff]
    %v685 = vld [vmem:[%s2 + $0x10] sm:$0xff]
    %v686 = vld [vmem:[%s2 + $0x18] sm:$0xff]
    %v687 = vld [vmem:[%s2 + $0x20] sm:$0xff]
    %v688 = vld [vmem:[%s2 + $0x28] sm:$0xff]
    %v689 = vld [vmem:[%s2 + $0x30] sm:$0xff]
    %v690 = vld [vmem:[%s2 + $0x38] sm:$0xff]
    %v699 = vunpack.c.l.b16 %v683
    %v700 = vunpack.c.h.b16 %v683
    %v701 = vunpack.c.l.b16 %v684
    %v702 = vunpack.c.h.b16 %v684
    %v703 = vunpack.c.l.b16 %v685
    %v704 = vunpack.c.h.b16 %v685
    %v705 = vunpack.c.l.b16 %v686
    %v706 = vunpack.c.h.b16 %v686
    %v707 = vunpack.c.l.b16 %v687
    %v708 = vunpack.c.h.b16 %v687
    %v709 = vunpack.c.l.b16 %v688
    %v710 = vunpack.c.h.b16 %v688
    %v711 = vunpack.c.l.b16 %v689
    %v712 = vunpack.c.h.b16 %v689
    %v713 = vunpack.c.l.b16 %v690
    %v714 = vunpack.c.h.b16 %v690
    %v715 = vpack.c.b16 %v703, %v699
    %v716 = vpack.c.b16 %v704, %v700
    %v717 = vpack.c.b16 %v705, %v701
    %v718 = vpack.c.b16 %v706, %v702
    %v719 = vpack.c.b16 %v711, %v707
    %v720 = vpack.c.b16 %v712, %v708
    %v721 = vpack.c.b16 %v713, %v709
    %v722 = vpack.c.b16 %v714, %v710
    %731 = vmatprep.subr.bf16.mxu0 0
    %732 = vmatpush1.bf16.msra.mxu0 0
    %733 = vmatprep.subr.bf16.mxu0 0
    %734 = vmatpush1.bf16.msra.mxu0 0
    %735 = vmatprep.subr.bf16.mxu0 0
    %736 = vmatpush1.bf16.msra.mxu0 0
    %737 = vmatprep.subr.bf16.mxu0 0
    %738 = vmatpush1.bf16.msra.mxu0 0
    %739 = vmatprep.subr.bf16.mxu0 0
    %740 = vmatpush1.bf16.msra.mxu0 0
    %741 = vmatprep.subr.bf16.mxu0 0
    %742 = vmatpush1.bf16.msra.mxu0 0
    %743 = vmatprep.subr.bf16.mxu0 %v720
    %744 = vmatpush1.bf16.msra.mxu0 %v719
    %745 = vmatprep.subr.bf16.mxu0 %v716
    %746 = vmatpush1.bf16.msra.mxu0 %v715
    %747 = vmatprep.subr.bf16.mxu0 0
    %748 = vmatpush2.bf16.msra.mxu0 0
    %749 = vmatprep.subr.bf16.mxu0 0
    %750 = vmatpush2.bf16.msra.mxu0 0
    %751 = vmatprep.subr.bf16.mxu0 0
    %752 = vmatpush2.bf16.msra.mxu0 0
    %753 = vmatprep.subr.bf16.mxu0 0
    %754 = vmatpush2.bf16.msra.mxu0 0
    %755 = vmatprep.subr.bf16.mxu0 0
    %756 = vmatpush2.bf16.msra.mxu0 0
    %757 = vmatprep.subr.bf16.mxu0 0
    %758 = vmatpush2.bf16.msra.mxu0 0
    %759 = vmatprep.subr.bf16.mxu0 0
    %760 = vmatpush2.bf16.msra.mxu0 0
    %761 = vmatprep.subr.bf16.mxu0 0
    %762 = vmatpush2.bf16.msra.mxu0 0
    %763 = vmatprep.mubr.bf16.mxu0 0
    %764 = vmatmul.mubr.bf16.gmra.mxu0 %v591
    %v765 = vpop.f32.mrf.mxu0
    %v766 = vadd.f32 0.0, %v765
    %v767 = vpop.f32.mrf.mxu0
    %v768 = vadd.f32 0.0, %v767
    %v769 = vpop.f32.mrf.mxu0
    %v770 = vpop.f32.mrf.mxu0
    %771 = vdwg.mxu0
    %772 = vmatprep.subr.bf16.mxu0 0
    %773 = vmatpush1.bf16.msra.mxu0 0
    %774 = vmatprep.subr.bf16.mxu0 0
    %775 = vmatpush1.bf16.msra.mxu0 0
    %776 = vmatprep.subr.bf16.mxu0 0
    %777 = vmatpush1.bf16.msra.mxu0 0
    %778 = vmatprep.subr.bf16.mxu0 0
    %779 = vmatpush1.bf16.msra.mxu0 0
    %780 = vmatprep.subr.bf16.mxu0 0
    %781 = vmatpush1.bf16.msra.mxu0 0
    %782 = vmatprep.subr.bf16.mxu0 0
    %783 = vmatpush1.bf16.msra.mxu0 0
    %784 = vmatprep.subr.bf16.mxu0 %v722
    %785 = vmatpush1.bf16.msra.mxu0 %v721
    %786 = vmatprep.subr.bf16.mxu0 %v718
    %787 = vmatpush1.bf16.msra.mxu0 %v717
    %788 = vmatprep.subr.bf16.mxu0 0
    %789 = vmatpush2.bf16.msra.mxu0 0
    %790 = vmatprep.subr.bf16.mxu0 0
    %791 = vmatpush2.bf16.msra.mxu0 0
    %792 = vmatprep.subr.bf16.mxu0 0
    %793 = vmatpush2.bf16.msra.mxu0 0
    %794 = vmatprep.subr.bf16.mxu0 0
    %795 = vmatpush2.bf16.msra.mxu0 0
    %796 = vmatprep.subr.bf16.mxu0 0
    %797 = vmatpush2.bf16.msra.mxu0 0
    %798 = vmatprep.subr.bf16.mxu0 0
    %799 = vmatpush2.bf16.msra.mxu0 0
    %800 = vmatprep.subr.bf16.mxu0 0
    %801 = vmatpush2.bf16.msra.mxu0 0
    %802 = vmatprep.subr.bf16.mxu0 0
    %803 = vmatpush2.bf16.msra.mxu0 0
    %804 = vmatprep.mubr.bf16.mxu0 0
    %805 = vmatmul.mubr.bf16.gmra.mxu0 %v591
    %v806 = vpop.f32.mrf.mxu0
    %v807 = vadd.f32 0.0, %v806
    %v808 = vpop.f32.mrf.mxu0
    %v809 = vadd.f32 0.0, %v808
    %v810 = vpop.f32.mrf.mxu0
    %v811 = vpop.f32.mrf.mxu0
    %812 = vdwg.mxu0
    %v813 = vadd.f32 %v679, %v766
    %v814 = vadd.f32 %v680, %v768
    %v815 = vadd.f32 %v681, %v807
    %v816 = vadd.f32 %v682, %v809
    %v817 = vxor.u32 %v813, 2147483648
    %v818 = vxor.u32 %v814, 2147483648
    %v819 = vxor.u32 %v815, 2147483648
    %v820 = vmul.f32 %v817, 1.442695
    %v821 = vpow.pop %v820
    %v822 = vmul.f32 %v818, 1.442695
    %v823 = vpow.pop %v822
    %v824 = vmul.f32 %v819, 1.442695
    %v825 = vpow.pop %v824
    %v826 = vadd.f32 %v821, 1.0
    %v827 = vadd.f32 %v823, 1.0
    %v828 = vadd.f32 %v825, 1.0
    %v829 = vrcp.pop %v826
    %v830 = vmul.f32 1.0, %v829
    %v831 = vrcp.pop %v827
    %v832 = vmul.f32 1.0, %v831
    %v833 = vrcp.pop %v828
    %v834 = vmul.f32 1.0, %v833
    %v835 = vtanh.pop %v816
    %v836 = vmul.f32 %v832, %v516
    %v837 = vmul.f32 %v830, %v835
    %v838 = vadd.f32 %v836, %v837
    %v839 = vtanh.pop %v838
    %v840 = vmul.f32 %v834, %v839
    %v841 = vpack.c.bf16 %v840, %v840
    %v842 = vld [vmem:[#allocation6] sm:$0xff]
    %v843 = vld [vmem:[#allocation6 + $0x8] sm:$0xff]
    %v844 = vld [vmem:[#allocation6 + $0x10] sm:$0xff]
    %v845 = vld [vmem:[#allocation6 + $0x18] sm:$0xff]
    %v846 = vld [vmem:[#allocation6 + $0x20] sm:$0xff]
    %v847 = vld [vmem:[#allocation6 + $0x28] sm:$0xff]
    %v848 = vld [vmem:[#allocation6 + $0x30] sm:$0xff]
    %v849 = vld [vmem:[#allocation6 + $0x38] sm:$0xff]
    %v850 = vld [vmem:[%s6] sm:$0xf]
    %v852 = vlaneseq
    %v853 = vshrl.u32 %v852, 7
    %v854 = vsub.s32 0, %v853
    %v855 = vrot.slane %v850, %v854
    %v856 = vlaneseq
    %v857 = vshrl.u32 %v856, 7
    %v858 = vsub.s32 1, %v857
    %v859 = vrot.slane %v850, %v858
    %v860 = vlaneseq
    %v861 = vshrl.u32 %v860, 7
    %v862 = vsub.s32 2, %v861
    %v863 = vrot.slane %v850, %v862
    %v864 = vlaneseq
    %v865 = vshrl.u32 %v864, 7
    %v866 = vsub.s32 3, %v865
    %v867 = vrot.slane %v850, %v866
    %v880 = vunpack.c.l.b16 %v842
    %v881 = vunpack.c.h.b16 %v842
    %v882 = vunpack.c.l.b16 %v843
    %v883 = vunpack.c.h.b16 %v843
    %v884 = vunpack.c.l.b16 %v844
    %v885 = vunpack.c.h.b16 %v844
    %v886 = vunpack.c.l.b16 %v845
    %v887 = vunpack.c.h.b16 %v845
    %v888 = vunpack.c.l.b16 %v846
    %v889 = vunpack.c.h.b16 %v846
    %v890 = vunpack.c.l.b16 %v847
    %v891 = vunpack.c.h.b16 %v847
    %v892 = vunpack.c.l.b16 %v848
    %v893 = vunpack.c.h.b16 %v848
    %v894 = vunpack.c.l.b16 %v849
    %v895 = vunpack.c.h.b16 %v849
    %v896 = vpack.c.b16 %v884, %v880
    %v897 = vpack.c.b16 %v885, %v881
    %v898 = vpack.c.b16 %v886, %v882
    %v899 = vpack.c.b16 %v887, %v883
    %v900 = vpack.c.b16 %v892, %v888
    %v901 = vpack.c.b16 %v893, %v889
    %v902 = vpack.c.b16 %v894, %v890
    %v903 = vpack.c.b16 %v895, %v891
    %v913 = vsel %vm405, %v841, 0
    %915 = vmatprep.subr.bf16.mxu0 0
    %916 = vmatpush1.bf16.msra.mxu0 0
    %917 = vmatprep.subr.bf16.mxu0 0
    %918 = vmatpush1.bf16.msra.mxu0 0
    %919 = vmatprep.subr.bf16.mxu0 0
    %920 = vmatpush1.bf16.msra.mxu0 0
    %921 = vmatprep.subr.bf16.mxu0 0
    %922 = vmatpush1.bf16.msra.mxu0 0
    %923 = vmatprep.subr.bf16.mxu0 0
    %924 = vmatpush1.bf16.msra.mxu0 0
    %925 = vmatprep.subr.bf16.mxu0 0
    %926 = vmatpush1.bf16.msra.mxu0 0
    %927 = vmatprep.subr.bf16.mxu0 %v901
    %928 = vmatpush1.bf16.msra.mxu0 %v900
    %929 = vmatprep.subr.bf16.mxu0 %v897
    %930 = vmatpush1.bf16.msra.mxu0 %v896
    %931 = vmatprep.subr.bf16.mxu0 0
    %932 = vmatpush2.bf16.msra.mxu0 0
    %933 = vmatprep.subr.bf16.mxu0 0
    %934 = vmatpush2.bf16.msra.mxu0 0
    %935 = vmatprep.subr.bf16.mxu0 0
    %936 = vmatpush2.bf16.msra.mxu0 0
    %937 = vmatprep.subr.bf16.mxu0 0
    %938 = vmatpush2.bf16.msra.mxu0 0
    %939 = vmatprep.subr.bf16.mxu0 0
    %940 = vmatpush2.bf16.msra.mxu0 0
    %941 = vmatprep.subr.bf16.mxu0 0
    %942 = vmatpush2.bf16.msra.mxu0 0
    %943 = vmatprep.subr.bf16.mxu0 0
    %944 = vmatpush2.bf16.msra.mxu0 0
    %945 = vmatprep.subr.bf16.mxu0 0
    %946 = vmatpush2.bf16.msra.mxu0 0
    %947 = vmatprep.mubr.bf16.mxu0 0
    %948 = vmatmul.mubr.bf16.gmra.mxu0 %v913
    %v949 = vpop.f32.mrf.mxu0
    %v950 = vadd.f32 %v855, %v949
    %v951 = vpop.f32.mrf.mxu0
    %v952 = vadd.f32 %v859, %v951
    %v953 = vpop.f32.mrf.mxu0
    %v954 = vpop.f32.mrf.mxu0
    %955 = vdwg.mxu0
    %956 = vmatprep.subr.bf16.mxu0 0
    %957 = vmatpush1.bf16.msra.mxu0 0
    %958 = vmatprep.subr.bf16.mxu0 0
    %959 = vmatpush1.bf16.msra.mxu0 0
    %960 = vmatprep.subr.bf16.mxu0 0
    %961 = vmatpush1.bf16.msra.mxu0 0
    %962 = vmatprep.subr.bf16.mxu0 0
    %963 = vmatpush1.bf16.msra.mxu0 0
    %964 = vmatprep.subr.bf16.mxu0 0
    %965 = vmatpush1.bf16.msra.mxu0 0
    %966 = vmatprep.subr.bf16.mxu0 0
    %967 = vmatpush1.bf16.msra.mxu0 0
    %968 = vmatprep.subr.bf16.mxu0 %v903
    %969 = vmatpush1.bf16.msra.mxu0 %v902
    %970 = vmatprep.subr.bf16.mxu0 %v899
    %971 = vmatpush1.bf16.msra.mxu0 %v898
    %972 = vmatprep.subr.bf16.mxu0 0
    %973 = vmatpush2.bf16.msra.mxu0 0
    %974 = vmatprep.subr.bf16.mxu0 0
    %975 = vmatpush2.bf16.msra.mxu0 0
    %976 = vmatprep.subr.bf16.mxu0 0
    %977 = vmatpush2.bf16.msra.mxu0 0
    %978 = vmatprep.subr.bf16.mxu0 0
    %979 = vmatpush2.bf16.msra.mxu0 0
    %980 = vmatprep.subr.bf16.mxu0 0
    %981 = vmatpush2.bf16.msra.mxu0 0
    %982 = vmatprep.subr.bf16.mxu0 0
    %983 = vmatpush2.bf16.msra.mxu0 0
    %984 = vmatprep.subr.bf16.mxu0 0
    %985 = vmatpush2.bf16.msra.mxu0 0
    %986 = vmatprep.subr.bf16.mxu0 0
    %987 = vmatpush2.bf16.msra.mxu0 0
    %988 = vmatprep.mubr.bf16.mxu0 0
    %989 = vmatmul.mubr.bf16.gmra.mxu0 %v913
    %v990 = vpop.f32.mrf.mxu0
    %v991 = vadd.f32 %v863, %v990
    %v992 = vpop.f32.mrf.mxu0
    %v993 = vadd.f32 %v867, %v992
    %v994 = vpop.f32.mrf.mxu0
    %v995 = vpop.f32.mrf.mxu0
    %996 = vdwg.mxu0
    %997 = vst [vmem:[#allocation3 + $0x20] sm:$0xff] %v950
    %998 = vst [vmem:[#allocation3 + $0x28] sm:$0xff] %v952
    %999 = vst [vmem:[#allocation3 + $0x30] sm:$0xff] %v991
    %1000 = vst [vmem:[#allocation3 + $0x38] sm:$0xff] %v993
    %v1001 = vld [vmem:[#allocation2 + $0x40] sm:$0xff]
    %v1002 = vld [vmem:[#allocation2 + $0x48] sm:$0xff]
    %v1003 = vld [vmem:[#allocation2 + $0x50] sm:$0xff]
    %v1004 = vld [vmem:[#allocation2 + $0x58] sm:$0xff]
    %v1005 = vld [vmem:[%s2] sm:$0xff]
    %v1006 = vld [vmem:[%s2 + $0x8] sm:$0xff]
    %v1007 = vld [vmem:[%s2 + $0x10] sm:$0xff]
    %v1008 = vld [vmem:[%s2 + $0x18] sm:$0xff]
    %v1009 = vld [vmem:[%s2 + $0x20] sm:$0xff]
    %v1010 = vld [vmem:[%s2 + $0x28] sm:$0xff]
    %v1011 = vld [vmem:[%s2 + $0x30] sm:$0xff]
    %v1012 = vld [vmem:[%s2 + $0x38] sm:$0xff]
    %v1021 = vunpack.c.l.b16 %v1005
    %v1022 = vunpack.c.h.b16 %v1005
    %v1023 = vunpack.c.l.b16 %v1006
    %v1024 = vunpack.c.h.b16 %v1006
    %v1025 = vunpack.c.l.b16 %v1007
    %v1026 = vunpack.c.h.b16 %v1007
    %v1027 = vunpack.c.l.b16 %v1008
    %v1028 = vunpack.c.h.b16 %v1008
    %v1029 = vunpack.c.l.b16 %v1009
    %v1030 = vunpack.c.h.b16 %v1009
    %v1031 = vunpack.c.l.b16 %v1010
    %v1032 = vunpack.c.h.b16 %v1010
    %v1033 = vunpack.c.l.b16 %v1011
    %v1034 = vunpack.c.h.b16 %v1011
    %v1035 = vunpack.c.l.b16 %v1012
    %v1036 = vunpack.c.h.b16 %v1012
    %v1037 = vpack.c.b16 %v1025, %v1021
    %v1038 = vpack.c.b16 %v1026, %v1022
    %v1039 = vpack.c.b16 %v1027, %v1023
    %v1040 = vpack.c.b16 %v1028, %v1024
    %v1041 = vpack.c.b16 %v1033, %v1029
    %v1042 = vpack.c.b16 %v1034, %v1030
    %v1043 = vpack.c.b16 %v1035, %v1031
    %v1044 = vpack.c.b16 %v1036, %v1032
    %1053 = vmatprep.subr.bf16.mxu0 0
    %1054 = vmatpush1.bf16.msra.mxu0 0
    %1055 = vmatprep.subr.bf16.mxu0 0
    %1056 = vmatpush1.bf16.msra.mxu0 0
    %1057 = vmatprep.subr.bf16.mxu0 0
    %1058 = vmatpush1.bf16.msra.mxu0 0
    %1059 = vmatprep.subr.bf16.mxu0 0
    %1060 = vmatpush1.bf16.msra.mxu0 0
    %1061 = vmatprep.subr.bf16.mxu0 0
    %1062 = vmatpush1.bf16.msra.mxu0 0
    %1063 = vmatprep.subr.bf16.mxu0 0
    %1064 = vmatpush1.bf16.msra.mxu0 0
    %1065 = vmatprep.subr.bf16.mxu0 %v1042
    %1066 = vmatpush1.bf16.msra.mxu0 %v1041
    %1067 = vmatprep.subr.bf16.mxu0 %v1038
    %1068 = vmatpush1.bf16.msra.mxu0 %v1037
    %1069 = vmatprep.subr.bf16.mxu0 0
    %1070 = vmatpush2.bf16.msra.mxu0 0
    %1071 = vmatprep.subr.bf16.mxu0 0
    %1072 = vmatpush2.bf16.msra.mxu0 0
    %1073 = vmatprep.subr.bf16.mxu0 0
    %1074 = vmatpush2.bf16.msra.mxu0 0
    %1075 = vmatprep.subr.bf16.mxu0 0
    %1076 = vmatpush2.bf16.msra.mxu0 0
    %1077 = vmatprep.subr.bf16.mxu0 0
    %1078 = vmatpush2.bf16.msra.mxu0 0
    %1079 = vmatprep.subr.bf16.mxu0 0
    %1080 = vmatpush2.bf16.msra.mxu0 0
    %1081 = vmatprep.subr.bf16.mxu0 0
    %1082 = vmatpush2.bf16.msra.mxu0 0
    %1083 = vmatprep.subr.bf16.mxu0 0
    %1084 = vmatpush2.bf16.msra.mxu0 0
    %1085 = vmatprep.mubr.bf16.mxu0 0
    %1086 = vmatmul.mubr.bf16.gmra.mxu0 %v913
    %v1087 = vpop.f32.mrf.mxu0
    %v1088 = vadd.f32 0.0, %v1087
    %v1089 = vpop.f32.mrf.mxu0
    %v1090 = vadd.f32 0.0, %v1089
    %v1091 = vpop.f32.mrf.mxu0
    %v1092 = vpop.f32.mrf.mxu0
    %1093 = vdwg.mxu0
    %1094 = vmatprep.subr.bf16.mxu0 0
    %1095 = vmatpush1.bf16.msra.mxu0 0
    %1096 = vmatprep.subr.bf16.mxu0 0
    %1097 = vmatpush1.bf16.msra.mxu0 0
    %1098 = vmatprep.subr.bf16.mxu0 0
    %1099 = vmatpush1.bf16.msra.mxu0 0
    %1100 = vmatprep.subr.bf16.mxu0 0
    %1101 = vmatpush1.bf16.msra.mxu0 0
    %1102 = vmatprep.subr.bf16.mxu0 0
    %1103 = vmatpush1.bf16.msra.mxu0 0
    %1104 = vmatprep.subr.bf16.mxu0 0
    %1105 = vmatpush1.bf16.msra.mxu0 0
    %1106 = vmatprep.subr.bf16.mxu0 %v1044
    %1107 = vmatpush1.bf16.msra.mxu0 %v1043
    %1108 = vmatprep.subr.bf16.mxu0 %v1040
    %1109 = vmatpush1.bf16.msra.mxu0 %v1039
    %1110 = vmatprep.subr.bf16.mxu0 0
    %1111 = vmatpush2.bf16.msra.mxu0 0
    %1112 = vmatprep.subr.bf16.mxu0 0
    %1113 = vmatpush2.bf16.msra.mxu0 0
    %1114 = vmatprep.subr.bf16.mxu0 0
    %1115 = vmatpush2.bf16.msra.mxu0 0
    %1116 = vmatprep.subr.bf16.mxu0 0
    %1117 = vmatpush2.bf16.msra.mxu0 0
    %1118 = vmatprep.subr.bf16.mxu0 0
    %1119 = vmatpush2.bf16.msra.mxu0 0
    %1120 = vmatprep.subr.bf16.mxu0 0
    %1121 = vmatpush2.bf16.msra.mxu0 0
    %1122 = vmatprep.subr.bf16.mxu0 0
    %1123 = vmatpush2.bf16.msra.mxu0 0
    %1124 = vmatprep.subr.bf16.mxu0 0
    %1125 = vmatpush2.bf16.msra.mxu0 0
    %1126 = vmatprep.mubr.bf16.mxu0 0
    %1127 = vmatmul.mubr.bf16.gmra.mxu0 %v913
    %v1128 = vpop.f32.mrf.mxu0
    %v1129 = vadd.f32 0.0, %v1128
    %v1130 = vpop.f32.mrf.mxu0
    %v1131 = vadd.f32 0.0, %v1130
    %v1132 = vpop.f32.mrf.mxu0
    %v1133 = vpop.f32.mrf.mxu0
    %1134 = vdwg.mxu0
    %v1135 = vadd.f32 %v1001, %v1088
    %v1136 = vadd.f32 %v1002, %v1090
    %v1137 = vadd.f32 %v1003, %v1129
    %v1138 = vadd.f32 %v1004, %v1131
    %v1139 = vxor.u32 %v1135, 2147483648
    %v1140 = vxor.u32 %v1136, 2147483648
    %v1141 = vxor.u32 %v1137, 2147483648
    %v1142 = vmul.f32 %v1139, 1.442695
    %v1143 = vpow.pop %v1142
    %v1144 = vmul.f32 %v1140, 1.442695
    %v1145 = vpow.pop %v1144
    %v1146 = vmul.f32 %v1141, 1.442695
    %v1147 = vpow.pop %v1146
    %v1148 = vadd.f32 %v1143, 1.0
    %v1149 = vadd.f32 %v1145, 1.0
    %v1150 = vadd.f32 %v1147, 1.0
    %v1151 = vrcp.pop %v1148
    %v1152 = vmul.f32 1.0, %v1151
    %v1153 = vrcp.pop %v1149
    %v1154 = vmul.f32 1.0, %v1153
    %v1155 = vrcp.pop %v1150
    %v1156 = vmul.f32 1.0, %v1155
    %v1157 = vtanh.pop %v1138
    %v1158 = vmul.f32 %v1154, %v838
    %v1159 = vmul.f32 %v1152, %v1157
    %v1160 = vadd.f32 %v1158, %v1159
    %v1161 = vtanh.pop %v1160
    %v1162 = vmul.f32 %v1156, %v1161
    %v1163 = vpack.c.bf16 %v1162, %v1162
    %v1164 = vld [vmem:[#allocation6] sm:$0xff]
    %v1165 = vld [vmem:[#allocation6 + $0x8] sm:$0xff]
    %v1166 = vld [vmem:[#allocation6 + $0x10] sm:$0xff]
    %v1167 = vld [vmem:[#allocation6 + $0x18] sm:$0xff]
    %v1168 = vld [vmem:[#allocation6 + $0x20] sm:$0xff]
    %v1169 = vld [vmem:[#allocation6 + $0x28] sm:$0xff]
    %v1170 = vld [vmem:[#allocation6 + $0x30] sm:$0xff]
    %v1171 = vld [vmem:[#allocation6 + $0x38] sm:$0xff]
    %v1172 = vld [vmem:[%s6] sm:$0xf]
    %v1174 = vlaneseq
    %v1175 = vshrl.u32 %v1174, 7
    %v1176 = vsub.s32 0, %v1175
    %v1177 = vrot.slane %v1172, %v1176
    %v1178 = vlaneseq
    %v1179 = vshrl.u32 %v1178, 7
    %v1180 = vsub.s32 1, %v1179
    %v1181 = vrot.slane %v1172, %v1180
    %v1182 = vlaneseq
    %v1183 = vshrl.u32 %v1182, 7
    %v1184 = vsub.s32 2, %v1183
    %v1185 = vrot.slane %v1172, %v1184
    %v1186 = vlaneseq
    %v1187 = vshrl.u32 %v1186, 7
    %v1188 = vsub.s32 3, %v1187
    %v1189 = vrot.slane %v1172, %v1188
    %v1202 = vunpack.c.l.b16 %v1164
    %v1203 = vunpack.c.h.b16 %v1164
    %v1204 = vunpack.c.l.b16 %v1165
    %v1205 = vunpack.c.h.b16 %v1165
    %v1206 = vunpack.c.l.b16 %v1166
    %v1207 = vunpack.c.h.b16 %v1166
    %v1208 = vunpack.c.l.b16 %v1167
    %v1209 = vunpack.c.h.b16 %v1167
    %v1210 = vunpack.c.l.b16 %v1168
    %v1211 = vunpack.c.h.b16 %v1168
    %v1212 = vunpack.c.l.b16 %v1169
    %v1213 = vunpack.c.h.b16 %v1169
    %v1214 = vunpack.c.l.b16 %v1170
    %v1215 = vunpack.c.h.b16 %v1170
    %v1216 = vunpack.c.l.b16 %v1171
    %v1217 = vunpack.c.h.b16 %v1171
    %v1218 = vpack.c.b16 %v1206, %v1202
    %v1219 = vpack.c.b16 %v1207, %v1203
    %v1220 = vpack.c.b16 %v1208, %v1204
    %v1221 = vpack.c.b16 %v1209, %v1205
    %v1222 = vpack.c.b16 %v1214, %v1210
    %v1223 = vpack.c.b16 %v1215, %v1211
    %v1224 = vpack.c.b16 %v1216, %v1212
    %v1225 = vpack.c.b16 %v1217, %v1213
    %v1235 = vsel %vm405, %v1163, 0
    %1237 = vmatprep.subr.bf16.mxu0 0
    %1238 = vmatpush1.bf16.msra.mxu0 0
    %1239 = vmatprep.subr.bf16.mxu0 0
    %1240 = vmatpush1.bf16.msra.mxu0 0
    %1241 = vmatprep.subr.bf16.mxu0 0
    %1242 = vmatpush1.bf16.msra.mxu0 0
    %1243 = vmatprep.subr.bf16.mxu0 0
    %1244 = vmatpush1.bf16.msra.mxu0 0
    %1245 = vmatprep.subr.bf16.mxu0 0
    %1246 = vmatpush1.bf16.msra.mxu0 0
    %1247 = vmatprep.subr.bf16.mxu0 0
    %1248 = vmatpush1.bf16.msra.mxu0 0
    %1249 = vmatprep.subr.bf16.mxu0 %v1223
    %1250 = vmatpush1.bf16.msra.mxu0 %v1222
    %1251 = vmatprep.subr.bf16.mxu0 %v1219
    %1252 = vmatpush1.bf16.msra.mxu0 %v1218
    %1253 = vmatprep.subr.bf16.mxu0 0
    %1254 = vmatpush2.bf16.msra.mxu0 0
    %1255 = vmatprep.subr.bf16.mxu0 0
    %1256 = vmatpush2.bf16.msra.mxu0 0
    %1257 = vmatprep.subr.bf16.mxu0 0
    %1258 = vmatpush2.bf16.msra.mxu0 0
    %1259 = vmatprep.subr.bf16.mxu0 0
    %1260 = vmatpush2.bf16.msra.mxu0 0
    %1261 = vmatprep.subr.bf16.mxu0 0
    %1262 = vmatpush2.bf16.msra.mxu0 0
    %1263 = vmatprep.subr.bf16.mxu0 0
    %1264 = vmatpush2.bf16.msra.mxu0 0
    %1265 = vmatprep.subr.bf16.mxu0 0
    %1266 = vmatpush2.bf16.msra.mxu0 0
    %1267 = vmatprep.subr.bf16.mxu0 0
    %1268 = vmatpush2.bf16.msra.mxu0 0
    %1269 = vmatprep.mubr.bf16.mxu0 0
    %1270 = vmatmul.mubr.bf16.gmra.mxu0 %v1235
    %v1271 = vpop.f32.mrf.mxu0
    %v1272 = vadd.f32 %v1177, %v1271
    %v1273 = vpop.f32.mrf.mxu0
    %v1274 = vadd.f32 %v1181, %v1273
    %v1275 = vpop.f32.mrf.mxu0
    %v1276 = vpop.f32.mrf.mxu0
    %1277 = vdwg.mxu0
    %1278 = vmatprep.subr.bf16.mxu0 0
    %1279 = vmatpush1.bf16.msra.mxu0 0
    %1280 = vmatprep.subr.bf16.mxu0 0
    %1281 = vmatpush1.bf16.msra.mxu0 0
    %1282 = vmatprep.subr.bf16.mxu0 0
    %1283 = vmatpush1.bf16.msra.mxu0 0
    %1284 = vmatprep.subr.bf16.mxu0 0
    %1285 = vmatpush1.bf16.msra.mxu0 0
    %1286 = vmatprep.subr.bf16.mxu0 0
    %1287 = vmatpush1.bf16.msra.mxu0 0
    %1288 = vmatprep.subr.bf16.mxu0 0
    %1289 = vmatpush1.bf16.msra.mxu0 0
    %1290 = vmatprep.subr.bf16.mxu0 %v1225
    %1291 = vmatpush1.bf16.msra.mxu0 %v1224
    %1292 = vmatprep.subr.bf16.mxu0 %v1221
    %1293 = vmatpush1.bf16.msra.mxu0 %v1220
    %1294 = vmatprep.subr.bf16.mxu0 0
    %1295 = vmatpush2.bf16.msra.mxu0 0
    %1296 = vmatprep.subr.bf16.mxu0 0
    %1297 = vmatpush2.bf16.msra.mxu0 0
    %1298 = vmatprep.subr.bf16.mxu0 0
    %1299 = vmatpush2.bf16.msra.mxu0 0
    %1300 = vmatprep.subr.bf16.mxu0 0
    %1301 = vmatpush2.bf16.msra.mxu0 0
    %1302 = vmatprep.subr.bf16.mxu0 0
    %1303 = vmatpush2.bf16.msra.mxu0 0
    %1304 = vmatprep.subr.bf16.mxu0 0
    %1305 = vmatpush2.bf16.msra.mxu0 0
    %1306 = vmatprep.subr.bf16.mxu0 0
    %1307 = vmatpush2.bf16.msra.mxu0 0
    %1308 = vmatprep.subr.bf16.mxu0 0
    %1309 = vmatpush2.bf16.msra.mxu0 0
    %1310 = vmatprep.mubr.bf16.mxu0 0
    %1311 = vmatmul.mubr.bf16.gmra.mxu0 %v1235
    %v1312 = vpop.f32.mrf.mxu0
    %v1313 = vadd.f32 %v1185, %v1312
    %v1314 = vpop.f32.mrf.mxu0
    %v1315 = vadd.f32 %v1189, %v1314
    %v1316 = vpop.f32.mrf.mxu0
    %v1317 = vpop.f32.mrf.mxu0
    %1318 = vdwg.mxu0
    %1319 = vst [vmem:[#allocation3 + $0x40] sm:$0xff] %v1272
    %1320 = vst [vmem:[#allocation3 + $0x48] sm:$0xff] %v1274
    %1321 = vst [vmem:[#allocation3 + $0x50] sm:$0xff] %v1313
    %1322 = vst [vmem:[#allocation3 + $0x58] sm:$0xff] %v1315
    %v1323 = vld [vmem:[#allocation2 + $0x60] sm:$0xff]
    %v1324 = vld [vmem:[#allocation2 + $0x68] sm:$0xff]
    %v1325 = vld [vmem:[#allocation2 + $0x70] sm:$0xff]
    %v1326 = vld [vmem:[#allocation2 + $0x78] sm:$0xff]
    %v1327 = vld [vmem:[%s2] sm:$0xff]
    %v1328 = vld [vmem:[%s2 + $0x8] sm:$0xff]
    %v1329 = vld [vmem:[%s2 + $0x10] sm:$0xff]
    %v1330 = vld [vmem:[%s2 + $0x18] sm:$0xff]
    %v1331 = vld [vmem:[%s2 + $0x20] sm:$0xff]
    %v1332 = vld [vmem:[%s2 + $0x28] sm:$0xff]
    %v1333 = vld [vmem:[%s2 + $0x30] sm:$0xff]
    %v1334 = vld [vmem:[%s2 + $0x38] sm:$0xff]
    %v1343 = vunpack.c.l.b16 %v1327
    %v1344 = vunpack.c.h.b16 %v1327
    %v1345 = vunpack.c.l.b16 %v1328
    %v1346 = vunpack.c.h.b16 %v1328
    %v1347 = vunpack.c.l.b16 %v1329
    %v1348 = vunpack.c.h.b16 %v1329
    %v1349 = vunpack.c.l.b16 %v1330
    %v1350 = vunpack.c.h.b16 %v1330
    %v1351 = vunpack.c.l.b16 %v1331
    %v1352 = vunpack.c.h.b16 %v1331
    %v1353 = vunpack.c.l.b16 %v1332
    %v1354 = vunpack.c.h.b16 %v1332
    %v1355 = vunpack.c.l.b16 %v1333
    %v1356 = vunpack.c.h.b16 %v1333
    %v1357 = vunpack.c.l.b16 %v1334
    %v1358 = vunpack.c.h.b16 %v1334
    %v1359 = vpack.c.b16 %v1347, %v1343
    %v1360 = vpack.c.b16 %v1348, %v1344
    %v1361 = vpack.c.b16 %v1349, %v1345
    %v1362 = vpack.c.b16 %v1350, %v1346
    %v1363 = vpack.c.b16 %v1355, %v1351
    %v1364 = vpack.c.b16 %v1356, %v1352
    %v1365 = vpack.c.b16 %v1357, %v1353
    %v1366 = vpack.c.b16 %v1358, %v1354
    %1375 = vmatprep.subr.bf16.mxu0 0
    %1376 = vmatpush1.bf16.msra.mxu0 0
    %1377 = vmatprep.subr.bf16.mxu0 0
    %1378 = vmatpush1.bf16.msra.mxu0 0
    %1379 = vmatprep.subr.bf16.mxu0 0
    %1380 = vmatpush1.bf16.msra.mxu0 0
    %1381 = vmatprep.subr.bf16.mxu0 0
    %1382 = vmatpush1.bf16.msra.mxu0 0
    %1383 = vmatprep.subr.bf16.mxu0 0
    %1384 = vmatpush1.bf16.msra.mxu0 0
    %1385 = vmatprep.subr.bf16.mxu0 0
    %1386 = vmatpush1.bf16.msra.mxu0 0
    %1387 = vmatprep.subr.bf16.mxu0 %v1364
    %1388 = vmatpush1.bf16.msra.mxu0 %v1363
    %1389 = vmatprep.subr.bf16.mxu0 %v1360
    %1390 = vmatpush1.bf16.msra.mxu0 %v1359
    %1391 = vmatprep.subr.bf16.mxu0 0
    %1392 = vmatpush2.bf16.msra.mxu0 0
    %1393 = vmatprep.subr.bf16.mxu0 0
    %1394 = vmatpush2.bf16.msra.mxu0 0
    %1395 = vmatprep.subr.bf16.mxu0 0
    %1396 = vmatpush2.bf16.msra.mxu0 0
    %1397 = vmatprep.subr.bf16.mxu0 0
    %1398 = vmatpush2.bf16.msra.mxu0 0
    %1399 = vmatprep.subr.bf16.mxu0 0
    %1400 = vmatpush2.bf16.msra.mxu0 0
    %1401 = vmatprep.subr.bf16.mxu0 0
    %1402 = vmatpush2.bf16.msra.mxu0 0
    %1403 = vmatprep.subr.bf16.mxu0 0
    %1404 = vmatpush2.bf16.msra.mxu0 0
    %1405 = vmatprep.subr.bf16.mxu0 0
    %1406 = vmatpush2.bf16.msra.mxu0 0
    %1407 = vmatprep.mubr.bf16.mxu0 0
    %1408 = vmatmul.mubr.bf16.gmra.mxu0 %v1235
    %v1409 = vpop.f32.mrf.mxu0
    %v1410 = vadd.f32 0.0, %v1409
    %v1411 = vpop.f32.mrf.mxu0
    %v1412 = vadd.f32 0.0, %v1411
    %v1413 = vpop.f32.mrf.mxu0
    %v1414 = vpop.f32.mrf.mxu0
    %1415 = vdwg.mxu0
    %1416 = vmatprep.subr.bf16.mxu0 0
    %1417 = vmatpush1.bf16.msra.mxu0 0
    %1418 = vmatprep.subr.bf16.mxu0 0
    %1419 = vmatpush1.bf16.msra.mxu0 0
    %1420 = vmatprep.subr.bf16.mxu0 0
    %1421 = vmatpush1.bf16.msra.mxu0 0
    %1422 = vmatprep.subr.bf16.mxu0 0
    %1423 = vmatpush1.bf16.msra.mxu0 0
    %1424 = vmatprep.subr.bf16.mxu0 0
    %1425 = vmatpush1.bf16.msra.mxu0 0
    %1426 = vmatprep.subr.bf16.mxu0 0
    %1427 = vmatpush1.bf16.msra.mxu0 0
    %1428 = vmatprep.subr.bf16.mxu0 %v1366
    %1429 = vmatpush1.bf16.msra.mxu0 %v1365
    %1430 = vmatprep.subr.bf16.mxu0 %v1362
    %1431 = vmatpush1.bf16.msra.mxu0 %v1361
    %1432 = vmatprep.subr.bf16.mxu0 0
    %1433 = vmatpush2.bf16.msra.mxu0 0
    %1434 = vmatprep.subr.bf16.mxu0 0
    %1435 = vmatpush2.bf16.msra.mxu0 0
    %1436 = vmatprep.subr.bf16.mxu0 0
    %1437 = vmatpush2.bf16.msra.mxu0 0
    %1438 = vmatprep.subr.bf16.mxu0 0
    %1439 = vmatpush2.bf16.msra.mxu0 0
    %1440 = vmatprep.subr.bf16.mxu0 0
    %1441 = vmatpush2.bf16.msra.mxu0 0
    %1442 = vmatprep.subr.bf16.mxu0 0
    %1443 = vmatpush2.bf16.msra.mxu0 0
    %1444 = vmatprep.subr.bf16.mxu0 0
    %1445 = vmatpush2.bf16.msra.mxu0 0
    %1446 = vmatprep.subr.bf16.mxu0 0
    %1447 = vmatpush2.bf16.msra.mxu0 0
    %1448 = vmatprep.mubr.bf16.mxu0 0
    %1449 = vmatmul.mubr.bf16.gmra.mxu0 %v1235
    %v1450 = vpop.f32.mrf.mxu0
    %v1451 = vadd.f32 0.0, %v1450
    %v1452 = vpop.f32.mrf.mxu0
    %v1453 = vadd.f32 0.0, %v1452
    %v1454 = vpop.f32.mrf.mxu0
    %v1455 = vpop.f32.mrf.mxu0
    %1456 = vdwg.mxu0
    %v1457 = vadd.f32 %v1323, %v1410
    %v1458 = vadd.f32 %v1324, %v1412
    %v1459 = vadd.f32 %v1325, %v1451
    %v1460 = vadd.f32 %v1326, %v1453
    %v1461 = vxor.u32 %v1457, 2147483648
    %v1462 = vxor.u32 %v1458, 2147483648
    %v1463 = vxor.u32 %v1459, 2147483648
    %v1464 = vmul.f32 %v1461, 1.442695
    %v1465 = vpow.pop %v1464
    %v1466 = vmul.f32 %v1462, 1.442695
    %v1467 = vpow.pop %v1466
    %v1468 = vmul.f32 %v1463, 1.442695
    %v1469 = vpow.pop %v1468
    %v1470 = vadd.f32 %v1465, 1.0
    %v1471 = vadd.f32 %v1467, 1.0
    %v1472 = vadd.f32 %v1469, 1.0
    %v1473 = vrcp.pop %v1470
    %v1474 = vmul.f32 1.0, %v1473
    %v1475 = vrcp.pop %v1471
    %v1476 = vmul.f32 1.0, %v1475
    %v1477 = vrcp.pop %v1472
    %v1478 = vmul.f32 1.0, %v1477
    %v1479 = vtanh.pop %v1460
    %v1480 = vmul.f32 %v1476, %v1160
    %v1481 = vmul.f32 %v1474, %v1479
    %v1482 = vadd.f32 %v1480, %v1481
    %v1483 = vtanh.pop %v1482
    %v1484 = vmul.f32 %v1478, %v1483
    %v1485 = vpack.c.bf16 %v1484, %v1484
    %v1486 = vld [vmem:[#allocation6] sm:$0xff]
    %v1487 = vld [vmem:[#allocation6 + $0x8] sm:$0xff]
    %v1488 = vld [vmem:[#allocation6 + $0x10] sm:$0xff]
    %v1489 = vld [vmem:[#allocation6 + $0x18] sm:$0xff]
    %v1490 = vld [vmem:[#allocation6 + $0x20] sm:$0xff]
    %v1491 = vld [vmem:[#allocation6 + $0x28] sm:$0xff]
    %v1492 = vld [vmem:[#allocation6 + $0x30] sm:$0xff]
    %v1493 = vld [vmem:[#allocation6 + $0x38] sm:$0xff]
    %v1494 = vld [vmem:[%s6] sm:$0xf]
    %v1496 = vlaneseq
    %v1497 = vshrl.u32 %v1496, 7
    %v1498 = vsub.s32 0, %v1497
    %v1499 = vrot.slane %v1494, %v1498
    %v1500 = vlaneseq
    %v1501 = vshrl.u32 %v1500, 7
    %v1502 = vsub.s32 1, %v1501
    %v1503 = vrot.slane %v1494, %v1502
    %v1504 = vlaneseq
    %v1505 = vshrl.u32 %v1504, 7
    %v1506 = vsub.s32 2, %v1505
    %v1507 = vrot.slane %v1494, %v1506
    %v1508 = vlaneseq
    %v1509 = vshrl.u32 %v1508, 7
    %v1510 = vsub.s32 3, %v1509
    %v1511 = vrot.slane %v1494, %v1510
    %v1524 = vunpack.c.l.b16 %v1486
    %v1525 = vunpack.c.h.b16 %v1486
    %v1526 = vunpack.c.l.b16 %v1487
    %v1527 = vunpack.c.h.b16 %v1487
    %v1528 = vunpack.c.l.b16 %v1488
    %v1529 = vunpack.c.h.b16 %v1488
    %v1530 = vunpack.c.l.b16 %v1489
    %v1531 = vunpack.c.h.b16 %v1489
    %v1532 = vunpack.c.l.b16 %v1490
    %v1533 = vunpack.c.h.b16 %v1490
    %v1534 = vunpack.c.l.b16 %v1491
    %v1535 = vunpack.c.h.b16 %v1491
    %v1536 = vunpack.c.l.b16 %v1492
    %v1537 = vunpack.c.h.b16 %v1492
    %v1538 = vunpack.c.l.b16 %v1493
    %v1539 = vunpack.c.h.b16 %v1493
    %v1540 = vpack.c.b16 %v1528, %v1524
    %v1541 = vpack.c.b16 %v1529, %v1525
    %v1542 = vpack.c.b16 %v1530, %v1526
    %v1543 = vpack.c.b16 %v1531, %v1527
    %v1544 = vpack.c.b16 %v1536, %v1532
    %v1545 = vpack.c.b16 %v1537, %v1533
    %v1546 = vpack.c.b16 %v1538, %v1534
    %v1547 = vpack.c.b16 %v1539, %v1535
    %v1557 = vsel %vm405, %v1485, 0
    %1559 = vmatprep.subr.bf16.mxu0 0
    %1560 = vmatpush1.bf16.msra.mxu0 0
    %1561 = vmatprep.subr.bf16.mxu0 0
    %1562 = vmatpush1.bf16.msra.mxu0 0
    %1563 = vmatprep.subr.bf16.mxu0 0
    %1564 = vmatpush1.bf16.msra.mxu0 0
    %1565 = vmatprep.subr.bf16.mxu0 0
    %1566 = vmatpush1.bf16.msra.mxu0 0
    %1567 = vmatprep.subr.bf16.mxu0 0
    %1568 = vmatpush1.bf16.msra.mxu0 0
    %1569 = vmatprep.subr.bf16.mxu0 0
    %1570 = vmatpush1.bf16.msra.mxu0 0
    %1571 = vmatprep.subr.bf16.mxu0 %v1545
    %1572 = vmatpush1.bf16.msra.mxu0 %v1544
    %1573 = vmatprep.subr.bf16.mxu0 %v1541
    %1574 = vmatpush1.bf16.msra.mxu0 %v1540
    %1575 = vmatprep.subr.bf16.mxu0 0
    %1576 = vmatpush2.bf16.msra.mxu0 0
    %1577 = vmatprep.subr.bf16.mxu0 0
    %1578 = vmatpush2.bf16.msra.mxu0 0
    %1579 = vmatprep.subr.bf16.mxu0 0
    %1580 = vmatpush2.bf16.msra.mxu0 0
    %1581 = vmatprep.subr.bf16.mxu0 0
    %1582 = vmatpush2.bf16.msra.mxu0 0
    %1583 = vmatprep.subr.bf16.mxu0 0
    %1584 = vmatpush2.bf16.msra.mxu0 0
    %1585 = vmatprep.subr.bf16.mxu0 0
    %1586 = vmatpush2.bf16.msra.mxu0 0
    %1587 = vmatprep.subr.bf16.mxu0 0
    %1588 = vmatpush2.bf16.msra.mxu0 0
    %1589 = vmatprep.subr.bf16.mxu0 0
    %1590 = vmatpush2.bf16.msra.mxu0 0
    %1591 = vmatprep.mubr.bf16.mxu0 0
    %1592 = vmatmul.mubr.bf16.gmra.mxu0 %v1557
    %v1593 = vpop.f32.mrf.mxu0
    %v1594 = vadd.f32 %v1499, %v1593
    %v1595 = vpop.f32.mrf.mxu0
    %v1596 = vadd.f32 %v1503, %v1595
    %v1597 = vpop.f32.mrf.mxu0
    %v1598 = vpop.f32.mrf.mxu0
    %1599 = vdwg.mxu0
    %1600 = vmatprep.subr.bf16.mxu0 0
    %1601 = vmatpush1.bf16.msra.mxu0 0
    %1602 = vmatprep.subr.bf16.mxu0 0
    %1603 = vmatpush1.bf16.msra.mxu0 0
    %1604 = vmatprep.subr.bf16.mxu0 0
    %1605 = vmatpush1.bf16.msra.mxu0 0
    %1606 = vmatprep.subr.bf16.mxu0 0
    %1607 = vmatpush1.bf16.msra.mxu0 0
    %1608 = vmatprep.subr.bf16.mxu0 0
    %1609 = vmatpush1.bf16.msra.mxu0 0
    %1610 = vmatprep.subr.bf16.mxu0 0
    %1611 = vmatpush1.bf16.msra.mxu0 0
    %1612 = vmatprep.subr.bf16.mxu0 %v1547
    %1613 = vmatpush1.bf16.msra.mxu0 %v1546
    %1614 = vmatprep.subr.bf16.mxu0 %v1543
    %1615 = vmatpush1.bf16.msra.mxu0 %v1542
    %1616 = vmatprep.subr.bf16.mxu0 0
    %1617 = vmatpush2.bf16.msra.mxu0 0
    %1618 = vmatprep.subr.bf16.mxu0 0
    %1619 = vmatpush2.bf16.msra.mxu0 0
    %1620 = vmatprep.subr.bf16.mxu0 0
    %1621 = vmatpush2.bf16.msra.mxu0 0
    %1622 = vmatprep.subr.bf16.mxu0 0
    %1623 = vmatpush2.bf16.msra.mxu0 0
    %1624 = vmatprep.subr.bf16.mxu0 0
    %1625 = vmatpush2.bf16.msra.mxu0 0
    %1626 = vmatprep.subr.bf16.mxu0 0
    %1627 = vmatpush2.bf16.msra.mxu0 0
    %1628 = vmatprep.subr.bf16.mxu0 0
    %1629 = vmatpush2.bf16.msra.mxu0 0
    %1630 = vmatprep.subr.bf16.mxu0 0
    %1631 = vmatpush2.bf16.msra.mxu0 0
    %1632 = vmatprep.mubr.bf16.mxu0 0
    %1633 = vmatmul.mubr.bf16.gmra.mxu0 %v1557
    %v1634 = vpop.f32.mrf.mxu0
    %v1635 = vadd.f32 %v1507, %v1634
    %v1636 = vpop.f32.mrf.mxu0
    %v1637 = vadd.f32 %v1511, %v1636
    %v1638 = vpop.f32.mrf.mxu0
    %v1639 = vpop.f32.mrf.mxu0
    %1640 = vdwg.mxu0
    %1641 = vst [vmem:[#allocation3 + $0x60] sm:$0xff] %v1594
    %1642 = vst [vmem:[#allocation3 + $0x68] sm:$0xff] %v1596
    %1643 = vst [vmem:[#allocation3 + $0x70] sm:$0xff] %v1635
    %1644 = vst [vmem:[#allocation3 + $0x78] sm:$0xff] %v1637
    %v1645 = vld [vmem:[#allocation2 + $0x80] sm:$0xff]
    %v1646 = vld [vmem:[#allocation2 + $0x88] sm:$0xff]
    %v1647 = vld [vmem:[#allocation2 + $0x90] sm:$0xff]
    %v1648 = vld [vmem:[#allocation2 + $0x98] sm:$0xff]
    %v1649 = vld [vmem:[%s2] sm:$0xff]
    %v1650 = vld [vmem:[%s2 + $0x8] sm:$0xff]
    %v1651 = vld [vmem:[%s2 + $0x10] sm:$0xff]
    %v1652 = vld [vmem:[%s2 + $0x18] sm:$0xff]
    %v1653 = vld [vmem:[%s2 + $0x20] sm:$0xff]
    %v1654 = vld [vmem:[%s2 + $0x28] sm:$0xff]
    %v1655 = vld [vmem:[%s2 + $0x30] sm:$0xff]
    %v1656 = vld [vmem:[%s2 + $0x38] sm:$0xff]
    %v1665 = vunpack.c.l.b16 %v1649
    %v1666 = vunpack.c.h.b16 %v1649
    %v1667 = vunpack.c.l.b16 %v1650
    %v1668 = vunpack.c.h.b16 %v1650
    %v1669 = vunpack.c.l.b16 %v1651
    %v1670 = vunpack.c.h.b16 %v1651
    %v1671 = vunpack.c.l.b16 %v1652
    %v1672 = vunpack.c.h.b16 %v1652
    %v1673 = vunpack.c.l.b16 %v1653
    %v1674 = vunpack.c.h.b16 %v1653
    %v1675 = vunpack.c.l.b16 %v1654
    %v1676 = vunpack.c.h.b16 %v1654
    %v1677 = vunpack.c.l.b16 %v1655
    %v1678 = vunpack.c.h.b16 %v1655
    %v1679 = vunpack.c.l.b16 %v1656
    %v1680 = vunpack.c.h.b16 %v1656
    %v1681 = vpack.c.b16 %v1669, %v1665
    %v1682 = vpack.c.b16 %v1670, %v1666
    %v1683 = vpack.c.b16 %v1671, %v1667
    %v1684 = vpack.c.b16 %v1672, %v1668
    %v1685 = vpack.c.b16 %v1677, %v1673
    %v1686 = vpack.c.b16 %v1678, %v1674
    %v1687 = vpack.c.b16 %v1679, %v1675
    %v1688 = vpack.c.b16 %v1680, %v1676
    %1697 = vmatprep.subr.bf16.mxu0 0
    %1698 = vmatpush1.bf16.msra.mxu0 0
    %1699 = vmatprep.subr.bf16.mxu0 0
    %1700 = vmatpush1.bf16.msra.mxu0 0
    %1701 = vmatprep.subr.bf16.mxu0 0
    %1702 = vmatpush1.bf16.msra.mxu0 0
    %1703 = vmatprep.subr.bf16.mxu0 0
    %1704 = vmatpush1.bf16.msra.mxu0 0
    %1705 = vmatprep.subr.bf16.mxu0 0
    %1706 = vmatpush1.bf16.msra.mxu0 0
    %1707 = vmatprep.subr.bf16.mxu0 0
    %1708 = vmatpush1.bf16.msra.mxu0 0
    %1709 = vmatprep.subr.bf16.mxu0 %v1686
    %1710 = vmatpush1.bf16.msra.mxu0 %v1685
    %1711 = vmatprep.subr.bf16.mxu0 %v1682
    %1712 = vmatpush1.bf16.msra.mxu0 %v1681
    %1713 = vmatprep.subr.bf16.mxu0 0
    %1714 = vmatpush2.bf16.msra.mxu0 0
    %1715 = vmatprep.subr.bf16.mxu0 0
    %1716 = vmatpush2.bf16.msra.mxu0 0
    %1717 = vmatprep.subr.bf16.mxu0 0
    %1718 = vmatpush2.bf16.msra.mxu0 0
    %1719 = vmatprep.subr.bf16.mxu0 0
    %1720 = vmatpush2.bf16.msra.mxu0 0
    %1721 = vmatprep.subr.bf16.mxu0 0
    %1722 = vmatpush2.bf16.msra.mxu0 0
    %1723 = vmatprep.subr.bf16.mxu0 0
    %1724 = vmatpush2.bf16.msra.mxu0 0
    %1725 = vmatprep.subr.bf16.mxu0 0
    %1726 = vmatpush2.bf16.msra.mxu0 0
    %1727 = vmatprep.subr.bf16.mxu0 0
    %1728 = vmatpush2.bf16.msra.mxu0 0
    %1729 = vmatprep.mubr.bf16.mxu0 0
    %1730 = vmatmul.mubr.bf16.gmra.mxu0 %v1557
    %v1731 = vpop.f32.mrf.mxu0
    %v1732 = vadd.f32 0.0, %v1731
    %v1733 = vpop.f32.mrf.mxu0
    %v1734 = vadd.f32 0.0, %v1733
    %v1735 = vpop.f32.mrf.mxu0
    %v1736 = vpop.f32.mrf.mxu0
    %1737 = vdwg.mxu0
    %1738 = vmatprep.subr.bf16.mxu0 0
    %1739 = vmatpush1.bf16.msra.mxu0 0
    %1740 = vmatprep.subr.bf16.mxu0 0
    %1741 = vmatpush1.bf16.msra.mxu0 0
    %1742 = vmatprep.subr.bf16.mxu0 0
    %1743 = vmatpush1.bf16.msra.mxu0 0
    %1744 = vmatprep.subr.bf16.mxu0 0
    %1745 = vmatpush1.bf16.msra.mxu0 0
    %1746 = vmatprep.subr.bf16.mxu0 0
    %1747 = vmatpush1.bf16.msra.mxu0 0
    %1748 = vmatprep.subr.bf16.mxu0 0
    %1749 = vmatpush1.bf16.msra.mxu0 0
    %1750 = vmatprep.subr.bf16.mxu0 %v1688
    %1751 = vmatpush1.bf16.msra.mxu0 %v1687
    %1752 = vmatprep.subr.bf16.mxu0 %v1684
    %1753 = vmatpush1.bf16.msra.mxu0 %v1683
    %1754 = vmatprep.subr.bf16.mxu0 0
    %1755 = vmatpush2.bf16.msra.mxu0 0
    %1756 = vmatprep.subr.bf16.mxu0 0
    %1757 = vmatpush2.bf16.msra.mxu0 0
    %1758 = vmatprep.subr.bf16.mxu0 0
    %1759 = vmatpush2.bf16.msra.mxu0 0
    %1760 = vmatprep.subr.bf16.mxu0 0
    %1761 = vmatpush2.bf16.msra.mxu0 0
    %1762 = vmatprep.subr.bf16.mxu0 0
    %1763 = vmatpush2.bf16.msra.mxu0 0
    %1764 = vmatprep.subr.bf16.mxu0 0
    %1765 = vmatpush2.bf16.msra.mxu0 0
    %1766 = vmatprep.subr.bf16.mxu0 0
    %1767 = vmatpush2.bf16.msra.mxu0 0
    %1768 = vmatprep.subr.bf16.mxu0 0
    %1769 = vmatpush2.bf16.msra.mxu0 0
    %1770 = vmatprep.mubr.bf16.mxu0 0
    %1771 = vmatmul.mubr.bf16.gmra.mxu0 %v1557
    %v1772 = vpop.f32.mrf.mxu0
    %v1773 = vadd.f32 0.0, %v1772
    %v1774 = vpop.f32.mrf.mxu0
    %v1775 = vadd.f32 0.0, %v1774
    %v1776 = vpop.f32.mrf.mxu0
    %v1777 = vpop.f32.mrf.mxu0
    %1778 = vdwg.mxu0
    %v1779 = vadd.f32 %v1645, %v1732
    %v1780 = vadd.f32 %v1646, %v1734
    %v1781 = vadd.f32 %v1647, %v1773
    %v1782 = vadd.f32 %v1648, %v1775
    %v1783 = vxor.u32 %v1779, 2147483648
    %v1784 = vxor.u32 %v1780, 2147483648
    %v1785 = vxor.u32 %v1781, 2147483648
    %v1786 = vmul.f32 %v1783, 1.442695
    %v1787 = vpow.pop %v1786
    %v1788 = vmul.f32 %v1784, 1.442695
    %v1789 = vpow.pop %v1788
    %v1790 = vmul.f32 %v1785, 1.442695
    %v1791 = vpow.pop %v1790
    %v1792 = vadd.f32 %v1787, 1.0
    %v1793 = vadd.f32 %v1789, 1.0
    %v1794 = vadd.f32 %v1791, 1.0
    %v1795 = vrcp.pop %v1792
    %v1796 = vmul.f32 1.0, %v1795
    %v1797 = vrcp.pop %v1793
    %v1798 = vmul.f32 1.0, %v1797
    %v1799 = vrcp.pop %v1794
    %v1800 = vmul.f32 1.0, %v1799
    %v1801 = vtanh.pop %v1782
    %v1802 = vmul.f32 %v1798, %v1482
    %v1803 = vmul.f32 %v1796, %v1801
    %v1804 = vadd.f32 %v1802, %v1803
    %v1805 = vtanh.pop %v1804
    %v1806 = vmul.f32 %v1800, %v1805
    %v1807 = vpack.c.bf16 %v1806, %v1806
    %v1808 = vld [vmem:[#allocation6] sm:$0xff]
    %v1809 = vld [vmem:[#allocation6 + $0x8] sm:$0xff]
    %v1810 = vld [vmem:[#allocation6 + $0x10] sm:$0xff]
    %v1811 = vld [vmem:[#allocation6 + $0x18] sm:$0xff]
    %v1812 = vld [vmem:[#allocation6 + $0x20] sm:$0xff]
    %v1813 = vld [vmem:[#allocation6 + $0x28] sm:$0xff]
    %v1814 = vld [vmem:[#allocation6 + $0x30] sm:$0xff]
    %v1815 = vld [vmem:[#allocation6 + $0x38] sm:$0xff]
    %v1816 = vld [vmem:[%s6] sm:$0xf]
    %v1818 = vlaneseq
    %v1819 = vshrl.u32 %v1818, 7
    %v1820 = vsub.s32 0, %v1819
    %v1821 = vrot.slane %v1816, %v1820
    %v1822 = vlaneseq
    %v1823 = vshrl.u32 %v1822, 7
    %v1824 = vsub.s32 1, %v1823
    %v1825 = vrot.slane %v1816, %v1824
    %v1826 = vlaneseq
    %v1827 = vshrl.u32 %v1826, 7
    %v1828 = vsub.s32 2, %v1827
    %v1829 = vrot.slane %v1816, %v1828
    %v1830 = vlaneseq
    %v1831 = vshrl.u32 %v1830, 7
    %v1832 = vsub.s32 3, %v1831
    %v1833 = vrot.slane %v1816, %v1832
    %v1846 = vunpack.c.l.b16 %v1808
    %v1847 = vunpack.c.h.b16 %v1808
    %v1848 = vunpack.c.l.b16 %v1809
    %v1849 = vunpack.c.h.b16 %v1809
    %v1850 = vunpack.c.l.b16 %v1810
    %v1851 = vunpack.c.h.b16 %v1810
    %v1852 = vunpack.c.l.b16 %v1811
    %v1853 = vunpack.c.h.b16 %v1811
    %v1854 = vunpack.c.l.b16 %v1812
    %v1855 = vunpack.c.h.b16 %v1812
    %v1856 = vunpack.c.l.b16 %v1813
    %v1857 = vunpack.c.h.b16 %v1813
    %v1858 = vunpack.c.l.b16 %v1814
    %v1859 = vunpack.c.h.b16 %v1814
    %v1860 = vunpack.c.l.b16 %v1815
    %v1861 = vunpack.c.h.b16 %v1815
    %v1862 = vpack.c.b16 %v1850, %v1846
    %v1863 = vpack.c.b16 %v1851, %v1847
    %v1864 = vpack.c.b16 %v1852, %v1848
    %v1865 = vpack.c.b16 %v1853, %v1849
    %v1866 = vpack.c.b16 %v1858, %v1854
    %v1867 = vpack.c.b16 %v1859, %v1855
    %v1868 = vpack.c.b16 %v1860, %v1856
    %v1869 = vpack.c.b16 %v1861, %v1857
    %v1879 = vsel %vm405, %v1807, 0
    %1881 = vmatprep.subr.bf16.mxu0 0
    %1882 = vmatpush1.bf16.msra.mxu0 0
    %1883 = vmatprep.subr.bf16.mxu0 0
    %1884 = vmatpush1.bf16.msra.mxu0 0
    %1885 = vmatprep.subr.bf16.mxu0 0
    %1886 = vmatpush1.bf16.msra.mxu0 0
    %1887 = vmatprep.subr.bf16.mxu0 0
    %1888 = vmatpush1.bf16.msra.mxu0 0
    %1889 = vmatprep.subr.bf16.mxu0 0
    %1890 = vmatpush1.bf16.msra.mxu0 0
    %1891 = vmatprep.subr.bf16.mxu0 0
    %1892 = vmatpush1.bf16.msra.mxu0 0
    %1893 = vmatprep.subr.bf16.mxu0 %v1867
    %1894 = vmatpush1.bf16.msra.mxu0 %v1866
    %1895 = vmatprep.subr.bf16.mxu0 %v1863
    %1896 = vmatpush1.bf16.msra.mxu0 %v1862
    %1897 = vmatprep.subr.bf16.mxu0 0
    %1898 = vmatpush2.bf16.msra.mxu0 0
    %1899 = vmatprep.subr.bf16.mxu0 0
    %1900 = vmatpush2.bf16.msra.mxu0 0
    %1901 = vmatprep.subr.bf16.mxu0 0
    %1902 = vmatpush2.bf16.msra.mxu0 0
    %1903 = vmatprep.subr.bf16.mxu0 0
    %1904 = vmatpush2.bf16.msra.mxu0 0
    %1905 = vmatprep.subr.bf16.mxu0 0
    %1906 = vmatpush2.bf16.msra.mxu0 0
    %1907 = vmatprep.subr.bf16.mxu0 0
    %1908 = vmatpush2.bf16.msra.mxu0 0
    %1909 = vmatprep.subr.bf16.mxu0 0
    %1910 = vmatpush2.bf16.msra.mxu0 0
    %1911 = vmatprep.subr.bf16.mxu0 0
    %1912 = vmatpush2.bf16.msra.mxu0 0
    %1913 = vmatprep.mubr.bf16.mxu0 0
    %1914 = vmatmul.mubr.bf16.gmra.mxu0 %v1879
    %v1915 = vpop.f32.mrf.mxu0
    %v1916 = vadd.f32 %v1821, %v1915
    %v1917 = vpop.f32.mrf.mxu0
    %v1918 = vadd.f32 %v1825, %v1917
    %v1919 = vpop.f32.mrf.mxu0
    %v1920 = vpop.f32.mrf.mxu0
    %1921 = vdwg.mxu0
    %1922 = vmatprep.subr.bf16.mxu0 0
    %1923 = vmatpush1.bf16.msra.mxu0 0
    %1924 = vmatprep.subr.bf16.mxu0 0
    %1925 = vmatpush1.bf16.msra.mxu0 0
    %1926 = vmatprep.subr.bf16.mxu0 0
    %1927 = vmatpush1.bf16.msra.mxu0 0
    %1928 = vmatprep.subr.bf16.mxu0 0
    %1929 = vmatpush1.bf16.msra.mxu0 0
    %1930 = vmatprep.subr.bf16.mxu0 0
    %1931 = vmatpush1.bf16.msra.mxu0 0
    %1932 = vmatprep.subr.bf16.mxu0 0
    %1933 = vmatpush1.bf16.msra.mxu0 0
    %1934 = vmatprep.subr.bf16.mxu0 %v1869
    %1935 = vmatpush1.bf16.msra.mxu0 %v1868
    %1936 = vmatprep.subr.bf16.mxu0 %v1865
    %1937 = vmatpush1.bf16.msra.mxu0 %v1864
    %1938 = vmatprep.subr.bf16.mxu0 0
    %1939 = vmatpush2.bf16.msra.mxu0 0
    %1940 = vmatprep.subr.bf16.mxu0 0
    %1941 = vmatpush2.bf16.msra.mxu0 0
    %1942 = vmatprep.subr.bf16.mxu0 0
    %1943 = vmatpush2.bf16.msra.mxu0 0
    %1944 = vmatprep.subr.bf16.mxu0 0
    %1945 = vmatpush2.bf16.msra.mxu0 0
    %1946 = vmatprep.subr.bf16.mxu0 0
    %1947 = vmatpush2.bf16.msra.mxu0 0
    %1948 = vmatprep.subr.bf16.mxu0 0
    %1949 = vmatpush2.bf16.msra.mxu0 0
    %1950 = vmatprep.subr.bf16.mxu0 0
    %1951 = vmatpush2.bf16.msra.mxu0 0
    %1952 = vmatprep.subr.bf16.mxu0 0
    %1953 = vmatpush2.bf16.msra.mxu0 0
    %1954 = vmatprep.mubr.bf16.mxu0 0
    %1955 = vmatmul.mubr.bf16.gmra.mxu0 %v1879
    %v1956 = vpop.f32.mrf.mxu0
    %v1957 = vadd.f32 %v1829, %v1956
    %v1958 = vpop.f32.mrf.mxu0
    %v1959 = vadd.f32 %v1833, %v1958
    %v1960 = vpop.f32.mrf.mxu0
    %v1961 = vpop.f32.mrf.mxu0
    %1962 = vdwg.mxu0
    %1963 = vst [vmem:[#allocation3 + $0x80] sm:$0xff] %v1916
    %1964 = vst [vmem:[#allocation3 + $0x88] sm:$0xff] %v1918
    %1965 = vst [vmem:[#allocation3 + $0x90] sm:$0xff] %v1957
    %1966 = vst [vmem:[#allocation3 + $0x98] sm:$0xff] %v1959
    %v1967 = vld [vmem:[#allocation2 + $0xa0] sm:$0xff]
    %v1968 = vld [vmem:[#allocation2 + $0xa8] sm:$0xff]
    %v1969 = vld [vmem:[#allocation2 + $0xb0] sm:$0xff]
    %v1970 = vld [vmem:[#allocation2 + $0xb8] sm:$0xff]
    %v1971 = vld [vmem:[%s2] sm:$0xff]
    %v1972 = vld [vmem:[%s2 + $0x8] sm:$0xff]
    %v1973 = vld [vmem:[%s2 + $0x10] sm:$0xff]
    %v1974 = vld [vmem:[%s2 + $0x18] sm:$0xff]
    %v1975 = vld [vmem:[%s2 + $0x20] sm:$0xff]
    %v1976 = vld [vmem:[%s2 + $0x28] sm:$0xff]
    %v1977 = vld [vmem:[%s2 + $0x30] sm:$0xff]
    %v1978 = vld [vmem:[%s2 + $0x38] sm:$0xff]
    %v1987 = vunpack.c.l.b16 %v1971
    %v1988 = vunpack.c.h.b16 %v1971
    %v1989 = vunpack.c.l.b16 %v1972
    %v1990 = vunpack.c.h.b16 %v1972
    %v1991 = vunpack.c.l.b16 %v1973
    %v1992 = vunpack.c.h.b16 %v1973
    %v1993 = vunpack.c.l.b16 %v1974
    %v1994 = vunpack.c.h.b16 %v1974
    %v1995 = vunpack.c.l.b16 %v1975
    %v1996 = vunpack.c.h.b16 %v1975
    %v1997 = vunpack.c.l.b16 %v1976
    %v1998 = vunpack.c.h.b16 %v1976
    %v1999 = vunpack.c.l.b16 %v1977
    %v2000 = vunpack.c.h.b16 %v1977
    %v2001 = vunpack.c.l.b16 %v1978
    %v2002 = vunpack.c.h.b16 %v1978
    %v2003 = vpack.c.b16 %v1991, %v1987
    %v2004 = vpack.c.b16 %v1992, %v1988
    %v2005 = vpack.c.b16 %v1993, %v1989
    %v2006 = vpack.c.b16 %v1994, %v1990
    %v2007 = vpack.c.b16 %v1999, %v1995
    %v2008 = vpack.c.b16 %v2000, %v1996
    %v2009 = vpack.c.b16 %v2001, %v1997
    %v2010 = vpack.c.b16 %v2002, %v1998
    %2019 = vmatprep.subr.bf16.mxu0 0
    %2020 = vmatpush1.bf16.msra.mxu0 0
    %2021 = vmatprep.subr.bf16.mxu0 0
    %2022 = vmatpush1.bf16.msra.mxu0 0
    %2023 = vmatprep.subr.bf16.mxu0 0
    %2024 = vmatpush1.bf16.msra.mxu0 0
    %2025 = vmatprep.subr.bf16.mxu0 0
    %2026 = vmatpush1.bf16.msra.mxu0 0
    %2027 = vmatprep.subr.bf16.mxu0 0
    %2028 = vmatpush1.bf16.msra.mxu0 0
    %2029 = vmatprep.subr.bf16.mxu0 0
    %2030 = vmatpush1.bf16.msra.mxu0 0
    %2031 = vmatprep.subr.bf16.mxu0 %v2008
    %2032 = vmatpush1.bf16.msra.mxu0 %v2007
    %2033 = vmatprep.subr.bf16.mxu0 %v2004
    %2034 = vmatpush1.bf16.msra.mxu0 %v2003
    %2035 = vmatprep.subr.bf16.mxu0 0
    %2036 = vmatpush2.bf16.msra.mxu0 0
    %2037 = vmatprep.subr.bf16.mxu0 0
    %2038 = vmatpush2.bf16.msra.mxu0 0
    %2039 = vmatprep.subr.bf16.mxu0 0
    %2040 = vmatpush2.bf16.msra.mxu0 0
    %2041 = vmatprep.subr.bf16.mxu0 0
    %2042 = vmatpush2.bf16.msra.mxu0 0
    %2043 = vmatprep.subr.bf16.mxu0 0
    %2044 = vmatpush2.bf16.msra.mxu0 0
    %2045 = vmatprep.subr.bf16.mxu0 0
    %2046 = vmatpush2.bf16.msra.mxu0 0
    %2047 = vmatprep.subr.bf16.mxu0 0
    %2048 = vmatpush2.bf16.msra.mxu0 0
    %2049 = vmatprep.subr.bf16.mxu0 0
    %2050 = vmatpush2.bf16.msra.mxu0 0
    %2051 = vmatprep.mubr.bf16.mxu0 0
    %2052 = vmatmul.mubr.bf16.gmra.mxu0 %v1879
    %v2053 = vpop.f32.mrf.mxu0
    %v2054 = vadd.f32 0.0, %v2053
    %v2055 = vpop.f32.mrf.mxu0
    %v2056 = vadd.f32 0.0, %v2055
    %v2057 = vpop.f32.mrf.mxu0
    %v2058 = vpop.f32.mrf.mxu0
    %2059 = vdwg.mxu0
    %2060 = vmatprep.subr.bf16.mxu0 0
    %2061 = vmatpush1.bf16.msra.mxu0 0
    %2062 = vmatprep.subr.bf16.mxu0 0
    %2063 = vmatpush1.bf16.msra.mxu0 0
    %2064 = vmatprep.subr.bf16.mxu0 0
    %2065 = vmatpush1.bf16.msra.mxu0 0
    %2066 = vmatprep.subr.bf16.mxu0 0
    %2067 = vmatpush1.bf16.msra.mxu0 0
    %2068 = vmatprep.subr.bf16.mxu0 0
    %2069 = vmatpush1.bf16.msra.mxu0 0
    %2070 = vmatprep.subr.bf16.mxu0 0
    %2071 = vmatpush1.bf16.msra.mxu0 0
    %2072 = vmatprep.subr.bf16.mxu0 %v2010
    %2073 = vmatpush1.bf16.msra.mxu0 %v2009
    %2074 = vmatprep.subr.bf16.mxu0 %v2006
    %2075 = vmatpush1.bf16.msra.mxu0 %v2005
    %2076 = vmatprep.subr.bf16.mxu0 0
    %2077 = vmatpush2.bf16.msra.mxu0 0
    %2078 = vmatprep.subr.bf16.mxu0 0
    %2079 = vmatpush2.bf16.msra.mxu0 0
    %2080 = vmatprep.subr.bf16.mxu0 0
    %2081 = vmatpush2.bf16.msra.mxu0 0
    %2082 = vmatprep.subr.bf16.mxu0 0
    %2083 = vmatpush2.bf16.msra.mxu0 0
    %2084 = vmatprep.subr.bf16.mxu0 0
    %2085 = vmatpush2.bf16.msra.mxu0 0
    %2086 = vmatprep.subr.bf16.mxu0 0
    %2087 = vmatpush2.bf16.msra.mxu0 0
    %2088 = vmatprep.subr.bf16.mxu0 0
    %2089 = vmatpush2.bf16.msra.mxu0 0
    %2090 = vmatprep.subr.bf16.mxu0 0
    %2091 = vmatpush2.bf16.msra.mxu0 0
    %2092 = vmatprep.mubr.bf16.mxu0 0
    %2093 = vmatmul.mubr.bf16.gmra.mxu0 %v1879
    %v2094 = vpop.f32.mrf.mxu0
    %v2095 = vadd.f32 0.0, %v2094
    %v2096 = vpop.f32.mrf.mxu0
    %v2097 = vadd.f32 0.0, %v2096
    %v2098 = vpop.f32.mrf.mxu0
    %v2099 = vpop.f32.mrf.mxu0
    %2100 = vdwg.mxu0
    %v2101 = vadd.f32 %v1967, %v2054
    %v2102 = vadd.f32 %v1968, %v2056
    %v2103 = vadd.f32 %v1969, %v2095
    %v2104 = vadd.f32 %v1970, %v2097
    %v2105 = vxor.u32 %v2101, 2147483648
    %v2106 = vxor.u32 %v2102, 2147483648
    %v2107 = vxor.u32 %v2103, 2147483648
    %v2108 = vmul.f32 %v2105, 1.442695
    %v2109 = vpow.pop %v2108
    %v2110 = vmul.f32 %v2106, 1.442695
    %v2111 = vpow.pop %v2110
    %v2112 = vmul.f32 %v2107, 1.442695
    %v2113 = vpow.pop %v2112
    %v2114 = vadd.f32 %v2109, 1.0
    %v2115 = vadd.f32 %v2111, 1.0
    %v2116 = vadd.f32 %v2113, 1.0
    %v2117 = vrcp.pop %v2114
    %v2118 = vmul.f32 1.0, %v2117
    %v2119 = vrcp.pop %v2115
    %v2120 = vmul.f32 1.0, %v2119
    %v2121 = vrcp.pop %v2116
    %v2122 = vmul.f32 1.0, %v2121
    %v2123 = vtanh.pop %v2104
    %v2124 = vmul.f32 %v2120, %v1804
    %v2125 = vmul.f32 %v2118, %v2123
    %v2126 = vadd.f32 %v2124, %v2125
    %v2127 = vtanh.pop %v2126
    %v2128 = vmul.f32 %v2122, %v2127
    %v2129 = vpack.c.bf16 %v2128, %v2128
    %v2130 = vld [vmem:[#allocation6] sm:$0xff]
    %v2131 = vld [vmem:[#allocation6 + $0x8] sm:$0xff]
    %v2132 = vld [vmem:[#allocation6 + $0x10] sm:$0xff]
    %v2133 = vld [vmem:[#allocation6 + $0x18] sm:$0xff]
    %v2134 = vld [vmem:[#allocation6 + $0x20] sm:$0xff]
    %v2135 = vld [vmem:[#allocation6 + $0x28] sm:$0xff]
    %v2136 = vld [vmem:[#allocation6 + $0x30] sm:$0xff]
    %v2137 = vld [vmem:[#allocation6 + $0x38] sm:$0xff]
    %v2138 = vld [vmem:[%s6] sm:$0xf]
    %v2140 = vlaneseq
    %v2141 = vshrl.u32 %v2140, 7
    %v2142 = vsub.s32 0, %v2141
    %v2143 = vrot.slane %v2138, %v2142
    %v2144 = vlaneseq
    %v2145 = vshrl.u32 %v2144, 7
    %v2146 = vsub.s32 1, %v2145
    %v2147 = vrot.slane %v2138, %v2146
    %v2148 = vlaneseq
    %v2149 = vshrl.u32 %v2148, 7
    %v2150 = vsub.s32 2, %v2149
    %v2151 = vrot.slane %v2138, %v2150
    %v2152 = vlaneseq
    %v2153 = vshrl.u32 %v2152, 7
    %v2154 = vsub.s32 3, %v2153
    %v2155 = vrot.slane %v2138, %v2154
    %v2168 = vunpack.c.l.b16 %v2130
    %v2169 = vunpack.c.h.b16 %v2130
    %v2170 = vunpack.c.l.b16 %v2131
    %v2171 = vunpack.c.h.b16 %v2131
    %v2172 = vunpack.c.l.b16 %v2132
    %v2173 = vunpack.c.h.b16 %v2132
    %v2174 = vunpack.c.l.b16 %v2133
    %v2175 = vunpack.c.h.b16 %v2133
    %v2176 = vunpack.c.l.b16 %v2134
    %v2177 = vunpack.c.h.b16 %v2134
    %v2178 = vunpack.c.l.b16 %v2135
    %v2179 = vunpack.c.h.b16 %v2135
    %v2180 = vunpack.c.l.b16 %v2136
    %v2181 = vunpack.c.h.b16 %v2136
    %v2182 = vunpack.c.l.b16 %v2137
    %v2183 = vunpack.c.h.b16 %v2137
    %v2184 = vpack.c.b16 %v2172, %v2168
    %v2185 = vpack.c.b16 %v2173, %v2169
    %v2186 = vpack.c.b16 %v2174, %v2170
    %v2187 = vpack.c.b16 %v2175, %v2171
    %v2188 = vpack.c.b16 %v2180, %v2176
    %v2189 = vpack.c.b16 %v2181, %v2177
    %v2190 = vpack.c.b16 %v2182, %v2178
    %v2191 = vpack.c.b16 %v2183, %v2179
    %v2201 = vsel %vm405, %v2129, 0
    %2203 = vmatprep.subr.bf16.mxu0 0
    %2204 = vmatpush1.bf16.msra.mxu0 0
    %2205 = vmatprep.subr.bf16.mxu0 0
    %2206 = vmatpush1.bf16.msra.mxu0 0
    %2207 = vmatprep.subr.bf16.mxu0 0
    %2208 = vmatpush1.bf16.msra.mxu0 0
    %2209 = vmatprep.subr.bf16.mxu0 0
    %2210 = vmatpush1.bf16.msra.mxu0 0
    %2211 = vmatprep.subr.bf16.mxu0 0
    %2212 = vmatpush1.bf16.msra.mxu0 0
    %2213 = vmatprep.subr.bf16.mxu0 0
    %2214 = vmatpush1.bf16.msra.mxu0 0
    %2215 = vmatprep.subr.bf16.mxu0 %v2189
    %2216 = vmatpush1.bf16.msra.mxu0 %v2188
    %2217 = vmatprep.subr.bf16.mxu0 %v2185
    %2218 = vmatpush1.bf16.msra.mxu0 %v2184
    %2219 = vmatprep.subr.bf16.mxu0 0
    %2220 = vmatpush2.bf16.msra.mxu0 0
    %2221 = vmatprep.subr.bf16.mxu0 0
    %2222 = vmatpush2.bf16.msra.mxu0 0
    %2223 = vmatprep.subr.bf16.mxu0 0
    %2224 = vmatpush2.bf16.msra.mxu0 0
    %2225 = vmatprep.subr.bf16.mxu0 0
    %2226 = vmatpush2.bf16.msra.mxu0 0
    %2227 = vmatprep.subr.bf16.mxu0 0
    %2228 = vmatpush2.bf16.msra.mxu0 0
    %2229 = vmatprep.subr.bf16.mxu0 0
    %2230 = vmatpush2.bf16.msra.mxu0 0
    %2231 = vmatprep.subr.bf16.mxu0 0
    %2232 = vmatpush2.bf16.msra.mxu0 0
    %2233 = vmatprep.subr.bf16.mxu0 0
    %2234 = vmatpush2.bf16.msra.mxu0 0
    %2235 = vmatprep.mubr.bf16.mxu0 0
    %2236 = vmatmul.mubr.bf16.gmra.mxu0 %v2201
    %v2237 = vpop.f32.mrf.mxu0
    %v2238 = vadd.f32 %v2143, %v2237
    %v2239 = vpop.f32.mrf.mxu0
    %v2240 = vadd.f32 %v2147, %v2239
    %v2241 = vpop.f32.mrf.mxu0
    %v2242 = vpop.f32.mrf.mxu0
    %2243 = vdwg.mxu0
    %2244 = vmatprep.subr.bf16.mxu0 0
    %2245 = vmatpush1.bf16.msra.mxu0 0
    %2246 = vmatprep.subr.bf16.mxu0 0
    %2247 = vmatpush1.bf16.msra.mxu0 0
    %2248 = vmatprep.subr.bf16.mxu0 0
    %2249 = vmatpush1.bf16.msra.mxu0 0
    %2250 = vmatprep.subr.bf16.mxu0 0
    %2251 = vmatpush1.bf16.msra.mxu0 0
    %2252 = vmatprep.subr.bf16.mxu0 0
    %2253 = vmatpush1.bf16.msra.mxu0 0
    %2254 = vmatprep.subr.bf16.mxu0 0
    %2255 = vmatpush1.bf16.msra.mxu0 0
    %2256 = vmatprep.subr.bf16.mxu0 %v2191
    %2257 = vmatpush1.bf16.msra.mxu0 %v2190
    %2258 = vmatprep.subr.bf16.mxu0 %v2187
    %2259 = vmatpush1.bf16.msra.mxu0 %v2186
    %2260 = vmatprep.subr.bf16.mxu0 0
    %2261 = vmatpush2.bf16.msra.mxu0 0
    %2262 = vmatprep.subr.bf16.mxu0 0
    %2263 = vmatpush2.bf16.msra.mxu0 0
    %2264 = vmatprep.subr.bf16.mxu0 0
    %2265 = vmatpush2.bf16.msra.mxu0 0
    %2266 = vmatprep.subr.bf16.mxu0 0
    %2267 = vmatpush2.bf16.msra.mxu0 0
    %2268 = vmatprep.subr.bf16.mxu0 0
    %2269 = vmatpush2.bf16.msra.mxu0 0
    %2270 = vmatprep.subr.bf16.mxu0 0
    %2271 = vmatpush2.bf16.msra.mxu0 0
    %2272 = vmatprep.subr.bf16.mxu0 0
    %2273 = vmatpush2.bf16.msra.mxu0 0
    %2274 = vmatprep.subr.bf16.mxu0 0
    %2275 = vmatpush2.bf16.msra.mxu0 0
    %2276 = vmatprep.mubr.bf16.mxu0 0
    %2277 = vmatmul.mubr.bf16.gmra.mxu0 %v2201
    %v2278 = vpop.f32.mrf.mxu0
    %v2279 = vadd.f32 %v2151, %v2278
    %v2280 = vpop.f32.mrf.mxu0
    %v2281 = vadd.f32 %v2155, %v2280
    %v2282 = vpop.f32.mrf.mxu0
    %v2283 = vpop.f32.mrf.mxu0
    %2284 = vdwg.mxu0
    %2285 = vst [vmem:[#allocation3 + $0xa0] sm:$0xff] %v2238
    %2286 = vst [vmem:[#allocation3 + $0xa8] sm:$0xff] %v2240
    %2287 = vst [vmem:[#allocation3 + $0xb0] sm:$0xff] %v2279
    %2288 = vst [vmem:[#allocation3 + $0xb8] sm:$0xff] %v2281
    %v2289 = vld [vmem:[#allocation2 + $0xc0] sm:$0xff]
    %v2290 = vld [vmem:[#allocation2 + $0xc8] sm:$0xff]
    %v2291 = vld [vmem:[#allocation2 + $0xd0] sm:$0xff]
    %v2292 = vld [vmem:[#allocation2 + $0xd8] sm:$0xff]
    %v2293 = vld [vmem:[%s2] sm:$0xff]
    %v2294 = vld [vmem:[%s2 + $0x8] sm:$0xff]
    %v2295 = vld [vmem:[%s2 + $0x10] sm:$0xff]
    %v2296 = vld [vmem:[%s2 + $0x18] sm:$0xff]
    %v2297 = vld [vmem:[%s2 + $0x20] sm:$0xff]
    %v2298 = vld [vmem:[%s2 + $0x28] sm:$0xff]
    %v2299 = vld [vmem:[%s2 + $0x30] sm:$0xff]
    %v2300 = vld [vmem:[%s2 + $0x38] sm:$0xff]
    %v2309 = vunpack.c.l.b16 %v2293
    %v2310 = vunpack.c.h.b16 %v2293
    %v2311 = vunpack.c.l.b16 %v2294
    %v2312 = vunpack.c.h.b16 %v2294
    %v2313 = vunpack.c.l.b16 %v2295
    %v2314 = vunpack.c.h.b16 %v2295
    %v2315 = vunpack.c.l.b16 %v2296
    %v2316 = vunpack.c.h.b16 %v2296
    %v2317 = vunpack.c.l.b16 %v2297
    %v2318 = vunpack.c.h.b16 %v2297
    %v2319 = vunpack.c.l.b16 %v2298
    %v2320 = vunpack.c.h.b16 %v2298
    %v2321 = vunpack.c.l.b16 %v2299
    %v2322 = vunpack.c.h.b16 %v2299
    %v2323 = vunpack.c.l.b16 %v2300
    %v2324 = vunpack.c.h.b16 %v2300
    %v2325 = vpack.c.b16 %v2313, %v2309
    %v2326 = vpack.c.b16 %v2314, %v2310
    %v2327 = vpack.c.b16 %v2315, %v2311
    %v2328 = vpack.c.b16 %v2316, %v2312
    %v2329 = vpack.c.b16 %v2321, %v2317
    %v2330 = vpack.c.b16 %v2322, %v2318
    %v2331 = vpack.c.b16 %v2323, %v2319
    %v2332 = vpack.c.b16 %v2324, %v2320
    %2341 = vmatprep.subr.bf16.mxu0 0
    %2342 = vmatpush1.bf16.msra.mxu0 0
    %2343 = vmatprep.subr.bf16.mxu0 0
    %2344 = vmatpush1.bf16.msra.mxu0 0
    %2345 = vmatprep.subr.bf16.mxu0 0
    %2346 = vmatpush1.bf16.msra.mxu0 0
    %2347 = vmatprep.subr.bf16.mxu0 0
    %2348 = vmatpush1.bf16.msra.mxu0 0
    %2349 = vmatprep.subr.bf16.mxu0 0
    %2350 = vmatpush1.bf16.msra.mxu0 0
    %2351 = vmatprep.subr.bf16.mxu0 0
    %2352 = vmatpush1.bf16.msra.mxu0 0
    %2353 = vmatprep.subr.bf16.mxu0 %v2330
    %2354 = vmatpush1.bf16.msra.mxu0 %v2329
    %2355 = vmatprep.subr.bf16.mxu0 %v2326
    %2356 = vmatpush1.bf16.msra.mxu0 %v2325
    %2357 = vmatprep.subr.bf16.mxu0 0
    %2358 = vmatpush2.bf16.msra.mxu0 0
    %2359 = vmatprep.subr.bf16.mxu0 0
    %2360 = vmatpush2.bf16.msra.mxu0 0
    %2361 = vmatprep.subr.bf16.mxu0 0
    %2362 = vmatpush2.bf16.msra.mxu0 0
    %2363 = vmatprep.subr.bf16.mxu0 0
    %2364 = vmatpush2.bf16.msra.mxu0 0
    %2365 = vmatprep.subr.bf16.mxu0 0
    %2366 = vmatpush2.bf16.msra.mxu0 0
    %2367 = vmatprep.subr.bf16.mxu0 0
    %2368 = vmatpush2.bf16.msra.mxu0 0
    %2369 = vmatprep.subr.bf16.mxu0 0
    %2370 = vmatpush2.bf16.msra.mxu0 0
    %2371 = vmatprep.subr.bf16.mxu0 0
    %2372 = vmatpush2.bf16.msra.mxu0 0
    %2373 = vmatprep.mubr.bf16.mxu0 0
    %2374 = vmatmul.mubr.bf16.gmra.mxu0 %v2201
    %v2375 = vpop.f32.mrf.mxu0
    %v2376 = vadd.f32 0.0, %v2375
    %v2377 = vpop.f32.mrf.mxu0
    %v2378 = vadd.f32 0.0, %v2377
    %v2379 = vpop.f32.mrf.mxu0
    %v2380 = vpop.f32.mrf.mxu0
    %2381 = vdwg.mxu0
    %2382 = vmatprep.subr.bf16.mxu0 0
    %2383 = vmatpush1.bf16.msra.mxu0 0
    %2384 = vmatprep.subr.bf16.mxu0 0
    %2385 = vmatpush1.bf16.msra.mxu0 0
    %2386 = vmatprep.subr.bf16.mxu0 0
    %2387 = vmatpush1.bf16.msra.mxu0 0
    %2388 = vmatprep.subr.bf16.mxu0 0
    %2389 = vmatpush1.bf16.msra.mxu0 0
    %2390 = vmatprep.subr.bf16.mxu0 0
    %2391 = vmatpush1.bf16.msra.mxu0 0
    %2392 = vmatprep.subr.bf16.mxu0 0
    %2393 = vmatpush1.bf16.msra.mxu0 0
    %2394 = vmatprep.subr.bf16.mxu0 %v2332
    %2395 = vmatpush1.bf16.msra.mxu0 %v2331
    %2396 = vmatprep.subr.bf16.mxu0 %v2328
    %2397 = vmatpush1.bf16.msra.mxu0 %v2327
    %2398 = vmatprep.subr.bf16.mxu0 0
    %2399 = vmatpush2.bf16.msra.mxu0 0
    %2400 = vmatprep.subr.bf16.mxu0 0
    %2401 = vmatpush2.bf16.msra.mxu0 0
    %2402 = vmatprep.subr.bf16.mxu0 0
    %2403 = vmatpush2.bf16.msra.mxu0 0
    %2404 = vmatprep.subr.bf16.mxu0 0
    %2405 = vmatpush2.bf16.msra.mxu0 0
    %2406 = vmatprep.subr.bf16.mxu0 0
    %2407 = vmatpush2.bf16.msra.mxu0 0
    %2408 = vmatprep.subr.bf16.mxu0 0
    %2409 = vmatpush2.bf16.msra.mxu0 0
    %2410 = vmatprep.subr.bf16.mxu0 0
    %2411 = vmatpush2.bf16.msra.mxu0 0
    %2412 = vmatprep.subr.bf16.mxu0 0
    %2413 = vmatpush2.bf16.msra.mxu0 0
    %2414 = vmatprep.mubr.bf16.mxu0 0
    %2415 = vmatmul.mubr.bf16.gmra.mxu0 %v2201
    %v2416 = vpop.f32.mrf.mxu0
    %v2417 = vadd.f32 0.0, %v2416
    %v2418 = vpop.f32.mrf.mxu0
    %v2419 = vadd.f32 0.0, %v2418
    %v2420 = vpop.f32.mrf.mxu0
    %v2421 = vpop.f32.mrf.mxu0
    %2422 = vdwg.mxu0
    %v2423 = vadd.f32 %v2289, %v2376
    %v2424 = vadd.f32 %v2290, %v2378
    %v2425 = vadd.f32 %v2291, %v2417
    %v2426 = vadd.f32 %v2292, %v2419
    %v2427 = vxor.u32 %v2423, 2147483648
    %v2428 = vxor.u32 %v2424, 2147483648
    %v2429 = vxor.u32 %v2425, 2147483648
    %v2430 = vmul.f32 %v2427, 1.442695
    %v2431 = vpow.pop %v2430
    %v2432 = vmul.f32 %v2428, 1.442695
    %v2433 = vpow.pop %v2432
    %v2434 = vmul.f32 %v2429, 1.442695
    %v2435 = vpow.pop %v2434
    %v2436 = vadd.f32 %v2431, 1.0
    %v2437 = vadd.f32 %v2433, 1.0
    %v2438 = vadd.f32 %v2435, 1.0
    %v2439 = vrcp.pop %v2436
    %v2440 = vmul.f32 1.0, %v2439
    %v2441 = vrcp.pop %v2437
    %v2442 = vmul.f32 1.0, %v2441
    %v2443 = vrcp.pop %v2438
    %v2444 = vmul.f32 1.0, %v2443
    %v2445 = vtanh.pop %v2426
    %v2446 = vmul.f32 %v2442, %v2126
    %v2447 = vmul.f32 %v2440, %v2445
    %v2448 = vadd.f32 %v2446, %v2447
    %v2449 = vtanh.pop %v2448
    %v2450 = vmul.f32 %v2444, %v2449
    %v2451 = vpack.c.bf16 %v2450, %v2450
    %v2452 = vld [vmem:[#allocation6] sm:$0xff]
    %v2453 = vld [vmem:[#allocation6 + $0x8] sm:$0xff]
    %v2454 = vld [vmem:[#allocation6 + $0x10] sm:$0xff]
    %v2455 = vld [vmem:[#allocation6 + $0x18] sm:$0xff]
    %v2456 = vld [vmem:[#allocation6 + $0x20] sm:$0xff]
    %v2457 = vld [vmem:[#allocation6 + $0x28] sm:$0xff]
    %v2458 = vld [vmem:[#allocation6 + $0x30] sm:$0xff]
    %v2459 = vld [vmem:[#allocation6 + $0x38] sm:$0xff]
    %v2460 = vld [vmem:[%s6] sm:$0xf]
    %v2462 = vlaneseq
    %v2463 = vshrl.u32 %v2462, 7
    %v2464 = vsub.s32 0, %v2463
    %v2465 = vrot.slane %v2460, %v2464
    %v2466 = vlaneseq
    %v2467 = vshrl.u32 %v2466, 7
    %v2468 = vsub.s32 1, %v2467
    %v2469 = vrot.slane %v2460, %v2468
    %v2470 = vlaneseq
    %v2471 = vshrl.u32 %v2470, 7
    %v2472 = vsub.s32 2, %v2471
    %v2473 = vrot.slane %v2460, %v2472
    %v2474 = vlaneseq
    %v2475 = vshrl.u32 %v2474, 7
    %v2476 = vsub.s32 3, %v2475
    %v2477 = vrot.slane %v2460, %v2476
    %v2490 = vunpack.c.l.b16 %v2452
    %v2491 = vunpack.c.h.b16 %v2452
    %v2492 = vunpack.c.l.b16 %v2453
    %v2493 = vunpack.c.h.b16 %v2453
    %v2494 = vunpack.c.l.b16 %v2454
    %v2495 = vunpack.c.h.b16 %v2454
    %v2496 = vunpack.c.l.b16 %v2455
    %v2497 = vunpack.c.h.b16 %v2455
    %v2498 = vunpack.c.l.b16 %v2456
    %v2499 = vunpack.c.h.b16 %v2456
    %v2500 = vunpack.c.l.b16 %v2457
    %v2501 = vunpack.c.h.b16 %v2457
    %v2502 = vunpack.c.l.b16 %v2458
    %v2503 = vunpack.c.h.b16 %v2458
    %v2504 = vunpack.c.l.b16 %v2459
    %v2505 = vunpack.c.h.b16 %v2459
    %v2506 = vpack.c.b16 %v2494, %v2490
    %v2507 = vpack.c.b16 %v2495, %v2491
    %v2508 = vpack.c.b16 %v2496, %v2492
    %v2509 = vpack.c.b16 %v2497, %v2493
    %v2510 = vpack.c.b16 %v2502, %v2498
    %v2511 = vpack.c.b16 %v2503, %v2499
    %v2512 = vpack.c.b16 %v2504, %v2500
    %v2513 = vpack.c.b16 %v2505, %v2501
    %v2523 = vsel %vm405, %v2451, 0
    %2525 = vmatprep.subr.bf16.mxu0 0
    %2526 = vmatpush1.bf16.msra.mxu0 0
    %2527 = vmatprep.subr.bf16.mxu0 0
    %2528 = vmatpush1.bf16.msra.mxu0 0
    %2529 = vmatprep.subr.bf16.mxu0 0
    %2530 = vmatpush1.bf16.msra.mxu0 0
    %2531 = vmatprep.subr.bf16.mxu0 0
    %2532 = vmatpush1.bf16.msra.mxu0 0
    %2533 = vmatprep.subr.bf16.mxu0 0
    %2534 = vmatpush1.bf16.msra.mxu0 0
    %2535 = vmatprep.subr.bf16.mxu0 0
    %2536 = vmatpush1.bf16.msra.mxu0 0
    %2537 = vmatprep.subr.bf16.mxu0 %v2511
    %2538 = vmatpush1.bf16.msra.mxu0 %v2510
    %2539 = vmatprep.subr.bf16.mxu0 %v2507
    %2540 = vmatpush1.bf16.msra.mxu0 %v2506
    %2541 = vmatprep.subr.bf16.mxu0 0
    %2542 = vmatpush2.bf16.msra.mxu0 0
    %2543 = vmatprep.subr.bf16.mxu0 0
    %2544 = vmatpush2.bf16.msra.mxu0 0
    %2545 = vmatprep.subr.bf16.mxu0 0
    %2546 = vmatpush2.bf16.msra.mxu0 0
    %2547 = vmatprep.subr.bf16.mxu0 0
    %2548 = vmatpush2.bf16.msra.mxu0 0
    %2549 = vmatprep.subr.bf16.mxu0 0
    %2550 = vmatpush2.bf16.msra.mxu0 0
    %2551 = vmatprep.subr.bf16.mxu0 0
    %2552 = vmatpush2.bf16.msra.mxu0 0
    %2553 = vmatprep.subr.bf16.mxu0 0
    %2554 = vmatpush2.bf16.msra.mxu0 0
    %2555 = vmatprep.subr.bf16.mxu0 0
    %2556 = vmatpush2.bf16.msra.mxu0 0
    %2557 = vmatprep.mubr.bf16.mxu0 0
    %2558 = vmatmul.mubr.bf16.gmra.mxu0 %v2523
    %v2559 = vpop.f32.mrf.mxu0
    %v2560 = vadd.f32 %v2465, %v2559
    %v2561 = vpop.f32.mrf.mxu0
    %v2562 = vadd.f32 %v2469, %v2561
    %v2563 = vpop.f32.mrf.mxu0
    %v2564 = vpop.f32.mrf.mxu0
    %2565 = vdwg.mxu0
    %2566 = vmatprep.subr.bf16.mxu0 0
    %2567 = vmatpush1.bf16.msra.mxu0 0
    %2568 = vmatprep.subr.bf16.mxu0 0
    %2569 = vmatpush1.bf16.msra.mxu0 0
    %2570 = vmatprep.subr.bf16.mxu0 0
    %2571 = vmatpush1.bf16.msra.mxu0 0
    %2572 = vmatprep.subr.bf16.mxu0 0
    %2573 = vmatpush1.bf16.msra.mxu0 0
    %2574 = vmatprep.subr.bf16.mxu0 0
    %2575 = vmatpush1.bf16.msra.mxu0 0
    %2576 = vmatprep.subr.bf16.mxu0 0
    %2577 = vmatpush1.bf16.msra.mxu0 0
    %2578 = vmatprep.subr.bf16.mxu0 %v2513
    %2579 = vmatpush1.bf16.msra.mxu0 %v2512
    %2580 = vmatprep.subr.bf16.mxu0 %v2509
    %2581 = vmatpush1.bf16.msra.mxu0 %v2508
    %2582 = vmatprep.subr.bf16.mxu0 0
    %2583 = vmatpush2.bf16.msra.mxu0 0
    %2584 = vmatprep.subr.bf16.mxu0 0
    %2585 = vmatpush2.bf16.msra.mxu0 0
    %2586 = vmatprep.subr.bf16.mxu0 0
    %2587 = vmatpush2.bf16.msra.mxu0 0
    %2588 = vmatprep.subr.bf16.mxu0 0
    %2589 = vmatpush2.bf16.msra.mxu0 0
    %2590 = vmatprep.subr.bf16.mxu0 0
    %2591 = vmatpush2.bf16.msra.mxu0 0
    %2592 = vmatprep.subr.bf16.mxu0 0
    %2593 = vmatpush2.bf16.msra.mxu0 0
    %2594 = vmatprep.subr.bf16.mxu0 0
    %2595 = vmatpush2.bf16.msra.mxu0 0
    %2596 = vmatprep.subr.bf16.mxu0 0
    %2597 = vmatpush2.bf16.msra.mxu0 0
    %2598 = vmatprep.mubr.bf16.mxu0 0
    %2599 = vmatmul.mubr.bf16.gmra.mxu0 %v2523
    %v2600 = vpop.f32.mrf.mxu0
    %v2601 = vadd.f32 %v2473, %v2600
    %v2602 = vpop.f32.mrf.mxu0
    %v2603 = vadd.f32 %v2477, %v2602
    %v2604 = vpop.f32.mrf.mxu0
    %v2605 = vpop.f32.mrf.mxu0
    %2606 = vdwg.mxu0
    %2607 = vst [vmem:[#allocation3 + $0xc0] sm:$0xff] %v2560
    %2608 = vst [vmem:[#allocation3 + $0xc8] sm:$0xff] %v2562
    %2609 = vst [vmem:[#allocation3 + $0xd0] sm:$0xff] %v2601
    %2610 = vst [vmem:[#allocation3 + $0xd8] sm:$0xff] %v2603
    %v2611 = vld [vmem:[#allocation2 + $0xe0] sm:$0xff]
    %v2612 = vld [vmem:[#allocation2 + $0xe8] sm:$0xff]
    %v2613 = vld [vmem:[#allocation2 + $0xf0] sm:$0xff]
    %v2614 = vld [vmem:[#allocation2 + $0xf8] sm:$0xff]
    %v2615 = vld [vmem:[%s2] sm:$0xff]
    %v2616 = vld [vmem:[%s2 + $0x8] sm:$0xff]
    %v2617 = vld [vmem:[%s2 + $0x10] sm:$0xff]
    %v2618 = vld [vmem:[%s2 + $0x18] sm:$0xff]
    %v2619 = vld [vmem:[%s2 + $0x20] sm:$0xff]
    %v2620 = vld [vmem:[%s2 + $0x28] sm:$0xff]
    %v2621 = vld [vmem:[%s2 + $0x30] sm:$0xff]
    %v2622 = vld [vmem:[%s2 + $0x38] sm:$0xff]
    %v2631 = vunpack.c.l.b16 %v2615
    %v2632 = vunpack.c.h.b16 %v2615
    %v2633 = vunpack.c.l.b16 %v2616
    %v2634 = vunpack.c.h.b16 %v2616
    %v2635 = vunpack.c.l.b16 %v2617
    %v2636 = vunpack.c.h.b16 %v2617
    %v2637 = vunpack.c.l.b16 %v2618
    %v2638 = vunpack.c.h.b16 %v2618
    %v2639 = vunpack.c.l.b16 %v2619
    %v2640 = vunpack.c.h.b16 %v2619
    %v2641 = vunpack.c.l.b16 %v2620
    %v2642 = vunpack.c.h.b16 %v2620
    %v2643 = vunpack.c.l.b16 %v2621
    %v2644 = vunpack.c.h.b16 %v2621
    %v2645 = vunpack.c.l.b16 %v2622
    %v2646 = vunpack.c.h.b16 %v2622
    %v2647 = vpack.c.b16 %v2635, %v2631
    %v2648 = vpack.c.b16 %v2636, %v2632
    %v2649 = vpack.c.b16 %v2637, %v2633
    %v2650 = vpack.c.b16 %v2638, %v2634
    %v2651 = vpack.c.b16 %v2643, %v2639
    %v2652 = vpack.c.b16 %v2644, %v2640
    %v2653 = vpack.c.b16 %v2645, %v2641
    %v2654 = vpack.c.b16 %v2646, %v2642
    %2663 = vmatprep.subr.bf16.mxu0 0
    %2664 = vmatpush1.bf16.msra.mxu0 0
    %2665 = vmatprep.subr.bf16.mxu0 0
    %2666 = vmatpush1.bf16.msra.mxu0 0
    %2667 = vmatprep.subr.bf16.mxu0 0
    %2668 = vmatpush1.bf16.msra.mxu0 0
    %2669 = vmatprep.subr.bf16.mxu0 0
    %2670 = vmatpush1.bf16.msra.mxu0 0
    %2671 = vmatprep.subr.bf16.mxu0 0
    %2672 = vmatpush1.bf16.msra.mxu0 0
    %2673 = vmatprep.subr.bf16.mxu0 0
    %2674 = vmatpush1.bf16.msra.mxu0 0
    %2675 = vmatprep.subr.bf16.mxu0 %v2652
    %2676 = vmatpush1.bf16.msra.mxu0 %v2651
    %2677 = vmatprep.subr.bf16.mxu0 %v2648
    %2678 = vmatpush1.bf16.msra.mxu0 %v2647
    %2679 = vmatprep.subr.bf16.mxu0 0
    %2680 = vmatpush2.bf16.msra.mxu0 0
    %2681 = vmatprep.subr.bf16.mxu0 0
    %2682 = vmatpush2.bf16.msra.mxu0 0
    %2683 = vmatprep.subr.bf16.mxu0 0
    %2684 = vmatpush2.bf16.msra.mxu0 0
    %2685 = vmatprep.subr.bf16.mxu0 0
    %2686 = vmatpush2.bf16.msra.mxu0 0
    %2687 = vmatprep.subr.bf16.mxu0 0
    %2688 = vmatpush2.bf16.msra.mxu0 0
    %2689 = vmatprep.subr.bf16.mxu0 0
    %2690 = vmatpush2.bf16.msra.mxu0 0
    %2691 = vmatprep.subr.bf16.mxu0 0
    %2692 = vmatpush2.bf16.msra.mxu0 0
    %2693 = vmatprep.subr.bf16.mxu0 0
    %2694 = vmatpush2.bf16.msra.mxu0 0
    %2695 = vmatprep.mubr.bf16.mxu0 0
    %2696 = vmatmul.mubr.bf16.gmra.mxu0 %v2523
    %v2697 = vpop.f32.mrf.mxu0
    %v2698 = vadd.f32 0.0, %v2697
    %v2699 = vpop.f32.mrf.mxu0
    %v2700 = vadd.f32 0.0, %v2699
    %v2701 = vpop.f32.mrf.mxu0
    %v2702 = vpop.f32.mrf.mxu0
    %2703 = vdwg.mxu0
    %2704 = vmatprep.subr.bf16.mxu0 0
    %2705 = vmatpush1.bf16.msra.mxu0 0
    %2706 = vmatprep.subr.bf16.mxu0 0
    %2707 = vmatpush1.bf16.msra.mxu0 0
    %2708 = vmatprep.subr.bf16.mxu0 0
    %2709 = vmatpush1.bf16.msra.mxu0 0
    %2710 = vmatprep.subr.bf16.mxu0 0
    %2711 = vmatpush1.bf16.msra.mxu0 0
    %2712 = vmatprep.subr.bf16.mxu0 0
    %2713 = vmatpush1.bf16.msra.mxu0 0
    %2714 = vmatprep.subr.bf16.mxu0 0
    %2715 = vmatpush1.bf16.msra.mxu0 0
    %2716 = vmatprep.subr.bf16.mxu0 %v2654
    %2717 = vmatpush1.bf16.msra.mxu0 %v2653
    %2718 = vmatprep.subr.bf16.mxu0 %v2650
    %2719 = vmatpush1.bf16.msra.mxu0 %v2649
    %2720 = vmatprep.subr.bf16.mxu0 0
    %2721 = vmatpush2.bf16.msra.mxu0 0
    %2722 = vmatprep.subr.bf16.mxu0 0
    %2723 = vmatpush2.bf16.msra.mxu0 0
    %2724 = vmatprep.subr.bf16.mxu0 0
    %2725 = vmatpush2.bf16.msra.mxu0 0
    %2726 = vmatprep.subr.bf16.mxu0 0
    %2727 = vmatpush2.bf16.msra.mxu0 0
    %2728 = vmatprep.subr.bf16.mxu0 0
    %2729 = vmatpush2.bf16.msra.mxu0 0
    %2730 = vmatprep.subr.bf16.mxu0 0
    %2731 = vmatpush2.bf16.msra.mxu0 0
    %2732 = vmatprep.subr.bf16.mxu0 0
    %2733 = vmatpush2.bf16.msra.mxu0 0
    %2734 = vmatprep.subr.bf16.mxu0 0
    %2735 = vmatpush2.bf16.msra.mxu0 0
    %2736 = vmatprep.mubr.bf16.mxu0 0
    %2737 = vmatmul.mubr.bf16.gmra.mxu0 %v2523
    %v2738 = vpop.f32.mrf.mxu0
    %v2739 = vadd.f32 0.0, %v2738
    %v2740 = vpop.f32.mrf.mxu0
    %v2741 = vadd.f32 0.0, %v2740
    %v2742 = vpop.f32.mrf.mxu0
    %v2743 = vpop.f32.mrf.mxu0
    %2744 = vdwg.mxu0
    %v2745 = vadd.f32 %v2611, %v2698
    %v2746 = vadd.f32 %v2612, %v2700
    %v2747 = vadd.f32 %v2613, %v2739
    %v2748 = vadd.f32 %v2614, %v2741
    %v2749 = vxor.u32 %v2745, 2147483648
    %v2750 = vxor.u32 %v2746, 2147483648
    %v2751 = vxor.u32 %v2747, 2147483648
    %v2752 = vmul.f32 %v2749, 1.442695
    %v2753 = vpow.pop %v2752
    %v2754 = vmul.f32 %v2750, 1.442695
    %v2755 = vpow.pop %v2754
    %v2756 = vmul.f32 %v2751, 1.442695
    %v2757 = vpow.pop %v2756
    %v2758 = vadd.f32 %v2753, 1.0
    %v2759 = vadd.f32 %v2755, 1.0
    %v2760 = vadd.f32 %v2757, 1.0
    %v2761 = vrcp.pop %v2758
    %v2762 = vmul.f32 1.0, %v2761
    %v2763 = vrcp.pop %v2759
    %v2764 = vmul.f32 1.0, %v2763
    %v2765 = vrcp.pop %v2760
    %v2766 = vmul.f32 1.0, %v2765
    %v2767 = vtanh.pop %v2748
    %v2768 = vmul.f32 %v2764, %v2448
    %v2769 = vmul.f32 %v2762, %v2767
    %v2770 = vadd.f32 %v2768, %v2769
    %v2771 = vtanh.pop %v2770
    %v2772 = vmul.f32 %v2766, %v2771
    %v2773 = vpack.c.bf16 %v2772, %v2772
    %v2774 = vld [vmem:[#allocation6] sm:$0xff]
    %v2775 = vld [vmem:[#allocation6 + $0x8] sm:$0xff]
    %v2776 = vld [vmem:[#allocation6 + $0x10] sm:$0xff]
    %v2777 = vld [vmem:[#allocation6 + $0x18] sm:$0xff]
    %v2778 = vld [vmem:[#allocation6 + $0x20] sm:$0xff]
    %v2779 = vld [vmem:[#allocation6 + $0x28] sm:$0xff]
    %v2780 = vld [vmem:[#allocation6 + $0x30] sm:$0xff]
    %v2781 = vld [vmem:[#allocation6 + $0x38] sm:$0xff]
    %v2782 = vld [vmem:[%s6] sm:$0xf]
    %v2784 = vlaneseq
    %v2785 = vshrl.u32 %v2784, 7
    %v2786 = vsub.s32 0, %v2785
    %v2787 = vrot.slane %v2782, %v2786
    %v2788 = vlaneseq
    %v2789 = vshrl.u32 %v2788, 7
    %v2790 = vsub.s32 1, %v2789
    %v2791 = vrot.slane %v2782, %v2790
    %v2792 = vlaneseq
    %v2793 = vshrl.u32 %v2792, 7
    %v2794 = vsub.s32 2, %v2793
    %v2795 = vrot.slane %v2782, %v2794
    %v2796 = vlaneseq
    %v2797 = vshrl.u32 %v2796, 7
    %v2798 = vsub.s32 3, %v2797
    %v2799 = vrot.slane %v2782, %v2798
    %v2812 = vunpack.c.l.b16 %v2774
    %v2813 = vunpack.c.h.b16 %v2774
    %v2814 = vunpack.c.l.b16 %v2775
    %v2815 = vunpack.c.h.b16 %v2775
    %v2816 = vunpack.c.l.b16 %v2776
    %v2817 = vunpack.c.h.b16 %v2776
    %v2818 = vunpack.c.l.b16 %v2777
    %v2819 = vunpack.c.h.b16 %v2777
    %v2820 = vunpack.c.l.b16 %v2778
    %v2821 = vunpack.c.h.b16 %v2778
    %v2822 = vunpack.c.l.b16 %v2779
    %v2823 = vunpack.c.h.b16 %v2779
    %v2824 = vunpack.c.l.b16 %v2780
    %v2825 = vunpack.c.h.b16 %v2780
    %v2826 = vunpack.c.l.b16 %v2781
    %v2827 = vunpack.c.h.b16 %v2781
    %v2828 = vpack.c.b16 %v2816, %v2812
    %v2829 = vpack.c.b16 %v2817, %v2813
    %v2830 = vpack.c.b16 %v2818, %v2814
    %v2831 = vpack.c.b16 %v2819, %v2815
    %v2832 = vpack.c.b16 %v2824, %v2820
    %v2833 = vpack.c.b16 %v2825, %v2821
    %v2834 = vpack.c.b16 %v2826, %v2822
    %v2835 = vpack.c.b16 %v2827, %v2823
    %v2845 = vsel %vm405, %v2773, 0
    %2847 = vmatprep.subr.bf16.mxu0 0
    %2848 = vmatpush1.bf16.msra.mxu0 0
    %2849 = vmatprep.subr.bf16.mxu0 0
    %2850 = vmatpush1.bf16.msra.mxu0 0
    %2851 = vmatprep.subr.bf16.mxu0 0
    %2852 = vmatpush1.bf16.msra.mxu0 0
    %2853 = vmatprep.subr.bf16.mxu0 0
    %2854 = vmatpush1.bf16.msra.mxu0 0
    %2855 = vmatprep.subr.bf16.mxu0 0
    %2856 = vmatpush1.bf16.msra.mxu0 0
    %2857 = vmatprep.subr.bf16.mxu0 0
    %2858 = vmatpush1.bf16.msra.mxu0 0
    %2859 = vmatprep.subr.bf16.mxu0 %v2833
    %2860 = vmatpush1.bf16.msra.mxu0 %v2832
    %2861 = vmatprep.subr.bf16.mxu0 %v2829
    %2862 = vmatpush1.bf16.msra.mxu0 %v2828
    %2863 = vmatprep.subr.bf16.mxu0 0
    %2864 = vmatpush2.bf16.msra.mxu0 0
    %2865 = vmatprep.subr.bf16.mxu0 0
    %2866 = vmatpush2.bf16.msra.mxu0 0
    %2867 = vmatprep.subr.bf16.mxu0 0
    %2868 = vmatpush2.bf16.msra.mxu0 0
    %2869 = vmatprep.subr.bf16.mxu0 0
    %2870 = vmatpush2.bf16.msra.mxu0 0
    %2871 = vmatprep.subr.bf16.mxu0 0
    %2872 = vmatpush2.bf16.msra.mxu0 0
    %2873 = vmatprep.subr.bf16.mxu0 0
    %2874 = vmatpush2.bf16.msra.mxu0 0
    %2875 = vmatprep.subr.bf16.mxu0 0
    %2876 = vmatpush2.bf16.msra.mxu0 0
    %2877 = vmatprep.subr.bf16.mxu0 0
    %2878 = vmatpush2.bf16.msra.mxu0 0
    %2879 = vmatprep.mubr.bf16.mxu0 0
    %2880 = vmatmul.mubr.bf16.gmra.mxu0 %v2845
    %v2881 = vpop.f32.mrf.mxu0
    %v2882 = vadd.f32 %v2787, %v2881
    %v2883 = vpop.f32.mrf.mxu0
    %v2884 = vadd.f32 %v2791, %v2883
    %v2885 = vpop.f32.mrf.mxu0
    %v2886 = vpop.f32.mrf.mxu0
    %2887 = vdwg.mxu0
    %2888 = vmatprep.subr.bf16.mxu0 0
    %2889 = vmatpush1.bf16.msra.mxu0 0
    %2890 = vmatprep.subr.bf16.mxu0 0
    %2891 = vmatpush1.bf16.msra.mxu0 0
    %2892 = vmatprep.subr.bf16.mxu0 0
    %2893 = vmatpush1.bf16.msra.mxu0 0
    %2894 = vmatprep.subr.bf16.mxu0 0
    %2895 = vmatpush1.bf16.msra.mxu0 0
    %2896 = vmatprep.subr.bf16.mxu0 0
    %2897 = vmatpush1.bf16.msra.mxu0 0
    %2898 = vmatprep.subr.bf16.mxu0 0
    %2899 = vmatpush1.bf16.msra.mxu0 0
    %2900 = vmatprep.subr.bf16.mxu0 %v2835
    %2901 = vmatpush1.bf16.msra.mxu0 %v2834
    %2902 = vmatprep.subr.bf16.mxu0 %v2831
    %2903 = vmatpush1.bf16.msra.mxu0 %v2830
    %2904 = vmatprep.subr.bf16.mxu0 0
    %2905 = vmatpush2.bf16.msra.mxu0 0
    %2906 = vmatprep.subr.bf16.mxu0 0
    %2907 = vmatpush2.bf16.msra.mxu0 0
    %2908 = vmatprep.subr.bf16.mxu0 0
    %2909 = vmatpush2.bf16.msra.mxu0 0
    %2910 = vmatprep.subr.bf16.mxu0 0
    %2911 = vmatpush2.bf16.msra.mxu0 0
    %2912 = vmatprep.subr.bf16.mxu0 0
    %2913 = vmatpush2.bf16.msra.mxu0 0
    %2914 = vmatprep.subr.bf16.mxu0 0
    %2915 = vmatpush2.bf16.msra.mxu0 0
    %2916 = vmatprep.subr.bf16.mxu0 0
    %2917 = vmatpush2.bf16.msra.mxu0 0
    %2918 = vmatprep.subr.bf16.mxu0 0
    %2919 = vmatpush2.bf16.msra.mxu0 0
    %2920 = vmatprep.mubr.bf16.mxu0 0
    %2921 = vmatmul.mubr.bf16.gmra.mxu0 %v2845
    %v2922 = vpop.f32.mrf.mxu0
    %v2923 = vadd.f32 %v2795, %v2922
    %v2924 = vpop.f32.mrf.mxu0
    %v2925 = vadd.f32 %v2799, %v2924
    %v2926 = vpop.f32.mrf.mxu0
    %v2927 = vpop.f32.mrf.mxu0
    %2928 = vdwg.mxu0
    %2929 = vst [vmem:[#allocation3 + $0xe0] sm:$0xff] %v2882
    %2930 = vst [vmem:[#allocation3 + $0xe8] sm:$0xff] %v2884
    %2931 = vst [vmem:[#allocation3 + $0xf0] sm:$0xff] %v2923
    %2932 = vst [vmem:[#allocation3 + $0xf8] sm:$0xff] %v2925
    %v2933 = vld [vmem:[#allocation3] sm:$0xff]
    %v2934 = vld [vmem:[#allocation3 + $0x8] sm:$0xff]
    %v2935 = vld [vmem:[#allocation3 + $0x10] sm:$0xff]
    %v2936 = vld [vmem:[#allocation3 + $0x18] sm:$0xff]
    %v2937 = vld [vmem:[#allocation8] sm:$0xff]
    %v2938 = vld [vmem:[#allocation8 + $0x8] sm:$0xff]
    %v2939 = vld [vmem:[#allocation8 + $0x10] sm:$0xff]
    %v2940 = vld [vmem:[#allocation8 + $0x18] sm:$0xff]
    %v2941 = vld [vmem:[#allocation8 + $0x20] sm:$0xff]
    %v2942 = vld [vmem:[#allocation8 + $0x28] sm:$0xff]
    %v2943 = vld [vmem:[#allocation8 + $0x30] sm:$0xff]
    %v2944 = vld [vmem:[#allocation8 + $0x38] sm:$0xff]
    %v2953 = vunpack.c.l.b16 %v2937
    %v2954 = vunpack.c.h.b16 %v2937
    %v2955 = vunpack.c.l.b16 %v2938
    %v2956 = vunpack.c.h.b16 %v2938
    %v2957 = vunpack.c.l.b16 %v2939
    %v2958 = vunpack.c.h.b16 %v2939
    %v2959 = vunpack.c.l.b16 %v2940
    %v2960 = vunpack.c.h.b16 %v2940
    %v2961 = vunpack.c.l.b16 %v2941
    %v2962 = vunpack.c.h.b16 %v2941
    %v2963 = vunpack.c.l.b16 %v2942
    %v2964 = vunpack.c.h.b16 %v2942
    %v2965 = vunpack.c.l.b16 %v2943
    %v2966 = vunpack.c.h.b16 %v2943
    %v2967 = vunpack.c.l.b16 %v2944
    %v2968 = vunpack.c.h.b16 %v2944
    %v2969 = vpack.c.b16 %v2957, %v2953
    %v2970 = vpack.c.b16 %v2958, %v2954
    %v2971 = vpack.c.b16 %v2959, %v2955
    %v2972 = vpack.c.b16 %v2960, %v2956
    %v2973 = vpack.c.b16 %v2965, %v2961
    %v2974 = vpack.c.b16 %v2966, %v2962
    %v2975 = vpack.c.b16 %v2967, %v2963
    %v2976 = vpack.c.b16 %v2968, %v2964
    %2985 = vmatprep.subr.bf16.mxu0 0
    %2986 = vmatpush1.bf16.msra.mxu0 0
    %2987 = vmatprep.subr.bf16.mxu0 0
    %2988 = vmatpush1.bf16.msra.mxu0 0
    %2989 = vmatprep.subr.bf16.mxu0 0
    %2990 = vmatpush1.bf16.msra.mxu0 0
    %2991 = vmatprep.subr.bf16.mxu0 0
    %2992 = vmatpush1.bf16.msra.mxu0 0
    %2993 = vmatprep.subr.bf16.mxu0 0
    %2994 = vmatpush1.bf16.msra.mxu0 0
    %2995 = vmatprep.subr.bf16.mxu0 0
    %2996 = vmatpush1.bf16.msra.mxu0 0
    %2997 = vmatprep.subr.bf16.mxu0 %v2974
    %2998 = vmatpush1.bf16.msra.mxu0 %v2973
    %2999 = vmatprep.subr.bf16.mxu0 %v2970
    %3000 = vmatpush1.bf16.msra.mxu0 %v2969
    %3001 = vmatprep.subr.bf16.mxu0 0
    %3002 = vmatpush2.bf16.msra.mxu0 0
    %3003 = vmatprep.subr.bf16.mxu0 0
    %3004 = vmatpush2.bf16.msra.mxu0 0
    %3005 = vmatprep.subr.bf16.mxu0 0
    %3006 = vmatpush2.bf16.msra.mxu0 0
    %3007 = vmatprep.subr.bf16.mxu0 0
    %3008 = vmatpush2.bf16.msra.mxu0 0
    %3009 = vmatprep.subr.bf16.mxu0 0
    %3010 = vmatpush2.bf16.msra.mxu0 0
    %3011 = vmatprep.subr.bf16.mxu0 0
    %3012 = vmatpush2.bf16.msra.mxu0 0
    %3013 = vmatprep.subr.bf16.mxu0 0
    %3014 = vmatpush2.bf16.msra.mxu0 0
    %3015 = vmatprep.subr.bf16.mxu0 0
    %3016 = vmatpush2.bf16.msra.mxu0 0
    %3017 = vmatprep.mubr.bf16.mxu0 0
    %3018 = vmatmul.mubr.bf16.gmra.mxu0 %v407
    %v3019 = vpop.f32.mrf.mxu0
    %v3020 = vadd.f32 0.0, %v3019
    %v3021 = vpop.f32.mrf.mxu0
    %v3022 = vadd.f32 0.0, %v3021
    %v3023 = vpop.f32.mrf.mxu0
    %v3024 = vpop.f32.mrf.mxu0
    %3025 = vdwg.mxu0
    %3026 = vmatprep.subr.bf16.mxu0 0
    %3027 = vmatpush1.bf16.msra.mxu0 0
    %3028 = vmatprep.subr.bf16.mxu0 0
    %3029 = vmatpush1.bf16.msra.mxu0 0
    %3030 = vmatprep.subr.bf16.mxu0 0
    %3031 = vmatpush1.bf16.msra.mxu0 0
    %3032 = vmatprep.subr.bf16.mxu0 0
    %3033 = vmatpush1.bf16.msra.mxu0 0
    %3034 = vmatprep.subr.bf16.mxu0 0
    %3035 = vmatpush1.bf16.msra.mxu0 0
    %3036 = vmatprep.subr.bf16.mxu0 0
    %3037 = vmatpush1.bf16.msra.mxu0 0
    %3038 = vmatprep.subr.bf16.mxu0 %v2976
    %3039 = vmatpush1.bf16.msra.mxu0 %v2975
    %3040 = vmatprep.subr.bf16.mxu0 %v2972
    %3041 = vmatpush1.bf16.msra.mxu0 %v2971
    %3042 = vmatprep.subr.bf16.mxu0 0
    %3043 = vmatpush2.bf16.msra.mxu0 0
    %3044 = vmatprep.subr.bf16.mxu0 0
    %3045 = vmatpush2.bf16.msra.mxu0 0
    %3046 = vmatprep.subr.bf16.mxu0 0
    %3047 = vmatpush2.bf16.msra.mxu0 0
    %3048 = vmatprep.subr.bf16.mxu0 0
    %3049 = vmatpush2.bf16.msra.mxu0 0
    %3050 = vmatprep.subr.bf16.mxu0 0
    %3051 = vmatpush2.bf16.msra.mxu0 0
    %3052 = vmatprep.subr.bf16.mxu0 0
    %3053 = vmatpush2.bf16.msra.mxu0 0
    %3054 = vmatprep.subr.bf16.mxu0 0
    %3055 = vmatpush2.bf16.msra.mxu0 0
    %3056 = vmatprep.subr.bf16.mxu0 0
    %3057 = vmatpush2.bf16.msra.mxu0 0
    %3058 = vmatprep.mubr.bf16.mxu0 0
    %3059 = vmatmul.mubr.bf16.gmra.mxu0 %v407
    %v3060 = vpop.f32.mrf.mxu0
    %v3061 = vadd.f32 0.0, %v3060
    %v3062 = vpop.f32.mrf.mxu0
    %v3063 = vadd.f32 0.0, %v3062
    %v3064 = vpop.f32.mrf.mxu0
    %v3065 = vpop.f32.mrf.mxu0
    %3066 = vdwg.mxu0
    %v3067 = vadd.f32 %v2933, %v3020
    %v3068 = vadd.f32 %v2934, %v3022
    %v3069 = vadd.f32 %v2935, %v3061
    %v3070 = vadd.f32 %v2936, %v3063
    %v3071 = vxor.u32 %v3067, 2147483648
    %v3072 = vxor.u32 %v3068, 2147483648
    %v3073 = vxor.u32 %v3069, 2147483648
    %v3074 = vmul.f32 %v3071, 1.442695
    %v3075 = vpow.pop %v3074
    %v3076 = vmul.f32 %v3072, 1.442695
    %v3077 = vpow.pop %v3076
    %v3078 = vmul.f32 %v3073, 1.442695
    %v3079 = vpow.pop %v3078
    %v3080 = vadd.f32 %v3075, 1.0
    %v3081 = vadd.f32 %v3077, 1.0
    %v3082 = vadd.f32 %v3079, 1.0
    %v3083 = vrcp.pop %v3080
    %v3084 = vmul.f32 1.0, %v3083
    %v3085 = vrcp.pop %v3081
    %v3086 = vmul.f32 1.0, %v3085
    %v3087 = vrcp.pop %v3082
    %v3088 = vmul.f32 1.0, %v3087
    %v3089 = vtanh.pop %v3070
    %v3090 = vmul.f32 %v3086, 0.0
    %v3091 = vmul.f32 %v3084, %v3089
    %v3092 = vadd.f32 %v3090, %v3091
    %v3093 = vtanh.pop %v3092
    %v3094 = vmul.f32 %v3088, %v3093
    %v3095 = vld [vmem:[#allocation3 + $0x20] sm:$0xff]
    %v3096 = vld [vmem:[#allocation3 + $0x28] sm:$0xff]
    %v3097 = vld [vmem:[#allocation3 + $0x30] sm:$0xff]
    %v3098 = vld [vmem:[#allocation3 + $0x38] sm:$0xff]
    %v3099 = vpack.c.bf16 %v3094, %v3094
    %v3101 = vsel %vm405, %v3099, 0
    %3103 = vmatprep.subr.bf16.mxu0 0
    %3104 = vmatpush1.bf16.msra.mxu0 0
    %3105 = vmatprep.subr.bf16.mxu0 0
    %3106 = vmatpush1.bf16.msra.mxu0 0
    %3107 = vmatprep.subr.bf16.mxu0 0
    %3108 = vmatpush1.bf16.msra.mxu0 0
    %3109 = vmatprep.subr.bf16.mxu0 0
    %3110 = vmatpush1.bf16.msra.mxu0 0
    %3111 = vmatprep.subr.bf16.mxu0 0
    %3112 = vmatpush1.bf16.msra.mxu0 0
    %3113 = vmatprep.subr.bf16.mxu0 0
    %3114 = vmatpush1.bf16.msra.mxu0 0
    %3115 = vmatprep.subr.bf16.mxu0 %v2974
    %3116 = vmatpush1.bf16.msra.mxu0 %v2973
    %3117 = vmatprep.subr.bf16.mxu0 %v2970
    %3118 = vmatpush1.bf16.msra.mxu0 %v2969
    %3119 = vmatprep.subr.bf16.mxu0 0
    %3120 = vmatpush2.bf16.msra.mxu0 0
    %3121 = vmatprep.subr.bf16.mxu0 0
    %3122 = vmatpush2.bf16.msra.mxu0 0
    %3123 = vmatprep.subr.bf16.mxu0 0
    %3124 = vmatpush2.bf16.msra.mxu0 0
    %3125 = vmatprep.subr.bf16.mxu0 0
    %3126 = vmatpush2.bf16.msra.mxu0 0
    %3127 = vmatprep.subr.bf16.mxu0 0
    %3128 = vmatpush2.bf16.msra.mxu0 0
    %3129 = vmatprep.subr.bf16.mxu0 0
    %3130 = vmatpush2.bf16.msra.mxu0 0
    %3131 = vmatprep.subr.bf16.mxu0 0
    %3132 = vmatpush2.bf16.msra.mxu0 0
    %3133 = vmatprep.subr.bf16.mxu0 0
    %3134 = vmatpush2.bf16.msra.mxu0 0
    %3135 = vmatprep.mubr.bf16.mxu0 0
    %3136 = vmatmul.mubr.bf16.gmra.mxu0 %v3101
    %v3137 = vpop.f32.mrf.mxu0
    %v3138 = vadd.f32 0.0, %v3137
    %v3139 = vpop.f32.mrf.mxu0
    %v3140 = vadd.f32 0.0, %v3139
    %v3141 = vpop.f32.mrf.mxu0
    %v3142 = vpop.f32.mrf.mxu0
    %3143 = vdwg.mxu0
    %3144 = vmatprep.subr.bf16.mxu0 0
    %3145 = vmatpush1.bf16.msra.mxu0 0
    %3146 = vmatprep.subr.bf16.mxu0 0
    %3147 = vmatpush1.bf16.msra.mxu0 0
    %3148 = vmatprep.subr.bf16.mxu0 0
    %3149 = vmatpush1.bf16.msra.mxu0 0
    %3150 = vmatprep.subr.bf16.mxu0 0
    %3151 = vmatpush1.bf16.msra.mxu0 0
    %3152 = vmatprep.subr.bf16.mxu0 0
    %3153 = vmatpush1.bf16.msra.mxu0 0
    %3154 = vmatprep.subr.bf16.mxu0 0
    %3155 = vmatpush1.bf16.msra.mxu0 0
    %3156 = vmatprep.subr.bf16.mxu0 %v2976
    %3157 = vmatpush1.bf16.msra.mxu0 %v2975
    %3158 = vmatprep.subr.bf16.mxu0 %v2972
    %3159 = vmatpush1.bf16.msra.mxu0 %v2971
    %3160 = vmatprep.subr.bf16.mxu0 0
    %3161 = vmatpush2.bf16.msra.mxu0 0
    %3162 = vmatprep.subr.bf16.mxu0 0
    %3163 = vmatpush2.bf16.msra.mxu0 0
    %3164 = vmatprep.subr.bf16.mxu0 0
    %3165 = vmatpush2.bf16.msra.mxu0 0
    %3166 = vmatprep.subr.bf16.mxu0 0
    %3167 = vmatpush2.bf16.msra.mxu0 0
    %3168 = vmatprep.subr.bf16.mxu0 0
    %3169 = vmatpush2.bf16.msra.mxu0 0
    %3170 = vmatprep.subr.bf16.mxu0 0
    %3171 = vmatpush2.bf16.msra.mxu0 0
    %3172 = vmatprep.subr.bf16.mxu0 0
    %3173 = vmatpush2.bf16.msra.mxu0 0
    %3174 = vmatprep.subr.bf16.mxu0 0
    %3175 = vmatpush2.bf16.msra.mxu0 0
    %3176 = vmatprep.mubr.bf16.mxu0 0
    %3177 = vmatmul.mubr.bf16.gmra.mxu0 %v3101
    %v3178 = vpop.f32.mrf.mxu0
    %v3179 = vadd.f32 0.0, %v3178
    %v3180 = vpop.f32.mrf.mxu0
    %v3181 = vadd.f32 0.0, %v3180
    %v3182 = vpop.f32.mrf.mxu0
    %v3183 = vpop.f32.mrf.mxu0
    %3184 = vdwg.mxu0
    %v3185 = vadd.f32 %v3095, %v3138
    %v3186 = vadd.f32 %v3096, %v3140
    %v3187 = vadd.f32 %v3097, %v3179
    %v3188 = vadd.f32 %v3098, %v3181
    %v3189 = vxor.u32 %v3185, 2147483648
    %v3190 = vxor.u32 %v3186, 2147483648
    %v3191 = vxor.u32 %v3187, 2147483648
    %v3192 = vmul.f32 %v3189, 1.442695
    %v3193 = vpow.pop %v3192
    %v3194 = vmul.f32 %v3190, 1.442695
    %v3195 = vpow.pop %v3194
    %v3196 = vmul.f32 %v3191, 1.442695
    %v3197 = vpow.pop %v3196
    %v3198 = vadd.f32 %v3193, 1.0
    %v3199 = vadd.f32 %v3195, 1.0
    %v3200 = vadd.f32 %v3197, 1.0
    %v3201 = vrcp.pop %v3198
    %v3202 = vmul.f32 1.0, %v3201
    %v3203 = vrcp.pop %v3199
    %v3204 = vmul.f32 1.0, %v3203
    %v3205 = vrcp.pop %v3200
    %v3206 = vmul.f32 1.0, %v3205
    %v3207 = vtanh.pop %v3188
    %v3208 = vmul.f32 %v3204, %v3092
    %v3209 = vmul.f32 %v3202, %v3207
    %v3210 = vadd.f32 %v3208, %v3209
    %v3211 = vtanh.pop %v3210
    %v3212 = vmul.f32 %v3206, %v3211
    %v3213 = vld [vmem:[#allocation3 + $0x40] sm:$0xff]
    %v3214 = vld [vmem:[#allocation3 + $0x48] sm:$0xff]
    %v3215 = vld [vmem:[#allocation3 + $0x50] sm:$0xff]
    %v3216 = vld [vmem:[#allocation3 + $0x58] sm:$0xff]
    %v3217 = vpack.c.bf16 %v3212, %v3212
    %v3219 = vsel %vm405, %v3217, 0
    %3221 = vmatprep.subr.bf16.mxu0 0
    %3222 = vmatpush1.bf16.msra.mxu0 0
    %3223 = vmatprep.subr.bf16.mxu0 0
    %3224 = vmatpush1.bf16.msra.mxu0 0
    %3225 = vmatprep.subr.bf16.mxu0 0
    %3226 = vmatpush1.bf16.msra.mxu0 0
    %3227 = vmatprep.subr.bf16.mxu0 0
    %3228 = vmatpush1.bf16.msra.mxu0 0
    %3229 = vmatprep.subr.bf16.mxu0 0
    %3230 = vmatpush1.bf16.msra.mxu0 0
    %3231 = vmatprep.subr.bf16.mxu0 0
    %3232 = vmatpush1.bf16.msra.mxu0 0
    %3233 = vmatprep.subr.bf16.mxu0 %v2974
    %3234 = vmatpush1.bf16.msra.mxu0 %v2973
    %3235 = vmatprep.subr.bf16.mxu0 %v2970
    %3236 = vmatpush1.bf16.msra.mxu0 %v2969
    %3237 = vmatprep.subr.bf16.mxu0 0
    %3238 = vmatpush2.bf16.msra.mxu0 0
    %3239 = vmatprep.subr.bf16.mxu0 0
    %3240 = vmatpush2.bf16.msra.mxu0 0
    %3241 = vmatprep.subr.bf16.mxu0 0
    %3242 = vmatpush2.bf16.msra.mxu0 0
    %3243 = vmatprep.subr.bf16.mxu0 0
    %3244 = vmatpush2.bf16.msra.mxu0 0
    %3245 = vmatprep.subr.bf16.mxu0 0
    %3246 = vmatpush2.bf16.msra.mxu0 0
    %3247 = vmatprep.subr.bf16.mxu0 0
    %3248 = vmatpush2.bf16.msra.mxu0 0
    %3249 = vmatprep.subr.bf16.mxu0 0
    %3250 = vmatpush2.bf16.msra.mxu0 0
    %3251 = vmatprep.subr.bf16.mxu0 0
    %3252 = vmatpush2.bf16.msra.mxu0 0
    %3253 = vmatprep.mubr.bf16.mxu0 0
    %3254 = vmatmul.mubr.bf16.gmra.mxu0 %v3219
    %v3255 = vpop.f32.mrf.mxu0
    %v3256 = vadd.f32 0.0, %v3255
    %v3257 = vpop.f32.mrf.mxu0
    %v3258 = vadd.f32 0.0, %v3257
    %v3259 = vpop.f32.mrf.mxu0
    %v3260 = vpop.f32.mrf.mxu0
    %3261 = vdwg.mxu0
    %3262 = vmatprep.subr.bf16.mxu0 0
    %3263 = vmatpush1.bf16.msra.mxu0 0
    %3264 = vmatprep.subr.bf16.mxu0 0
    %3265 = vmatpush1.bf16.msra.mxu0 0
    %3266 = vmatprep.subr.bf16.mxu0 0
    %3267 = vmatpush1.bf16.msra.mxu0 0
    %3268 = vmatprep.subr.bf16.mxu0 0
    %3269 = vmatpush1.bf16.msra.mxu0 0
    %3270 = vmatprep.subr.bf16.mxu0 0
    %3271 = vmatpush1.bf16.msra.mxu0 0
    %3272 = vmatprep.subr.bf16.mxu0 0
    %3273 = vmatpush1.bf16.msra.mxu0 0
    %3274 = vmatprep.subr.bf16.mxu0 %v2976
    %3275 = vmatpush1.bf16.msra.mxu0 %v2975
    %3276 = vmatprep.subr.bf16.mxu0 %v2972
    %3277 = vmatpush1.bf16.msra.mxu0 %v2971
    %3278 = vmatprep.subr.bf16.mxu0 0
    %3279 = vmatpush2.bf16.msra.mxu0 0
    %3280 = vmatprep.subr.bf16.mxu0 0
    %3281 = vmatpush2.bf16.msra.mxu0 0
    %3282 = vmatprep.subr.bf16.mxu0 0
    %3283 = vmatpush2.bf16.msra.mxu0 0
    %3284 = vmatprep.subr.bf16.mxu0 0
    %3285 = vmatpush2.bf16.msra.mxu0 0
    %3286 = vmatprep.subr.bf16.mxu0 0
    %3287 = vmatpush2.bf16.msra.mxu0 0
    %3288 = vmatprep.subr.bf16.mxu0 0
    %3289 = vmatpush2.bf16.msra.mxu0 0
    %3290 = vmatprep.subr.bf16.mxu0 0
    %3291 = vmatpush2.bf16.msra.mxu0 0
    %3292 = vmatprep.subr.bf16.mxu0 0
    %3293 = vmatpush2.bf16.msra.mxu0 0
    %3294 = vmatprep.mubr.bf16.mxu0 0
    %3295 = vmatmul.mubr.bf16.gmra.mxu0 %v3219
    %v3296 = vpop.f32.mrf.mxu0
    %v3297 = vadd.f32 0.0, %v3296
    %v3298 = vpop.f32.mrf.mxu0
    %v3299 = vadd.f32 0.0, %v3298
    %v3300 = vpop.f32.mrf.mxu0
    %v3301 = vpop.f32.mrf.mxu0
    %3302 = vdwg.mxu0
    %v3303 = vadd.f32 %v3213, %v3256
    %v3304 = vadd.f32 %v3214, %v3258
    %v3305 = vadd.f32 %v3215, %v3297
    %v3306 = vadd.f32 %v3216, %v3299
    %v3307 = vxor.u32 %v3303, 2147483648
    %v3308 = vxor.u32 %v3304, 2147483648
    %v3309 = vxor.u32 %v3305, 2147483648
    %v3310 = vmul.f32 %v3307, 1.442695
    %v3311 = vpow.pop %v3310
    %v3312 = vmul.f32 %v3308, 1.442695
    %v3313 = vpow.pop %v3312
    %v3314 = vmul.f32 %v3309, 1.442695
    %v3315 = vpow.pop %v3314
    %v3316 = vadd.f32 %v3311, 1.0
    %v3317 = vadd.f32 %v3313, 1.0
    %v3318 = vadd.f32 %v3315, 1.0
    %v3319 = vrcp.pop %v3316
    %v3320 = vmul.f32 1.0, %v3319
    %v3321 = vrcp.pop %v3317
    %v3322 = vmul.f32 1.0, %v3321
    %v3323 = vrcp.pop %v3318
    %v3324 = vmul.f32 1.0, %v3323
    %v3325 = vtanh.pop %v3306
    %v3326 = vmul.f32 %v3322, %v3210
    %v3327 = vmul.f32 %v3320, %v3325
    %v3328 = vadd.f32 %v3326, %v3327
    %v3329 = vtanh.pop %v3328
    %v3330 = vmul.f32 %v3324, %v3329
    %v3331 = vld [vmem:[#allocation3 + $0x60] sm:$0xff]
    %v3332 = vld [vmem:[#allocation3 + $0x68] sm:$0xff]
    %v3333 = vld [vmem:[#allocation3 + $0x70] sm:$0xff]
    %v3334 = vld [vmem:[#allocation3 + $0x78] sm:$0xff]
    %v3335 = vpack.c.bf16 %v3330, %v3330
    %v3337 = vsel %vm405, %v3335, 0
    %3339 = vmatprep.subr.bf16.mxu0 0
    %3340 = vmatpush1.bf16.msra.mxu0 0
    %3341 = vmatprep.subr.bf16.mxu0 0
    %3342 = vmatpush1.bf16.msra.mxu0 0
    %3343 = vmatprep.subr.bf16.mxu0 0
    %3344 = vmatpush1.bf16.msra.mxu0 0
    %3345 = vmatprep.subr.bf16.mxu0 0
    %3346 = vmatpush1.bf16.msra.mxu0 0
    %3347 = vmatprep.subr.bf16.mxu0 0
    %3348 = vmatpush1.bf16.msra.mxu0 0
    %3349 = vmatprep.subr.bf16.mxu0 0
    %3350 = vmatpush1.bf16.msra.mxu0 0
    %3351 = vmatprep.subr.bf16.mxu0 %v2974
    %3352 = vmatpush1.bf16.msra.mxu0 %v2973
    %3353 = vmatprep.subr.bf16.mxu0 %v2970
    %3354 = vmatpush1.bf16.msra.mxu0 %v2969
    %3355 = vmatprep.subr.bf16.mxu0 0
    %3356 = vmatpush2.bf16.msra.mxu0 0
    %3357 = vmatprep.subr.bf16.mxu0 0
    %3358 = vmatpush2.bf16.msra.mxu0 0
    %3359 = vmatprep.subr.bf16.mxu0 0
    %3360 = vmatpush2.bf16.msra.mxu0 0
    %3361 = vmatprep.subr.bf16.mxu0 0
    %3362 = vmatpush2.bf16.msra.mxu0 0
    %3363 = vmatprep.subr.bf16.mxu0 0
    %3364 = vmatpush2.bf16.msra.mxu0 0
    %3365 = vmatprep.subr.bf16.mxu0 0
    %3366 = vmatpush2.bf16.msra.mxu0 0
    %3367 = vmatprep.subr.bf16.mxu0 0
    %3368 = vmatpush2.bf16.msra.mxu0 0
    %3369 = vmatprep.subr.bf16.mxu0 0
    %3370 = vmatpush2.bf16.msra.mxu0 0
    %3371 = vmatprep.mubr.bf16.mxu0 0
    %3372 = vmatmul.mubr.bf16.gmra.mxu0 %v3337
    %v3373 = vpop.f32.mrf.mxu0
    %v3374 = vadd.f32 0.0, %v3373
    %v3375 = vpop.f32.mrf.mxu0
    %v3376 = vadd.f32 0.0, %v3375
    %v3377 = vpop.f32.mrf.mxu0
    %v3378 = vpop.f32.mrf.mxu0
    %3379 = vdwg.mxu0
    %3380 = vmatprep.subr.bf16.mxu0 0
    %3381 = vmatpush1.bf16.msra.mxu0 0
    %3382 = vmatprep.subr.bf16.mxu0 0
    %3383 = vmatpush1.bf16.msra.mxu0 0
    %3384 = vmatprep.subr.bf16.mxu0 0
    %3385 = vmatpush1.bf16.msra.mxu0 0
    %3386 = vmatprep.subr.bf16.mxu0 0
    %3387 = vmatpush1.bf16.msra.mxu0 0
    %3388 = vmatprep.subr.bf16.mxu0 0
    %3389 = vmatpush1.bf16.msra.mxu0 0
    %3390 = vmatprep.subr.bf16.mxu0 0
    %3391 = vmatpush1.bf16.msra.mxu0 0
    %3392 = vmatprep.subr.bf16.mxu0 %v2976
    %3393 = vmatpush1.bf16.msra.mxu0 %v2975
    %3394 = vmatprep.subr.bf16.mxu0 %v2972
    %3395 = vmatpush1.bf16.msra.mxu0 %v2971
    %3396 = vmatprep.subr.bf16.mxu0 0
    %3397 = vmatpush2.bf16.msra.mxu0 0
    %3398 = vmatprep.subr.bf16.mxu0 0
    %3399 = vmatpush2.bf16.msra.mxu0 0
    %3400 = vmatprep.subr.bf16.mxu0 0
    %3401 = vmatpush2.bf16.msra.mxu0 0
    %3402 = vmatprep.subr.bf16.mxu0 0
    %3403 = vmatpush2.bf16.msra.mxu0 0
    %3404 = vmatprep.subr.bf16.mxu0 0
    %3405 = vmatpush2.bf16.msra.mxu0 0
    %3406 = vmatprep.subr.bf16.mxu0 0
    %3407 = vmatpush2.bf16.msra.mxu0 0
    %3408 = vmatprep.subr.bf16.mxu0 0
    %3409 = vmatpush2.bf16.msra.mxu0 0
    %3410 = vmatprep.subr.bf16.mxu0 0
    %3411 = vmatpush2.bf16.msra.mxu0 0
    %3412 = vmatprep.mubr.bf16.mxu0 0
    %3413 = vmatmul.mubr.bf16.gmra.mxu0 %v3337
    %v3414 = vpop.f32.mrf.mxu0
    %v3415 = vadd.f32 0.0, %v3414
    %v3416 = vpop.f32.mrf.mxu0
    %v3417 = vadd.f32 0.0, %v3416
    %v3418 = vpop.f32.mrf.mxu0
    %v3419 = vpop.f32.mrf.mxu0
    %3420 = vdwg.mxu0
    %v3421 = vadd.f32 %v3331, %v3374
    %v3422 = vadd.f32 %v3332, %v3376
    %v3423 = vadd.f32 %v3333, %v3415
    %v3424 = vadd.f32 %v3334, %v3417
    %v3425 = vxor.u32 %v3421, 2147483648
    %v3426 = vxor.u32 %v3422, 2147483648
    %v3427 = vxor.u32 %v3423, 2147483648
    %v3428 = vmul.f32 %v3425, 1.442695
    %v3429 = vpow.pop %v3428
    %v3430 = vmul.f32 %v3426, 1.442695
    %v3431 = vpow.pop %v3430
    %v3432 = vmul.f32 %v3427, 1.442695
    %v3433 = vpow.pop %v3432
    %v3434 = vadd.f32 %v3429, 1.0
    %v3435 = vadd.f32 %v3431, 1.0
    %v3436 = vadd.f32 %v3433, 1.0
    %v3437 = vrcp.pop %v3434
    %v3438 = vmul.f32 1.0, %v3437
    %v3439 = vrcp.pop %v3435
    %v3440 = vmul.f32 1.0, %v3439
    %v3441 = vrcp.pop %v3436
    %v3442 = vmul.f32 1.0, %v3441
    %v3443 = vtanh.pop %v3424
    %v3444 = vmul.f32 %v3440, %v3328
    %v3445 = vmul.f32 %v3438, %v3443
    %v3446 = vadd.f32 %v3444, %v3445
    %v3447 = vtanh.pop %v3446
    %v3448 = vmul.f32 %v3442, %v3447
    %v3449 = vld [vmem:[#allocation3 + $0x80] sm:$0xff]
    %v3450 = vld [vmem:[#allocation3 + $0x88] sm:$0xff]
    %v3451 = vld [vmem:[#allocation3 + $0x90] sm:$0xff]
    %v3452 = vld [vmem:[#allocation3 + $0x98] sm:$0xff]
    %v3453 = vpack.c.bf16 %v3448, %v3448
    %v3455 = vsel %vm405, %v3453, 0
    %3457 = vmatprep.subr.bf16.mxu0 0
    %3458 = vmatpush1.bf16.msra.mxu0 0
    %3459 = vmatprep.subr.bf16.mxu0 0
    %3460 = vmatpush1.bf16.msra.mxu0 0
    %3461 = vmatprep.subr.bf16.mxu0 0
    %3462 = vmatpush1.bf16.msra.mxu0 0
    %3463 = vmatprep.subr.bf16.mxu0 0
    %3464 = vmatpush1.bf16.msra.mxu0 0
    %3465 = vmatprep.subr.bf16.mxu0 0
    %3466 = vmatpush1.bf16.msra.mxu0 0
    %3467 = vmatprep.subr.bf16.mxu0 0
    %3468 = vmatpush1.bf16.msra.mxu0 0
    %3469 = vmatprep.subr.bf16.mxu0 %v2974
    %3470 = vmatpush1.bf16.msra.mxu0 %v2973
    %3471 = vmatprep.subr.bf16.mxu0 %v2970
    %3472 = vmatpush1.bf16.msra.mxu0 %v2969
    %3473 = vmatprep.subr.bf16.mxu0 0
    %3474 = vmatpush2.bf16.msra.mxu0 0
    %3475 = vmatprep.subr.bf16.mxu0 0
    %3476 = vmatpush2.bf16.msra.mxu0 0
    %3477 = vmatprep.subr.bf16.mxu0 0
    %3478 = vmatpush2.bf16.msra.mxu0 0
    %3479 = vmatprep.subr.bf16.mxu0 0
    %3480 = vmatpush2.bf16.msra.mxu0 0
    %3481 = vmatprep.subr.bf16.mxu0 0
    %3482 = vmatpush2.bf16.msra.mxu0 0
    %3483 = vmatprep.subr.bf16.mxu0 0
    %3484 = vmatpush2.bf16.msra.mxu0 0
    %3485 = vmatprep.subr.bf16.mxu0 0
    %3486 = vmatpush2.bf16.msra.mxu0 0
    %3487 = vmatprep.subr.bf16.mxu0 0
    %3488 = vmatpush2.bf16.msra.mxu0 0
    %3489 = vmatprep.mubr.bf16.mxu0 0
    %3490 = vmatmul.mubr.bf16.gmra.mxu0 %v3455
    %v3491 = vpop.f32.mrf.mxu0
    %v3492 = vadd.f32 0.0, %v3491
    %v3493 = vpop.f32.mrf.mxu0
    %v3494 = vadd.f32 0.0, %v3493
    %v3495 = vpop.f32.mrf.mxu0
    %v3496 = vpop.f32.mrf.mxu0
    %3497 = vdwg.mxu0
    %3498 = vmatprep.subr.bf16.mxu0 0
    %3499 = vmatpush1.bf16.msra.mxu0 0
    %3500 = vmatprep.subr.bf16.mxu0 0
    %3501 = vmatpush1.bf16.msra.mxu0 0
    %3502 = vmatprep.subr.bf16.mxu0 0
    %3503 = vmatpush1.bf16.msra.mxu0 0
    %3504 = vmatprep.subr.bf16.mxu0 0
    %3505 = vmatpush1.bf16.msra.mxu0 0
    %3506 = vmatprep.subr.bf16.mxu0 0
    %3507 = vmatpush1.bf16.msra.mxu0 0
    %3508 = vmatprep.subr.bf16.mxu0 0
    %3509 = vmatpush1.bf16.msra.mxu0 0
    %3510 = vmatprep.subr.bf16.mxu0 %v2976
    %3511 = vmatpush1.bf16.msra.mxu0 %v2975
    %3512 = vmatprep.subr.bf16.mxu0 %v2972
    %3513 = vmatpush1.bf16.msra.mxu0 %v2971
    %3514 = vmatprep.subr.bf16.mxu0 0
    %3515 = vmatpush2.bf16.msra.mxu0 0
    %3516 = vmatprep.subr.bf16.mxu0 0
    %3517 = vmatpush2.bf16.msra.mxu0 0
    %3518 = vmatprep.subr.bf16.mxu0 0
    %3519 = vmatpush2.bf16.msra.mxu0 0
    %3520 = vmatprep.subr.bf16.mxu0 0
    %3521 = vmatpush2.bf16.msra.mxu0 0
    %3522 = vmatprep.subr.bf16.mxu0 0
    %3523 = vmatpush2.bf16.msra.mxu0 0
    %3524 = vmatprep.subr.bf16.mxu0 0
    %3525 = vmatpush2.bf16.msra.mxu0 0
    %3526 = vmatprep.subr.bf16.mxu0 0
    %3527 = vmatpush2.bf16.msra.mxu0 0
    %3528 = vmatprep.subr.bf16.mxu0 0
    %3529 = vmatpush2.bf16.msra.mxu0 0
    %3530 = vmatprep.mubr.bf16.mxu0 0
    %3531 = vmatmul.mubr.bf16.gmra.mxu0 %v3455
    %v3532 = vpop.f32.mrf.mxu0
    %v3533 = vadd.f32 0.0, %v3532
    %v3534 = vpop.f32.mrf.mxu0
    %v3535 = vadd.f32 0.0, %v3534
    %v3536 = vpop.f32.mrf.mxu0
    %v3537 = vpop.f32.mrf.mxu0
    %3538 = vdwg.mxu0
    %v3539 = vadd.f32 %v3449, %v3492
    %v3540 = vadd.f32 %v3450, %v3494
    %v3541 = vadd.f32 %v3451, %v3533
    %v3542 = vadd.f32 %v3452, %v3535
    %v3543 = vxor.u32 %v3539, 2147483648
    %v3544 = vxor.u32 %v3540, 2147483648
    %v3545 = vxor.u32 %v3541, 2147483648
    %v3546 = vmul.f32 %v3543, 1.442695
    %v3547 = vpow.pop %v3546
    %v3548 = vmul.f32 %v3544, 1.442695
    %v3549 = vpow.pop %v3548
    %v3550 = vmul.f32 %v3545, 1.442695
    %v3551 = vpow.pop %v3550
    %v3552 = vadd.f32 %v3547, 1.0
    %v3553 = vadd.f32 %v3549, 1.0
    %v3554 = vadd.f32 %v3551, 1.0
    %v3555 = vrcp.pop %v3552
    %v3556 = vmul.f32 1.0, %v3555
    %v3557 = vrcp.pop %v3553
    %v3558 = vmul.f32 1.0, %v3557
    %v3559 = vrcp.pop %v3554
    %v3560 = vmul.f32 1.0, %v3559
    %v3561 = vtanh.pop %v3542
    %v3562 = vmul.f32 %v3558, %v3446
    %v3563 = vmul.f32 %v3556, %v3561
    %v3564 = vadd.f32 %v3562, %v3563
    %v3565 = vtanh.pop %v3564
    %v3566 = vmul.f32 %v3560, %v3565
    %v3567 = vld [vmem:[#allocation3 + $0xa0] sm:$0xff]
    %v3568 = vld [vmem:[#allocation3 + $0xa8] sm:$0xff]
    %v3569 = vld [vmem:[#allocation3 + $0xb0] sm:$0xff]
    %v3570 = vld [vmem:[#allocation3 + $0xb8] sm:$0xff]
    %v3571 = vpack.c.bf16 %v3566, %v3566
    %v3573 = vsel %vm405, %v3571, 0
    %3575 = vmatprep.subr.bf16.mxu0 0
    %3576 = vmatpush1.bf16.msra.mxu0 0
    %3577 = vmatprep.subr.bf16.mxu0 0
    %3578 = vmatpush1.bf16.msra.mxu0 0
    %3579 = vmatprep.subr.bf16.mxu0 0
    %3580 = vmatpush1.bf16.msra.mxu0 0
    %3581 = vmatprep.subr.bf16.mxu0 0
    %3582 = vmatpush1.bf16.msra.mxu0 0
    %3583 = vmatprep.subr.bf16.mxu0 0
    %3584 = vmatpush1.bf16.msra.mxu0 0
    %3585 = vmatprep.subr.bf16.mxu0 0
    %3586 = vmatpush1.bf16.msra.mxu0 0
    %3587 = vmatprep.subr.bf16.mxu0 %v2974
    %3588 = vmatpush1.bf16.msra.mxu0 %v2973
    %3589 = vmatprep.subr.bf16.mxu0 %v2970
    %3590 = vmatpush1.bf16.msra.mxu0 %v2969
    %3591 = vmatprep.subr.bf16.mxu0 0
    %3592 = vmatpush2.bf16.msra.mxu0 0
    %3593 = vmatprep.subr.bf16.mxu0 0
    %3594 = vmatpush2.bf16.msra.mxu0 0
    %3595 = vmatprep.subr.bf16.mxu0 0
    %3596 = vmatpush2.bf16.msra.mxu0 0
    %3597 = vmatprep.subr.bf16.mxu0 0
    %3598 = vmatpush2.bf16.msra.mxu0 0
    %3599 = vmatprep.subr.bf16.mxu0 0
    %3600 = vmatpush2.bf16.msra.mxu0 0
    %3601 = vmatprep.subr.bf16.mxu0 0
    %3602 = vmatpush2.bf16.msra.mxu0 0
    %3603 = vmatprep.subr.bf16.mxu0 0
    %3604 = vmatpush2.bf16.msra.mxu0 0
    %3605 = vmatprep.subr.bf16.mxu0 0
    %3606 = vmatpush2.bf16.msra.mxu0 0
    %3607 = vmatprep.mubr.bf16.mxu0 0
    %3608 = vmatmul.mubr.bf16.gmra.mxu0 %v3573
    %v3609 = vpop.f32.mrf.mxu0
    %v3610 = vadd.f32 0.0, %v3609
    %v3611 = vpop.f32.mrf.mxu0
    %v3612 = vadd.f32 0.0, %v3611
    %v3613 = vpop.f32.mrf.mxu0
    %v3614 = vpop.f32.mrf.mxu0
    %3615 = vdwg.mxu0
    %3616 = vmatprep.subr.bf16.mxu0 0
    %3617 = vmatpush1.bf16.msra.mxu0 0
    %3618 = vmatprep.subr.bf16.mxu0 0
    %3619 = vmatpush1.bf16.msra.mxu0 0
    %3620 = vmatprep.subr.bf16.mxu0 0
    %3621 = vmatpush1.bf16.msra.mxu0 0
    %3622 = vmatprep.subr.bf16.mxu0 0
    %3623 = vmatpush1.bf16.msra.mxu0 0
    %3624 = vmatprep.subr.bf16.mxu0 0
    %3625 = vmatpush1.bf16.msra.mxu0 0
    %3626 = vmatprep.subr.bf16.mxu0 0
    %3627 = vmatpush1.bf16.msra.mxu0 0
    %3628 = vmatprep.subr.bf16.mxu0 %v2976
    %3629 = vmatpush1.bf16.msra.mxu0 %v2975
    %3630 = vmatprep.subr.bf16.mxu0 %v2972
    %3631 = vmatpush1.bf16.msra.mxu0 %v2971
    %3632 = vmatprep.subr.bf16.mxu0 0
    %3633 = vmatpush2.bf16.msra.mxu0 0
    %3634 = vmatprep.subr.bf16.mxu0 0
    %3635 = vmatpush2.bf16.msra.mxu0 0
    %3636 = vmatprep.subr.bf16.mxu0 0
    %3637 = vmatpush2.bf16.msra.mxu0 0
    %3638 = vmatprep.subr.bf16.mxu0 0
    %3639 = vmatpush2.bf16.msra.mxu0 0
    %3640 = vmatprep.subr.bf16.mxu0 0
    %3641 = vmatpush2.bf16.msra.mxu0 0
    %3642 = vmatprep.subr.bf16.mxu0 0
    %3643 = vmatpush2.bf16.msra.mxu0 0
    %3644 = vmatprep.subr.bf16.mxu0 0
    %3645 = vmatpush2.bf16.msra.mxu0 0
    %3646 = vmatprep.subr.bf16.mxu0 0
    %3647 = vmatpush2.bf16.msra.mxu0 0
    %3648 = vmatprep.mubr.bf16.mxu0 0
    %3649 = vmatmul.mubr.bf16.gmra.mxu0 %v3573
    %v3650 = vpop.f32.mrf.mxu0
    %v3651 = vadd.f32 0.0, %v3650
    %v3652 = vpop.f32.mrf.mxu0
    %v3653 = vadd.f32 0.0, %v3652
    %v3654 = vpop.f32.mrf.mxu0
    %v3655 = vpop.f32.mrf.mxu0
    %3656 = vdwg.mxu0
    %v3657 = vadd.f32 %v3567, %v3610
    %v3658 = vadd.f32 %v3568, %v3612
    %v3659 = vadd.f32 %v3569, %v3651
    %v3660 = vadd.f32 %v3570, %v3653
    %v3661 = vxor.u32 %v3657, 2147483648
    %v3662 = vxor.u32 %v3658, 2147483648
    %v3663 = vxor.u32 %v3659, 2147483648
    %v3664 = vmul.f32 %v3661, 1.442695
    %v3665 = vpow.pop %v3664
    %v3666 = vmul.f32 %v3662, 1.442695
    %v3667 = vpow.pop %v3666
    %v3668 = vmul.f32 %v3663, 1.442695
    %v3669 = vpow.pop %v3668
    %v3670 = vadd.f32 %v3665, 1.0
    %v3671 = vadd.f32 %v3667, 1.0
    %v3672 = vadd.f32 %v3669, 1.0
    %v3673 = vrcp.pop %v3670
    %v3674 = vmul.f32 1.0, %v3673
    %v3675 = vrcp.pop %v3671
    %v3676 = vmul.f32 1.0, %v3675
    %v3677 = vrcp.pop %v3672
    %v3678 = vmul.f32 1.0, %v3677
    %v3679 = vtanh.pop %v3660
    %v3680 = vmul.f32 %v3676, %v3564
    %v3681 = vmul.f32 %v3674, %v3679
    %v3682 = vadd.f32 %v3680, %v3681
    %v3683 = vtanh.pop %v3682
    %v3684 = vmul.f32 %v3678, %v3683
    %v3685 = vld [vmem:[#allocation3 + $0xc0] sm:$0xff]
    %v3686 = vld [vmem:[#allocation3 + $0xc8] sm:$0xff]
    %v3687 = vld [vmem:[#allocation3 + $0xd0] sm:$0xff]
    %v3688 = vld [vmem:[#allocation3 + $0xd8] sm:$0xff]
    %v3689 = vpack.c.bf16 %v3684, %v3684
    %v3691 = vsel %vm405, %v3689, 0
    %3693 = vmatprep.subr.bf16.mxu0 0
    %3694 = vmatpush1.bf16.msra.mxu0 0
    %3695 = vmatprep.subr.bf16.mxu0 0
    %3696 = vmatpush1.bf16.msra.mxu0 0
    %3697 = vmatprep.subr.bf16.mxu0 0
    %3698 = vmatpush1.bf16.msra.mxu0 0
    %3699 = vmatprep.subr.bf16.mxu0 0
    %3700 = vmatpush1.bf16.msra.mxu0 0
    %3701 = vmatprep.subr.bf16.mxu0 0
    %3702 = vmatpush1.bf16.msra.mxu0 0
    %3703 = vmatprep.subr.bf16.mxu0 0
    %3704 = vmatpush1.bf16.msra.mxu0 0
    %3705 = vmatprep.subr.bf16.mxu0 %v2974
    %3706 = vmatpush1.bf16.msra.mxu0 %v2973
    %3707 = vmatprep.subr.bf16.mxu0 %v2970
    %3708 = vmatpush1.bf16.msra.mxu0 %v2969
    %3709 = vmatprep.subr.bf16.mxu0 0
    %3710 = vmatpush2.bf16.msra.mxu0 0
    %3711 = vmatprep.subr.bf16.mxu0 0
    %3712 = vmatpush2.bf16.msra.mxu0 0
    %3713 = vmatprep.subr.bf16.mxu0 0
    %3714 = vmatpush2.bf16.msra.mxu0 0
    %3715 = vmatprep.subr.bf16.mxu0 0
    %3716 = vmatpush2.bf16.msra.mxu0 0
    %3717 = vmatprep.subr.bf16.mxu0 0
    %3718 = vmatpush2.bf16.msra.mxu0 0
    %3719 = vmatprep.subr.bf16.mxu0 0
    %3720 = vmatpush2.bf16.msra.mxu0 0
    %3721 = vmatprep.subr.bf16.mxu0 0
    %3722 = vmatpush2.bf16.msra.mxu0 0
    %3723 = vmatprep.subr.bf16.mxu0 0
    %3724 = vmatpush2.bf16.msra.mxu0 0
    %3725 = vmatprep.mubr.bf16.mxu0 0
    %3726 = vmatmul.mubr.bf16.gmra.mxu0 %v3691
    %v3727 = vpop.f32.mrf.mxu0
    %v3728 = vadd.f32 0.0, %v3727
    %v3729 = vpop.f32.mrf.mxu0
    %v3730 = vadd.f32 0.0, %v3729
    %v3731 = vpop.f32.mrf.mxu0
    %v3732 = vpop.f32.mrf.mxu0
    %3733 = vdwg.mxu0
    %3734 = vmatprep.subr.bf16.mxu0 0
    %3735 = vmatpush1.bf16.msra.mxu0 0
    %3736 = vmatprep.subr.bf16.mxu0 0
    %3737 = vmatpush1.bf16.msra.mxu0 0
    %3738 = vmatprep.subr.bf16.mxu0 0
    %3739 = vmatpush1.bf16.msra.mxu0 0
    %3740 = vmatprep.subr.bf16.mxu0 0
    %3741 = vmatpush1.bf16.msra.mxu0 0
    %3742 = vmatprep.subr.bf16.mxu0 0
    %3743 = vmatpush1.bf16.msra.mxu0 0
    %3744 = vmatprep.subr.bf16.mxu0 0
    %3745 = vmatpush1.bf16.msra.mxu0 0
    %3746 = vmatprep.subr.bf16.mxu0 %v2976
    %3747 = vmatpush1.bf16.msra.mxu0 %v2975
    %3748 = vmatprep.subr.bf16.mxu0 %v2972
    %3749 = vmatpush1.bf16.msra.mxu0 %v2971
    %3750 = vmatprep.subr.bf16.mxu0 0
    %3751 = vmatpush2.bf16.msra.mxu0 0
    %3752 = vmatprep.subr.bf16.mxu0 0
    %3753 = vmatpush2.bf16.msra.mxu0 0
    %3754 = vmatprep.subr.bf16.mxu0 0
    %3755 = vmatpush2.bf16.msra.mxu0 0
    %3756 = vmatprep.subr.bf16.mxu0 0
    %3757 = vmatpush2.bf16.msra.mxu0 0
    %3758 = vmatprep.subr.bf16.mxu0 0
    %3759 = vmatpush2.bf16.msra.mxu0 0
    %3760 = vmatprep.subr.bf16.mxu0 0
    %3761 = vmatpush2.bf16.msra.mxu0 0
    %3762 = vmatprep.subr.bf16.mxu0 0
    %3763 = vmatpush2.bf16.msra.mxu0 0
    %3764 = vmatprep.subr.bf16.mxu0 0
    %3765 = vmatpush2.bf16.msra.mxu0 0
    %3766 = vmatprep.mubr.bf16.mxu0 0
    %3767 = vmatmul.mubr.bf16.gmra.mxu0 %v3691
    %v3768 = vpop.f32.mrf.mxu0
    %v3769 = vadd.f32 0.0, %v3768
    %v3770 = vpop.f32.mrf.mxu0
    %v3771 = vadd.f32 0.0, %v3770
    %v3772 = vpop.f32.mrf.mxu0
    %v3773 = vpop.f32.mrf.mxu0
    %3774 = vdwg.mxu0
    %v3775 = vadd.f32 %v3685, %v3728
    %v3776 = vadd.f32 %v3686, %v3730
    %v3777 = vadd.f32 %v3687, %v3769
    %v3778 = vadd.f32 %v3688, %v3771
    %v3779 = vxor.u32 %v3775, 2147483648
    %v3780 = vxor.u32 %v3776, 2147483648
    %v3781 = vxor.u32 %v3777, 2147483648
    %v3782 = vmul.f32 %v3779, 1.442695
    %v3783 = vpow.pop %v3782
    %v3784 = vmul.f32 %v3780, 1.442695
    %v3785 = vpow.pop %v3784
    %v3786 = vmul.f32 %v3781, 1.442695
    %v3787 = vpow.pop %v3786
    %v3788 = vadd.f32 %v3783, 1.0
    %v3789 = vadd.f32 %v3785, 1.0
    %v3790 = vadd.f32 %v3787, 1.0
    %v3791 = vrcp.pop %v3788
    %v3792 = vmul.f32 1.0, %v3791
    %v3793 = vrcp.pop %v3789
    %v3794 = vmul.f32 1.0, %v3793
    %v3795 = vrcp.pop %v3790
    %v3796 = vmul.f32 1.0, %v3795
    %v3797 = vtanh.pop %v3778
    %v3798 = vmul.f32 %v3794, %v3682
    %v3799 = vmul.f32 %v3792, %v3797
    %v3800 = vadd.f32 %v3798, %v3799
    %v3801 = vtanh.pop %v3800
    %v3802 = vmul.f32 %v3796, %v3801
    %v3803 = vld [vmem:[#allocation3 + $0xe0] sm:$0xff]
    %v3804 = vld [vmem:[#allocation3 + $0xe8] sm:$0xff]
    %v3805 = vld [vmem:[#allocation3 + $0xf0] sm:$0xff]
    %v3806 = vld [vmem:[#allocation3 + $0xf8] sm:$0xff]
    %v3807 = vpack.c.bf16 %v3802, %v3802
    %v3809 = vsel %vm405, %v3807, 0
    %3811 = vmatprep.subr.bf16.mxu0 0
    %3812 = vmatpush1.bf16.msra.mxu0 0
    %3813 = vmatprep.subr.bf16.mxu0 0
    %3814 = vmatpush1.bf16.msra.mxu0 0
    %3815 = vmatprep.subr.bf16.mxu0 0
    %3816 = vmatpush1.bf16.msra.mxu0 0
    %3817 = vmatprep.subr.bf16.mxu0 0
    %3818 = vmatpush1.bf16.msra.mxu0 0
    %3819 = vmatprep.subr.bf16.mxu0 0
    %3820 = vmatpush1.bf16.msra.mxu0 0
    %3821 = vmatprep.subr.bf16.mxu0 0
    %3822 = vmatpush1.bf16.msra.mxu0 0
    %3823 = vmatprep.subr.bf16.mxu0 %v2974
    %3824 = vmatpush1.bf16.msra.mxu0 %v2973
    %3825 = vmatprep.subr.bf16.mxu0 %v2970
    %3826 = vmatpush1.bf16.msra.mxu0 %v2969
    %3827 = vmatprep.subr.bf16.mxu0 0
    %3828 = vmatpush2.bf16.msra.mxu0 0
    %3829 = vmatprep.subr.bf16.mxu0 0
    %3830 = vmatpush2.bf16.msra.mxu0 0
    %3831 = vmatprep.subr.bf16.mxu0 0
    %3832 = vmatpush2.bf16.msra.mxu0 0
    %3833 = vmatprep.subr.bf16.mxu0 0
    %3834 = vmatpush2.bf16.msra.mxu0 0
    %3835 = vmatprep.subr.bf16.mxu0 0
    %3836 = vmatpush2.bf16.msra.mxu0 0
    %3837 = vmatprep.subr.bf16.mxu0 0
    %3838 = vmatpush2.bf16.msra.mxu0 0
    %3839 = vmatprep.subr.bf16.mxu0 0
    %3840 = vmatpush2.bf16.msra.mxu0 0
    %3841 = vmatprep.subr.bf16.mxu0 0
    %3842 = vmatpush2.bf16.msra.mxu0 0
    %3843 = vmatprep.mubr.bf16.mxu0 0
    %3844 = vmatmul.mubr.bf16.gmra.mxu0 %v3809
    %v3845 = vpop.f32.mrf.mxu0
    %v3846 = vadd.f32 0.0, %v3845
    %v3847 = vpop.f32.mrf.mxu0
    %v3848 = vadd.f32 0.0, %v3847
    %v3849 = vpop.f32.mrf.mxu0
    %v3850 = vpop.f32.mrf.mxu0
    %3851 = vdwg.mxu0
    %3852 = vmatprep.subr.bf16.mxu0 0
    %3853 = vmatpush1.bf16.msra.mxu0 0
    %3854 = vmatprep.subr.bf16.mxu0 0
    %3855 = vmatpush1.bf16.msra.mxu0 0
    %3856 = vmatprep.subr.bf16.mxu0 0
    %3857 = vmatpush1.bf16.msra.mxu0 0
    %3858 = vmatprep.subr.bf16.mxu0 0
    %3859 = vmatpush1.bf16.msra.mxu0 0
    %3860 = vmatprep.subr.bf16.mxu0 0
    %3861 = vmatpush1.bf16.msra.mxu0 0
    %3862 = vmatprep.subr.bf16.mxu0 0
    %3863 = vmatpush1.bf16.msra.mxu0 0
    %3864 = vmatprep.subr.bf16.mxu0 %v2976
    %3865 = vmatpush1.bf16.msra.mxu0 %v2975
    %3866 = vmatprep.subr.bf16.mxu0 %v2972
    %3867 = vmatpush1.bf16.msra.mxu0 %v2971
    %3868 = vmatprep.subr.bf16.mxu0 0
    %3869 = vmatpush2.bf16.msra.mxu0 0
    %3870 = vmatprep.subr.bf16.mxu0 0
    %3871 = vmatpush2.bf16.msra.mxu0 0
    %3872 = vmatprep.subr.bf16.mxu0 0
    %3873 = vmatpush2.bf16.msra.mxu0 0
    %3874 = vmatprep.subr.bf16.mxu0 0
    %3875 = vmatpush2.bf16.msra.mxu0 0
    %3876 = vmatprep.subr.bf16.mxu0 0
    %3877 = vmatpush2.bf16.msra.mxu0 0
    %3878 = vmatprep.subr.bf16.mxu0 0
    %3879 = vmatpush2.bf16.msra.mxu0 0
    %3880 = vmatprep.subr.bf16.mxu0 0
    %3881 = vmatpush2.bf16.msra.mxu0 0
    %3882 = vmatprep.subr.bf16.mxu0 0
    %3883 = vmatpush2.bf16.msra.mxu0 0
    %3884 = vmatprep.mubr.bf16.mxu0 0
    %3885 = vmatmul.mubr.bf16.gmra.mxu0 %v3809
    %v3886 = vpop.f32.mrf.mxu0
    %v3887 = vadd.f32 0.0, %v3886
    %v3888 = vpop.f32.mrf.mxu0
    %v3889 = vadd.f32 0.0, %v3888
    %v3890 = vpop.f32.mrf.mxu0
    %v3891 = vpop.f32.mrf.mxu0
    %3892 = vdwg.mxu0
    %v3893 = vadd.f32 %v3803, %v3846
    %v3894 = vadd.f32 %v3804, %v3848
    %v3895 = vadd.f32 %v3805, %v3887
    %v3896 = vadd.f32 %v3806, %v3889
    %v3897 = vxor.u32 %v3893, 2147483648
    %v3898 = vxor.u32 %v3894, 2147483648
    %v3899 = vxor.u32 %v3895, 2147483648
    %v3900 = vmul.f32 %v3897, 1.442695
    %v3901 = vpow.pop %v3900
    %v3902 = vmul.f32 %v3898, 1.442695
    %v3903 = vpow.pop %v3902
    %v3904 = vmul.f32 %v3899, 1.442695
    %v3905 = vpow.pop %v3904
    %v3906 = vadd.f32 %v3901, 1.0
    %v3907 = vadd.f32 %v3903, 1.0
    %v3908 = vadd.f32 %v3905, 1.0
    %v3909 = vrcp.pop %v3906
    %v3910 = vmul.f32 1.0, %v3909
    %v3911 = vrcp.pop %v3907
    %v3912 = vmul.f32 1.0, %v3911
    %v3913 = vrcp.pop %v3908
    %v3914 = vmul.f32 1.0, %v3913
    %v3915 = vtanh.pop %v3896
    %v3916 = vmul.f32 %v3912, %v3800
    %v3917 = vmul.f32 %v3910, %v3915
    %v3918 = vadd.f32 %v3916, %v3917
    %v3919 = vtanh.pop %v3918
    %v3920 = vmul.f32 %v3914, %v3919
    %v3921 = vld [vmem:[#allocation9] sm:$0xff]
    %v3922 = vld [vmem:[#allocation9 + $0x8] sm:$0xff]
    %v3923 = vld [vmem:[#allocation9 + $0x10] sm:$0xff]
    %v3924 = vld [vmem:[#allocation9 + $0x18] sm:$0xff]
    %v3925 = vld [vmem:[%s8] sm:$0x1]
    %v3927 = vlaneseq
    %v3928 = vshrl.u32 %v3927, 7
    %v3929 = vsub.s32 0, %v3928
    %v3930 = vrot.slane %v3925, %v3929
    %v3933 = vsel %vm405, %v3920, 0
    %3935 = vmatprep.subr.mxu0 0.0
    %3936 = vmatpush1.msra.mxu0 0.0
    %3937 = vmatprep.subr.mxu0 0.0
    %3938 = vmatpush1.msra.mxu0 0.0
    %3939 = vmatprep.subr.mxu0 0.0
    %3940 = vmatpush1.msra.mxu0 0.0
    %3941 = vmatprep.subr.mxu0 0.0
    %3942 = vmatpush1.msra.mxu0 0.0
    %3943 = vmatprep.subr.mxu0 0.0
    %3944 = vmatpush1.msra.mxu0 0.0
    %3945 = vmatprep.subr.mxu0 0.0
    %3946 = vmatpush1.msra.mxu0 0.0
    %3947 = vmatprep.subr.mxu0 0.0
    %3948 = vmatpush1.msra.mxu0 0.0
    %3949 = vmatprep.subr.mxu0 0.0
    %3950 = vmatpush1.msra.mxu0 0.0
    %3951 = vmatprep.subr.mxu0 0.0
    %3952 = vmatpush1.msra.mxu0 0.0
    %3953 = vmatprep.subr.mxu0 0.0
    %3954 = vmatpush1.msra.mxu0 0.0
    %3955 = vmatprep.subr.mxu0 0.0
    %3956 = vmatpush1.msra.mxu0 0.0
    %3957 = vmatprep.subr.mxu0 0.0
    %3958 = vmatpush1.msra.mxu0 0.0
    %3959 = vmatprep.subr.mxu0 0.0
    %3960 = vmatpush1.msra.mxu0 %v3924
    %3961 = vmatprep.subr.mxu0 0.0
    %3962 = vmatpush1.msra.mxu0 %v3923
    %3963 = vmatprep.subr.mxu0 0.0
    %3964 = vmatpush1.msra.mxu0 %v3922
    %3965 = vmatprep.subr.mxu0 0.0
    %3966 = vmatpush1.msra.mxu0 %v3921
    %3967 = vmatprep.subr.mxu0 0.0
    %3968 = vmatpush2.msra.mxu0 0.0
    %3969 = vmatprep.subr.mxu0 0.0
    %3970 = vmatpush2.msra.mxu0 0.0
    %3971 = vmatprep.subr.mxu0 0.0
    %3972 = vmatpush2.msra.mxu0 0.0
    %3973 = vmatprep.subr.mxu0 0.0
    %3974 = vmatpush2.msra.mxu0 0.0
    %3975 = vmatprep.subr.mxu0 0.0
    %3976 = vmatpush2.msra.mxu0 0.0
    %3977 = vmatprep.subr.mxu0 0.0
    %3978 = vmatpush2.msra.mxu0 0.0
    %3979 = vmatprep.subr.mxu0 0.0
    %3980 = vmatpush2.msra.mxu0 0.0
    %3981 = vmatprep.subr.mxu0 0.0
    %3982 = vmatpush2.msra.mxu0 0.0
    %3983 = vmatprep.subr.mxu0 0.0
    %3984 = vmatpush2.msra.mxu0 0.0
    %3985 = vmatprep.subr.mxu0 0.0
    %3986 = vmatpush2.msra.mxu0 0.0
    %3987 = vmatprep.subr.mxu0 0.0
    %3988 = vmatpush2.msra.mxu0 0.0
    %3989 = vmatprep.subr.mxu0 0.0
    %3990 = vmatpush2.msra.mxu0 0.0
    %3991 = vmatprep.subr.mxu0 0.0
    %3992 = vmatpush2.msra.mxu0 0.0
    %3993 = vmatprep.subr.mxu0 0.0
    %3994 = vmatpush2.msra.mxu0 0.0
    %3995 = vmatprep.subr.mxu0 0.0
    %3996 = vmatpush2.msra.mxu0 0.0
    %3997 = vmatprep.subr.mxu0 0.0
    %3998 = vmatpush2.msra.mxu0 0.0
    %3999 = vmatprep.mubr.f32.mxu0 0.0
    %4000 = vmatmul.mubr.f32.gmra.mxu0 %v3933
    %v4001 = vpop.f32.mrf.mxu0
    %v4002 = vadd.f32 %v3930, %v4001
    %v4003 = vpop.f32.mrf.mxu0
    %4004 = vdwg.mxu0
    %v4005 = vmax.f32 %v4002, 0.0
    %4006 = vst [vmem:[%s9] sm:$0xff] %v4005
    // Predicated region
    $region54: #{_lstm_network_forward.1} parent=1 // pred_check
      _
    $region55: #{_lstm_network_forward.1} parent=1 // pred_check_branch
      %4008 = sbr.rel (0) target = $region57
    $region56: #{_lstm_network_forward.1} parent=1 // pred_region
      _
    $region57: #{_lstm_network_forward.1} parent=1 // pred_fallthru
      _
    // Predicated region
    $region58: #{_lstm_network_forward.1} parent=1 // pred_check
      _
    $region59: #{_lstm_network_forward.1} parent=1 // pred_check_branch
      %4010 = sbr.rel (0) target = $region61
    $region60: #{_lstm_network_forward.1} parent=1 // pred_region
      _
    $region61: #{_lstm_network_forward.1} parent=1 // pred_fallthru
      _
    %4011 = vsyncpa [#allocation5], 1
    %4012 = vsyncpa [#allocation7], 1
    %4013 = vsyncpa [#allocation10], 1

</llo_original>
